<compile_context>
chip_gen: v6e
topology: v6e:2x2x1
jax: 0.10.0
libtpu: 0.0.40
codegen_flags: <defaults>
</compile_context>

<pallas_src>
import functools

import jax
import jax.numpy as jnp
from jax import lax
from jax.experimental import pallas as pl
from jax.experimental.pallas import tpu as pltpu


# ------------------------- small helpers -------------------------

def _vmem_capacity_bytes():
    """Per-core VMEM capacity (v5e/v6e: 128 MiB, v7x: 64 MiB), with a safe fallback."""
    try:
        return int(pltpu.get_tpu_info().vmem_capacity_bytes)
    except Exception:
        return 64 << 20   # conservative (v7x per-TensorCore VMEM)


def _pick_tile(n, cap, aligns=(256, 128, 8)):
    """Largest divisor of n that is <= cap, preferring MXU-friendly alignments."""
    if n <= cap:
        return n
    for a in aligns:
        t = (min(cap, n) // a) * a
        while t >= a:
            if n % t == 0:
                return t
            t -= a
    return n


# ------------------------- fused Pallas kernel -------------------------

def _fused_attn_kernel(xp_ref, x_ref, wkv_ref, wq_ref, wo_ref, o_ref, kv_scr, *, heads):
    """Fused to_kv (strided conv as matmul) + to_q + multi-head attention + to_out.

    grid = (B, Lq // tq); semantics = ("parallel", "arbitrary").
    K/V for the whole (reduced) sequence are computed once per batch at qi == 0 into a
    bf16 VMEM scratch and reused by every q-tile of that batch.  All projections are
    full-`dim` matmuls; heads are static lane slices.  Output block is (tq, dim) in the
    compute dtype -> lane-dense, unmasked stores.
    """
    qi = pl.program_id(1)

    @pl.when(qi == 0)
    def _project_kv():
        # (Lk, K) @ (K, 2*dim): one whole-K matmul, f32 MXU accumulation, bf16 scratch.
        kv_scr[...] = jnp.dot(
            xp_ref[0], wkv_ref[...], preferred_element_type=jnp.float32
        ).astype(kv_scr.dtype)

    x = x_ref[0]                                     # (tq, dim) bf16
    dim = x.shape[-1]
    dph = dim // heads

    # Full-dim to_q (softmax scale pre-folded into wq); f32 accumulation, bf16 operands.
    q = jnp.dot(x, wq_ref[...], preferred_element_type=jnp.float32).astype(x.dtype)
    kv = kv_scr[...]                                 # (Lk, 2*dim) bf16

    outs = []
    for h in range(heads):                           # static unroll; heads is small
        qh = q[:, h * dph:(h + 1) * dph]             # (tq, dph)   lane slice
        kh = kv[:, h * dph:(h + 1) * dph]            # (Lk, dph)
        vh = kv[:, dim + h * dph: dim + (h + 1) * dph]
        # scores: contract last dims directly — no materialized k.T / XLU transpose.
        sim = lax.dot_general(qh, kh, (((1,), (1,)), ((), ())),
                              preferred_element_type=jnp.float32)      # (tq, Lk)
        m = jnp.max(sim, axis=-1, keepdims=True)
        p = jnp.exp(sim - m)
        l = jnp.sum(p, axis=-1, keepdims=True)
        p = p * pl.reciprocal(l, approx=True)        # EUP slot, not a VPU divide
        outs.append(jnp.dot(p.astype(kv.dtype), vh,
                            preferred_element_type=jnp.float32))       # (tq, dph)

    # Full-dim to_out: one contraction-`dim` matmul on the lane-concatenated heads.
    o_cat = jnp.concatenate(outs, axis=-1).astype(wo_ref.dtype)        # (tq, dim) bf16
    y = jnp.dot(o_cat, wo_ref[...], preferred_element_type=jnp.float32)
    o_ref[0] = y.astype(o_ref.dtype)                 # bf16, lane-dense writeback


# ------------------------- module -------------------------

class EfficientSelfAttentionPallas:
    def __init__(self, *, dim, heads, reduction_ratio, key, compute_dtype=jnp.bfloat16):
        assert dim % heads == 0
        self.dim = dim
        self.heads = heads
        self.r = reduction_ratio
        self.scale = (dim // heads) ** (-0.5)
        self.compute_dtype = compute_dtype
        k1, k2, k3 = jax.random.split(key, 3)
        # PyTorch Conv2d weight layout: (out_ch, in_ch, kh, kw), bias=False
        self.w_q = 0.05 * jax.random.normal(k1, (dim, dim, 1, 1), jnp.float32)
        self.w_kv = 0.05 * jax.random.normal(
            k2, (dim * 2, dim, reduction_ratio, reduction_ratio), jnp.float32)
        self.w_out = 0.05 * jax.random.normal(k3, (dim, dim, 1, 1), jnp.float32)

    def _prepared_weights(self):
        """bf16 weights in matmul layout (kernel) and conv layout (reference)."""
        dim, r = self.dim, self.r
        K = dim * r * r
        cd = self.compute_dtype
        wq_conv = (self.w_q * self.scale).astype(cd)        # scale folded into to_q
        wkv_conv = self.w_kv.astype(cd)
        wo_conv = self.w_out.astype(cd)
        wq_mat = wq_conv.reshape(dim, dim).T                # (dim_in, dim_out)
        wkv_mat = wkv_conv.reshape(2 * dim, K).T            # (K, 2*dim): [:, :dim]=k, [:, dim:]=v
        wo_mat = wo_conv.reshape(dim, dim).T                # (head-concat channels, dim_out)
        return wq_mat, wkv_mat, wo_mat, wq_conv, wkv_conv, wo_conv

    def forward_nhwc(self, x_nhwc):
        """NHWC in, NHWC (compute dtype) out — no layout round trips around the kernel."""
        B, H, W, C = x_nhwc.shape
        dim, heads, r = self.dim, self.heads, self.r
        assert C == dim and H % r == 0 and W % r == 0
        Hr, Wr = H // r, W // r
        Lq, Lk, K = H * W, Hr * Wr, dim * r * r
        cd = self.compute_dtype

        wq_mat, wkv_mat, wo_mat, *_ = self._prepared_weights()

        xb = x_nhwc.astype(cd)
        x_pix = xb.reshape(B, Lq, dim)                                   # (B, H*W, dim)
        # per-patch rows for the strided to_kv conv; columns ordered (c, dy, dx)
        x_patch = xb.reshape(B, Hr, r, Wr, r, dim)
        x_patch = jnp.transpose(x_patch, (0, 1, 3, 5, 2, 4)).reshape(B, Lk, K)

        # ---- per-chip tile / VMEM budgeting (v7x: 64 MiB, v5e/v6e: 128 MiB) ----
        bpe = jnp.dtype(cd).itemsize
        vmem_cap = _vmem_capacity_bytes()
        fixed = (2 * (Lk * K + K * 2 * dim + 2 * dim * dim) + Lk * 2 * dim) * bpe
        per_row = 2 * 2 * dim * bpe + 6 * dim * 4      # dbl-buffered x/out rows + f32 temps
        budget = int(vmem_cap * 0.4)
        avail = max(budget - fixed, 0)
        tq_cap = int(min(1024, max(128, avail // per_row)))
        tq = _pick_tile(Lq, tq_cap)
        vmem_limit = int(vmem_cap * 3 // 4)

        kernel = functools.partial(_fused_attn_kernel, heads=heads)
        y_flat = pl.pallas_call(
            kernel,
            out_shape=jax.ShapeDtypeStruct((B, Lq, dim), cd),
            grid=(B, Lq // tq),
            in_specs=[
                pl.BlockSpec((1, Lk, K), lambda b, qi: (b, 0, 0)),       # x_patch (per batch)
                pl.BlockSpec((1, tq, dim), lambda b, qi: (b, qi, 0)),    # x_pix  (per q-tile)
                pl.BlockSpec((K, 2 * dim), lambda b, qi: (0, 0)),        # wkv (resident)
                pl.BlockSpec((dim, dim), lambda b, qi: (0, 0)),          # wq  (resident)
                pl.BlockSpec((dim, dim), lambda b, qi: (0, 0)),          # wo  (resident)
            ],
            out_specs=pl.BlockSpec((1, tq, dim), lambda b, qi: (b, qi, 0)),
            scratch_shapes=[pltpu.VMEM((Lk, 2 * dim), cd)],              # fused K/V
            compiler_params=pltpu.CompilerParams(
                dimension_semantics=("parallel", "arbitrary"),
                vmem_limit_bytes=vmem_limit),
        )(x_patch, x_pix, wkv_mat, wq_mat, wo_mat)

        return y_flat.reshape(B, H, W, dim)

    def __call__(self, x_nchw):
        # PyTorch-parity entry point: NCHW f32 in / NCHW f32 out.  The layout transposes
        # and the f32 cast live only at this boundary; the kernel path is NHWC bf16.
        y = self.forward_nhwc(jnp.transpose(x_nchw, (0, 2, 3, 1)))
        return jnp.transpose(y, (0, 3, 1, 2)).astype(jnp.float32)


# ------------------------- reference (module semantics, matched dtypes) -------------------------

def reference_forward(mod, x):
    """Conv-formulated reference (same structure as the PyTorch module) using the same
    bf16-cast weights/activations as the Pallas path, with f32 accumulation."""
    B, C, H, W = x.shape
    dim, heads, r = mod.dim, mod.heads, mod.r
    dph = dim // heads
    cd = mod.compute_dtype
    _, _, _, wq_c, wkv_c, wo_c = mod._prepared_weights()   # scale already folded into wq_c
    dn = ('NCHW', 'OIHW', 'NCHW')
    xb = x.astype(cd)
    q = lax.conv_general_dilated(xb, wq_c, (1, 1), 'VALID', dimension_numbers=dn,
                                 preferred_element_type=jnp.float32)
    kv = lax.conv_general_dilated(xb, wkv_c, (r, r), 'VALID', dimension_numbers=dn,
                                  preferred_element_type=jnp.float32)
    k, v = kv[:, :dim], kv[:, dim:]

    def rearr(t):
        b, c, hh, ww = t.shape
        t = t.reshape(b, heads, dph, hh * ww)
        return jnp.transpose(t, (0, 1, 3, 2)).reshape(b * heads, hh * ww, dph)

    qh, kh, vh = (rearr(t).astype(cd) for t in (q, k, v))
    sim = jnp.einsum('bid,bjd->bij', qh, kh, preferred_element_type=jnp.float32)
    attn = jax.nn.softmax(sim, axis=-1)
    out = jnp.einsum('bij,bjd->bid', attn.astype(cd), vh,
                     preferred_element_type=jnp.float32)
    out = out.reshape(B, heads, H, W, dph)
    out = jnp.transpose(out, (0, 1, 4, 2, 3)).reshape(B, dim, H, W)
    return lax.conv_general_dilated(out.astype(cd), wo_c, (1, 1), 'VALID',
                                    dimension_numbers=dn,
                                    preferred_element_type=jnp.float32)


# ------------------------- main -------------------------

if __name__ == "__main__":
    key = jax.random.PRNGKey(0)
    kx, kp = jax.random.split(key)

    # Small but lane-friendly shapes: dim = 128 keeps every block lane-dense.
    B, dim, H, W = 2, 128, 16, 16
    heads, reduction_ratio = 4, 4

    x = jax.random.normal(kx, (B, dim, H, W), jnp.float32)
    mod = EfficientSelfAttentionPallas(dim=dim, heads=heads,
                                       reduction_ratio=reduction_ratio, key=kp)

    y = jax.block_until_ready(mod(x))
    assert y.shape == (B, dim, H, W)

    y_ref = jax.block_until_ready(reference_forward(mod, x))
    max_err = float(jnp.max(jnp.abs(y - y_ref)))
    assert jnp.allclose(y, y_ref, atol=1e-2, rtol=1e-2), f"max_err={max_err}"

    print("KERNEL_OK")
</pallas_src>

<mosaic_0001>
module attributes {stable_mosaic.version = 11 : i64} {
  func.func @_fused_attn_kernel(%arg0: i32, %arg1: i32, %arg2: memref<1x16x2048xbf16, #tpu.memory_space<vmem>>, %arg3: memref<1x256x128xbf16, #tpu.memory_space<vmem>>, %arg4: memref<2048x256xbf16, #tpu.memory_space<vmem>>, %arg5: memref<128x128xbf16, #tpu.memory_space<vmem>>, %arg6: memref<128x128xbf16, #tpu.memory_space<vmem>>, %arg7: memref<1x256x128xbf16, #tpu.memory_space<vmem>>, %arg8: memref<16x256xbf16, #tpu.memory_space<vmem>>) attributes {dimension_semantics = [#tpu.dimension_semantics<parallel>, #tpu.dimension_semantics<arbitrary>], iteration_bounds = array<i64: 2, 1>, scalar_prefetch = 0 : i64, scratch_operands = 1 : i64, tpu.core_type = #tpu.core_type<tc>, window_params = [{transform_indices = @transform_0, window_bounds = array<i64: 1, 16, 2048>}, {transform_indices = @transform_1, window_bounds = array<i64: 1, 256, 128>}, {pipeline_mode = #tpu.pipeline_mode<synchronous>, transform_indices = @transform_2, window_bounds = array<i64: 2048, 256>}, {pipeline_mode = #tpu.pipeline_mode<synchronous>, transform_indices = @transform_3, window_bounds = array<i64: 128, 128>}, {pipeline_mode = #tpu.pipeline_mode<synchronous>, transform_indices = @transform_4, window_bounds = array<i64: 128, 128>}, {transform_indices = @transform_5, window_bounds = array<i64: 1, 256, 128>}]} {
    %c0_i32 = arith.constant 0 : i32
    %0 = arith.cmpi eq, %arg1, %c0_i32 : i32
    %1 = arith.extui %0 : i1 to i32
    %c0_i32_0 = arith.constant 0 : i32
    %2 = arith.cmpi ne, %1, %c0_i32_0 : i32
    scf.if %2 {
      %c0_29 = arith.constant 0 : index
      %c0_30 = arith.constant 0 : index
      %c0_31 = arith.constant 0 : index
      %81 = vector.load %arg2[%c0_29, %c0_30, %c0_31] : memref<1x16x2048xbf16, #tpu.memory_space<vmem>>, vector<1x16x2048xbf16>
      %82 = vector.shape_cast %81 : vector<1x16x2048xbf16> to vector<16x2048xbf16>
      %c0_32 = arith.constant 0 : index
      %c0_33 = arith.constant 0 : index
      %83 = vector.load %arg4[%c0_32, %c0_33] : memref<2048x256xbf16, #tpu.memory_space<vmem>>, vector<2048x256xbf16>
      %cst_34 = arith.constant dense<0.000000e+00> : vector<16x256xf32>
      %84 = tpu.matmul %82, %83, %cst_34 {dimension_numbers = #tpu.dot_dimension_numbers<[1], [0], [0], [1], [0, 0, 1, 1], [], []>} : vector<16x2048xbf16>, vector<2048x256xbf16>, vector<16x256xf32> -> vector<16x256xf32>
      %85 = arith.truncf %84 : vector<16x256xf32> to vector<16x256xbf16>
      %c0_35 = arith.constant 0 : index
      %c0_36 = arith.constant 0 : index
      %86 = vector.load %arg8[%c0_35, %c0_36] : memref<16x256xbf16, #tpu.memory_space<vmem>>, vector<16x256xbf16>
      tpu.vector_store %arg8[%c0_35, %c0_36], %85 {strides = array<i32>} : memref<16x256xbf16, #tpu.memory_space<vmem>>, vector<16x256xbf16>,
    } else {
    }
    %c0 = arith.constant 0 : index
    %c0_1 = arith.constant 0 : index
    %c0_2 = arith.constant 0 : index
    %3 = vector.load %arg3[%c0, %c0_1, %c0_2] : memref<1x256x128xbf16, #tpu.memory_space<vmem>>, vector<1x256x128xbf16>
    %4 = vector.shape_cast %3 : vector<1x256x128xbf16> to vector<256x128xbf16>
    %c0_3 = arith.constant 0 : index
    %c0_4 = arith.constant 0 : index
    %5 = vector.load %arg5[%c0_3, %c0_4] : memref<128x128xbf16, #tpu.memory_space<vmem>>, vector<128x128xbf16>
    %cst = arith.constant dense<0.000000e+00> : vector<256x128xf32>
    %6 = tpu.matmul %4, %5, %cst {dimension_numbers = #tpu.dot_dimension_numbers<[1], [0], [0], [1], [0, 0, 1, 1], [], []>} : vector<256x128xbf16>, vector<128x128xbf16>, vector<256x128xf32> -> vector<256x128xf32>
    %7 = arith.truncf %6 : vector<256x128xf32> to vector<256x128xbf16>
    %c0_5 = arith.constant 0 : index
    %c0_6 = arith.constant 0 : index
    %8 = vector.load %arg8[%c0_5, %c0_6] : memref<16x256xbf16, #tpu.memory_space<vmem>>, vector<16x256xbf16>
    %9 = vector.extract_strided_slice %7 {offsets = [0, 0], sizes = [256, 32], strides = [1, 1]} : vector<256x128xbf16> to vector<256x32xbf16>
    %10 = vector.extract_strided_slice %8 {offsets = [0, 0], sizes = [16, 32], strides = [1, 1]} : vector<16x256xbf16> to vector<16x32xbf16>
    %11 = vector.extract_strided_slice %8 {offsets = [0, 128], sizes = [16, 32], strides = [1, 1]} : vector<16x256xbf16> to vector<16x32xbf16>
    %cst_7 = arith.constant dense<0.000000e+00> : vector<256x16xf32>
    %12 = tpu.matmul %9, %10, %cst_7 {dimension_numbers = #tpu.dot_dimension_numbers<[1], [1], [0], [0], [0, 0, 1, 0], [], []>} : vector<256x32xbf16>, vector<16x32xbf16>, vector<256x16xf32> -> vector<256x16xf32>
    %cst_8 = arith.constant dense<0xFF800000> : vector<256xf32>
    %13 = vector.multi_reduction <maximumf>, %12, %cst_8 [1] : vector<256x16xf32> to vector<256xf32>
    %14 = vector.shape_cast %13 : vector<256xf32> to vector<256x1xf32>
    %15 = vector.broadcast %14 : vector<256x1xf32> to vector<256x16xf32>
    %16 = arith.subf %12, %15 : vector<256x16xf32>
    %17 = math.exp %16 : vector<256x16xf32>
    %cst_9 = arith.constant dense<0.000000e+00> : vector<256xf32>
    %18 = vector.multi_reduction <add>, %17, %cst_9 [1] : vector<256x16xf32> to vector<256xf32>
    %19 = vector.shape_cast %18 : vector<256xf32> to vector<256x1xf32>
    %20 = tpu.reciprocal %19 {approx = true} : vector<256x1xf32> -> vector<256x1xf32>
    %21 = vector.broadcast %20 : vector<256x1xf32> to vector<256x16xf32>
    %22 = arith.mulf %17, %21 : vector<256x16xf32>
    %23 = arith.truncf %22 : vector<256x16xf32> to vector<256x16xbf16>
    %cst_10 = arith.constant dense<0.000000e+00> : vector<256x32xf32>
    %24 = tpu.matmul %23, %11, %cst_10 {dimension_numbers = #tpu.dot_dimension_numbers<[1], [0], [0], [1], [0, 0, 1, 1], [], []>} : vector<256x16xbf16>, vector<16x32xbf16>, vector<256x32xf32> -> vector<256x32xf32>
    %25 = vector.extract_strided_slice %7 {offsets = [0, 32], sizes = [256, 32], strides = [1, 1]} : vector<256x128xbf16> to vector<256x32xbf16>
    %26 = vector.extract_strided_slice %8 {offsets = [0, 32], sizes = [16, 32], strides = [1, 1]} : vector<16x256xbf16> to vector<16x32xbf16>
    %27 = vector.extract_strided_slice %8 {offsets = [0, 160], sizes = [16, 32], strides = [1, 1]} : vector<16x256xbf16> to vector<16x32xbf16>
    %cst_11 = arith.constant dense<0.000000e+00> : vector<256x16xf32>
    %28 = tpu.matmul %25, %26, %cst_11 {dimension_numbers = #tpu.dot_dimension_numbers<[1], [1], [0], [0], [0, 0, 1, 0], [], []>} : vector<256x32xbf16>, vector<16x32xbf16>, vector<256x16xf32> -> vector<256x16xf32>
    %cst_12 = arith.constant dense<0xFF800000> : vector<256xf32>
    %29 = vector.multi_reduction <maximumf>, %28, %cst_12 [1] : vector<256x16xf32> to vector<256xf32>
    %30 = vector.shape_cast %29 : vector<256xf32> to vector<256x1xf32>
    %31 = vector.broadcast %30 : vector<256x1xf32> to vector<256x16xf32>
    %32 = arith.subf %28, %31 : vector<256x16xf32>
    %33 = math.exp %32 : vector<256x16xf32>
    %cst_13 = arith.constant dense<0.000000e+00> : vector<256xf32>
    %34 = vector.multi_reduction <add>, %33, %cst_13 [1] : vector<256x16xf32> to vector<256xf32>
    %35 = vector.shape_cast %34 : vector<256xf32> to vector<256x1xf32>
    %36 = tpu.reciprocal %35 {approx = true} : vector<256x1xf32> -> vector<256x1xf32>
    %37 = vector.broadcast %36 : vector<256x1xf32> to vector<256x16xf32>
    %38 = arith.mulf %33, %37 : vector<256x16xf32>
    %39 = arith.truncf %38 : vector<256x16xf32> to vector<256x16xbf16>
    %cst_14 = arith.constant dense<0.000000e+00> : vector<256x32xf32>
    %40 = tpu.matmul %39, %27, %cst_14 {dimension_numbers = #tpu.dot_dimension_numbers<[1], [0], [0], [1], [0, 0, 1, 1], [], []>} : vector<256x16xbf16>, vector<16x32xbf16>, vector<256x32xf32> -> vector<256x32xf32>
    %41 = vector.extract_strided_slice %7 {offsets = [0, 64], sizes = [256, 32], strides = [1, 1]} : vector<256x128xbf16> to vector<256x32xbf16>
    %42 = vector.extract_strided_slice %8 {offsets = [0, 64], sizes = [16, 32], strides = [1, 1]} : vector<16x256xbf16> to vector<16x32xbf16>
    %43 = vector.extract_strided_slice %8 {offsets = [0, 192], sizes = [16, 32], strides = [1, 1]} : vector<16x256xbf16> to vector<16x32xbf16>
    %cst_15 = arith.constant dense<0.000000e+00> : vector<256x16xf32>
    %44 = tpu.matmul %41, %42, %cst_15 {dimension_numbers = #tpu.dot_dimension_numbers<[1], [1], [0], [0], [0, 0, 1, 0], [], []>} : vector<256x32xbf16>, vector<16x32xbf16>, vector<256x16xf32> -> vector<256x16xf32>
    %cst_16 = arith.constant dense<0xFF800000> : vector<256xf32>
    %45 = vector.multi_reduction <maximumf>, %44, %cst_16 [1] : vector<256x16xf32> to vector<256xf32>
    %46 = vector.shape_cast %45 : vector<256xf32> to vector<256x1xf32>
    %47 = vector.broadcast %46 : vector<256x1xf32> to vector<256x16xf32>
    %48 = arith.subf %44, %47 : vector<256x16xf32>
    %49 = math.exp %48 : vector<256x16xf32>
    %cst_17 = arith.constant dense<0.000000e+00> : vector<256xf32>
    %50 = vector.multi_reduction <add>, %49, %cst_17 [1] : vector<256x16xf32> to vector<256xf32>
    %51 = vector.shape_cast %50 : vector<256xf32> to vector<256x1xf32>
    %52 = tpu.reciprocal %51 {approx = true} : vector<256x1xf32> -> vector<256x1xf32>
    %53 = vector.broadcast %52 : vector<256x1xf32> to vector<256x16xf32>
    %54 = arith.mulf %49, %53 : vector<256x16xf32>
    %55 = arith.truncf %54 : vector<256x16xf32> to vector<256x16xbf16>
    %cst_18 = arith.constant dense<0.000000e+00> : vector<256x32xf32>
    %56 = tpu.matmul %55, %43, %cst_18 {dimension_numbers = #tpu.dot_dimension_numbers<[1], [0], [0], [1], [0, 0, 1, 1], [], []>} : vector<256x16xbf16>, vector<16x32xbf16>, vector<256x32xf32> -> vector<256x32xf32>
    %57 = vector.extract_strided_slice %7 {offsets = [0, 96], sizes = [256, 32], strides = [1, 1]} : vector<256x128xbf16> to vector<256x32xbf16>
    %58 = vector.extract_strided_slice %8 {offsets = [0, 96], sizes = [16, 32], strides = [1, 1]} : vector<16x256xbf16> to vector<16x32xbf16>
    %59 = vector.extract_strided_slice %8 {offsets = [0, 224], sizes = [16, 32], strides = [1, 1]} : vector<16x256xbf16> to vector<16x32xbf16>
    %cst_19 = arith.constant dense<0.000000e+00> : vector<256x16xf32>
    %60 = tpu.matmul %57, %58, %cst_19 {dimension_numbers = #tpu.dot_dimension_numbers<[1], [1], [0], [0], [0, 0, 1, 0], [], []>} : vector<256x32xbf16>, vector<16x32xbf16>, vector<256x16xf32> -> vector<256x16xf32>
    %cst_20 = arith.constant dense<0xFF800000> : vector<256xf32>
    %61 = vector.multi_reduction <maximumf>, %60, %cst_20 [1] : vector<256x16xf32> to vector<256xf32>
    %62 = vector.shape_cast %61 : vector<256xf32> to vector<256x1xf32>
    %63 = vector.broadcast %62 : vector<256x1xf32> to vector<256x16xf32>
    %64 = arith.subf %60, %63 : vector<256x16xf32>
    %65 = math.exp %64 : vector<256x16xf32>
    %cst_21 = arith.constant dense<0.000000e+00> : vector<256xf32>
    %66 = vector.multi_reduction <add>, %65, %cst_21 [1] : vector<256x16xf32> to vector<256xf32>
    %67 = vector.shape_cast %66 : vector<256xf32> to vector<256x1xf32>
    %68 = tpu.reciprocal %67 {approx = true} : vector<256x1xf32> -> vector<256x1xf32>
    %69 = vector.broadcast %68 : vector<256x1xf32> to vector<256x16xf32>
    %70 = arith.mulf %65, %69 : vector<256x16xf32>
    %71 = arith.truncf %70 : vector<256x16xf32> to vector<256x16xbf16>
    %cst_22 = arith.constant dense<0.000000e+00> : vector<256x32xf32>
    %72 = tpu.matmul %71, %59, %cst_22 {dimension_numbers = #tpu.dot_dimension_numbers<[1], [0], [0], [1], [0, 0, 1, 1], [], []>} : vector<256x16xbf16>, vector<16x32xbf16>, vector<256x32xf32> -> vector<256x32xf32>
    %73 = tpu.concatenate %24, %40, %56, %72 in 1 : vector<256x32xf32>, vector<256x32xf32>, vector<256x32xf32>, vector<256x32xf32> -> vector<256x128xf32>
    %74 = arith.truncf %73 : vector<256x128xf32> to vector<256x128xbf16>
    %c0_23 = arith.constant 0 : index
    %c0_24 = arith.constant 0 : index
    %75 = vector.load %arg6[%c0_23, %c0_24] : memref<128x128xbf16, #tpu.memory_space<vmem>>, vector<128x128xbf16>
    %cst_25 = arith.constant dense<0.000000e+00> : vector<256x128xf32>
    %76 = tpu.matmul %74, %75, %cst_25 {dimension_numbers = #tpu.dot_dimension_numbers<[1], [0], [0], [1], [0, 0, 1, 1], [], []>} : vector<256x128xbf16>, vector<128x128xbf16>, vector<256x128xf32> -> vector<256x128xf32>
    %77 = arith.truncf %76 : vector<256x128xf32> to vector<256x128xbf16>
    %c0_26 = arith.constant 0 : index
    %c0_27 = arith.constant 0 : index
    %c0_28 = arith.constant 0 : index
    %78 = vector.load %arg7[%c0_26, %c0_27, %c0_28] : memref<1x256x128xbf16, #tpu.memory_space<vmem>>, vector<1x256x128xbf16>
    %79 = vector.shape_cast %78 : vector<1x256x128xbf16> to vector<256x128xbf16>
    %80 = vector.shape_cast %77 : vector<256x128xbf16> to vector<1x256x128xbf16>
    tpu.vector_store %arg7[%c0_26, %c0_27, %c0_28], %80 {strides = array<i32>} : memref<1x256x128xbf16, #tpu.memory_space<vmem>>, vector<1x256x128xbf16>,
    return
  }
  func.func @transform_0(%arg0: i32, %arg1: i32) -> (i32, i32, i32) {
    %c0_i32 = arith.constant 0 : i32
    %c0_i32_0 = arith.constant 0 : i32
    %c0_i32_1 = arith.constant 0 : i32
    return %arg0, %c0_i32, %c0_i32_0 : i32, i32, i32
  }
  func.func @transform_1(%arg0: i32, %arg1: i32) -> (i32, i32, i32) {
    %c0_i32 = arith.constant 0 : i32
    %c0_i32_0 = arith.constant 0 : i32
    return %arg0, %arg1, %c0_i32 : i32, i32, i32
  }
  func.func @transform_2(%arg0: i32, %arg1: i32) -> (i32, i32) {
    %c0_i32 = arith.constant 0 : i32
    %c0_i32_0 = arith.constant 0 : i32
    %c0_i32_1 = arith.constant 0 : i32
    return %c0_i32, %c0_i32_0 : i32, i32
  }
  func.func @transform_3(%arg0: i32, %arg1: i32) -> (i32, i32) {
    %c0_i32 = arith.constant 0 : i32
    %c0_i32_0 = arith.constant 0 : i32
    %c0_i32_1 = arith.constant 0 : i32
    return %c0_i32, %c0_i32_0 : i32, i32
  }
  func.func @transform_4(%arg0: i32, %arg1: i32) -> (i32, i32) {
    %c0_i32 = arith.constant 0 : i32
    %c0_i32_0 = arith.constant 0 : i32
    %c0_i32_1 = arith.constant 0 : i32
    return %c0_i32, %c0_i32_0 : i32, i32
  }
  func.func @transform_5(%arg0: i32, %arg1: i32) -> (i32, i32, i32) {
    %c0_i32 = arith.constant 0 : i32
    %c0_i32_0 = arith.constant 0 : i32
    return %arg0, %arg1, %c0_i32 : i32, i32, i32
  }
}

</mosaic_0001>

<llo_original>
// kernel: tpu_custom_call.1
$region0: #{tpu_custom_call.1}
  #allocation0 [shape = 'u32[]', space=smem, size = 0x4, offset = 0x4, fixed_abs, tag = 'smem constant byte address 0x4 - core index']
  #allocation1 [shape = 'u32[144,128]{1,0:T(1,128)}', space=vmem, size = 0x12000, scoped, tag = 'internal scratch']
  #allocation2 [shape = 'bf16[16,256]{1,0:T(8,128)(2,1)}', space=vmem, size = 0x2000, scoped, tag = 'scratch operand']
  %s0 = inlined_call_operand.hbm [shape: bf16[2,16,2048], index: 0, kind: input, shape index: {}]
  %s1 = inlined_call_operand.hbm [shape: bf16[2,256,128], index: 1, kind: input, shape index: {}]
  %s2 = inlined_call_operand.hbm [shape: bf16[2048,256], index: 2, kind: input, shape index: {}]
  %s3 = inlined_call_operand.hbm [shape: bf16[128,128], index: 3, kind: input, shape index: {}]
  %s4 = inlined_call_operand.hbm [shape: bf16[128,128], index: 4, kind: input, shape index: {}]
  %s5 = inlined_call_operand.hbm [shape: bf16[2,256,128], index: 5, kind: output, shape index: {}]
  %s6 = sld [smem:[#allocation0]]
  $region77: #{tpu_custom_call.1} parent=0
    _
  %s8 = ssub.s32 1, %s6
  %s9 = scalar_select 0, %s8, %s6
  $region1: #{tpu_custom_call.1} parent=0
    #allocation3 [shape = 'u8[131072]{0}', space=vmem, size = 0x20000, scoped, tag = 'input window, operand 0']
    #allocation4 [shape = 's32[2]{0}', space=sflag, size = 0x8, scoped, tag = 'scoped memory for tpu_custom_call.1']
    #allocation5 [shape = 's32[2]{0}', space=sflag, size = 0x8, scoped, tag = 'scoped memory for tpu_custom_call.1']
    #allocation6 [shape = 'u8[131072]{0}', space=vmem, size = 0x20000, scoped, tag = 'input window, operand 1']
    #allocation7 [shape = 's32[2]{0}', space=sflag, size = 0x8, scoped, tag = 'scoped memory for tpu_custom_call.1']
    #allocation8 [shape = 'u8[1048576]{0}', space=vmem, size = 0x100000, scoped, tag = 'input window, operand 2, single buffered']
    #allocation9 [shape = 'u8[32768]{0}', space=vmem, size = 0x8000, scoped, tag = 'input window, operand 3, single buffered']
    #allocation10 [shape = 's32[1]{0}', space=sflag, size = 0x4, scoped, tag = 'scoped memory for tpu_custom_call.1']
    #allocation11 [shape = 'u8[32768]{0}', space=vmem, size = 0x8000, scoped, tag = 'input window, operand 4, single buffered']
    #allocation12 [shape = 'u8[131072]{0}', space=vmem, size = 0x20000, scoped, tag = 'output window, operand 0']
    %10 = vsyncpa [#allocation4], 0
    %s11 = scalar_lea.sflag [#allocation4], 1
    %12 = vsyncpa %s11, 0
    %13 = vsyncpa [#allocation7], 0
    %s14 = scalar_lea.sflag [#allocation7], 1
    %15 = vsyncpa %s14, 0
    %16 = vsyncpa [#allocation10], 0
    %17 = vsyncpa [#allocation5], 0
    %s18 = scalar_lea.sflag [#allocation5], 1
    %19 = vsyncpa %s18, 0
    loop: start=0, step=1, limit=4
    $region2: #{tpu_custom_call.1} parent=1 // loop_pre_header
      _
    $region3: #{tpu_custom_call.1} parent=1 // loop_header
      %s21 = sphi 0, %s25
      %p22 = scmp.ge.s32.totalorder %s21, 4
      %s28 = sphi 0, %s40
      %s29 = sphi 0, %s36
      %s30 = sphi 0, %s28
      %s31 = sphi 0, %s29
      %s32 = sphi 0, %s30
      %s33 = sphi 0, %s31
      %s43 = sphi 0, %s45
      %s46 = sphi 0, %s43
      %s47 = sphi 0, %s46
      %s63 = sphi 0, %s47
      %s71 = sphi 0, %s73
      %s74 = sphi 0, %s71
      %s75 = sphi 0, %s74
      %s91 = sphi 0, %s75
      %s95 = sphi 0, %s95
      %s97 = sphi 0, %s95
      %s98 = sphi 0, %s97
      %s112 = sphi 0, %s98
      %s116 = sphi 0, %s116
      %s118 = sphi 0, %s116
      %s119 = sphi 0, %s118
      %s133 = sphi 0, %s119
      %s137 = sphi 0, %s137
      %s139 = sphi 0, %s137
      %s140 = sphi 0, %s139
      %s154 = sphi 0, %s140
      %s162 = sphi 0, %s164
      %s165 = sphi 0, %s162
      %s166 = sphi 0, %s165
      %s182 = sphi 0, %s166
    $region4: #{tpu_custom_call.1} parent=1 // loop_header_branch
      %24 = sbr.rel (%p22) target = $region8
    $region5: #{tpu_custom_call.1} parent=1 // loop_body
      %s26 = ssub.s32 %s21, 1
      %s27 = ssub.s32 %s21, 2
      %s34 = sadd.s32 1, %s29
      %p35 = scmp.ge.s32.totalorder %s34, 1
      %s36 = scalar_select %p35, 0, %s34
      %s37 = sadd.s32 1, %s28
      %s38 = scalar_select %p35, %s37, %s28
      %p39 = scmp.ge.s32.totalorder %s38, 2
      %s40 = scalar_select %p39, 0, %s38
      %s41 = ssub.s32 %s28, %s40
      %p42 = scmp.eq.s32.totalorder %s41, 0
      %s44 = sadd.s32 %s43, 1
      %s45 = scalar_select %p42, %s43, %s44
      %p48 = pneg %p42
      %p49 = scmp.eq.s32.totalorder %s21, 1
      %p50 = por %p48, %p49
      %p51 = scmp.ne.s32.totalorder %s43, %s46
      %p52 = scmp.eq.s32.totalorder %s21, 0
      %p53 = por %p51, %p52
      %p54 = scmp.ne.s32.totalorder %s43, %s46
      %p55 = scmp.eq.s32.totalorder %s26, 1
      %p56 = por %p54, %p55
      %p57 = scmp.ne.s32.totalorder %s46, %s47
      %p58 = scmp.eq.s32.totalorder %s26, 0
      %p59 = por %p57, %p58
      %p60 = scmp.ne.s32.totalorder %s46, %s47
      %p61 = scmp.eq.s32.totalorder %s27, 1
      %p62 = por %p60, %p61
      %p64 = scmp.ne.s32.totalorder %s47, %s63
      %p65 = scmp.eq.s32.totalorder %s27, 0
      %p66 = por %p64, %p65
      %s67 = ssub.s32 %s28, %s40
      %s68 = ssub.s32 %s29, %s36
      %s69 = sor.u32 %s67, %s68
      %p70 = scmp.eq.s32.totalorder %s69, 0
      %s72 = sadd.s32 %s71, 1
      %s73 = scalar_select %p70, %s71, %s72
      %p76 = pneg %p70
      %p77 = scmp.eq.s32.totalorder %s21, 1
      %p78 = por %p76, %p77
      %p79 = scmp.ne.s32.totalorder %s71, %s74
      %p80 = scmp.eq.s32.totalorder %s21, 0
      %p81 = por %p79, %p80
      %p82 = scmp.ne.s32.totalorder %s71, %s74
      %p83 = scmp.eq.s32.totalorder %s26, 1
      %p84 = por %p82, %p83
      %p85 = scmp.ne.s32.totalorder %s74, %s75
      %p86 = scmp.eq.s32.totalorder %s26, 0
      %p87 = por %p85, %p86
      %p88 = scmp.ne.s32.totalorder %s74, %s75
      %p89 = scmp.eq.s32.totalorder %s27, 1
      %p90 = por %p88, %p89
      %p92 = scmp.ne.s32.totalorder %s75, %s91
      %p93 = scmp.eq.s32.totalorder %s27, 0
      %p94 = por %p92, %p93
      %s96 = sadd.s32 %s95, 1
      %p99 = scmp.eq.s32.totalorder %s21, 1
      %p100 = scmp.ne.s32.totalorder %s95, %s97
      %p101 = scmp.eq.s32.totalorder %s21, 0
      %p102 = por %p100, %p101
      %p103 = scmp.ne.s32.totalorder %s95, %s97
      %p104 = scmp.eq.s32.totalorder %s26, 1
      %p105 = por %p103, %p104
      %p106 = scmp.ne.s32.totalorder %s97, %s98
      %p107 = scmp.eq.s32.totalorder %s26, 0
      %p108 = por %p106, %p107
      %p109 = scmp.ne.s32.totalorder %s97, %s98
      %p110 = scmp.eq.s32.totalorder %s27, 1
      %p111 = por %p109, %p110
      %p113 = scmp.ne.s32.totalorder %s98, %s112
      %p114 = scmp.eq.s32.totalorder %s27, 0
      %p115 = por %p113, %p114
      %s117 = sadd.s32 %s116, 1
      %p120 = scmp.eq.s32.totalorder %s21, 1
      %p121 = scmp.ne.s32.totalorder %s116, %s118
      %p122 = scmp.eq.s32.totalorder %s21, 0
      %p123 = por %p121, %p122
      %p124 = scmp.ne.s32.totalorder %s116, %s118
      %p125 = scmp.eq.s32.totalorder %s26, 1
      %p126 = por %p124, %p125
      %p127 = scmp.ne.s32.totalorder %s118, %s119
      %p128 = scmp.eq.s32.totalorder %s26, 0
      %p129 = por %p127, %p128
      %p130 = scmp.ne.s32.totalorder %s118, %s119
      %p131 = scmp.eq.s32.totalorder %s27, 1
      %p132 = por %p130, %p131
      %p134 = scmp.ne.s32.totalorder %s119, %s133
      %p135 = scmp.eq.s32.totalorder %s27, 0
      %p136 = por %p134, %p135
      %s138 = sadd.s32 %s137, 1
      %p141 = scmp.eq.s32.totalorder %s21, 1
      %p142 = scmp.ne.s32.totalorder %s137, %s139
      %p143 = scmp.eq.s32.totalorder %s21, 0
      %p144 = por %p142, %p143
      %p145 = scmp.ne.s32.totalorder %s137, %s139
      %p146 = scmp.eq.s32.totalorder %s26, 1
      %p147 = por %p145, %p146
      %p148 = scmp.ne.s32.totalorder %s139, %s140
      %p149 = scmp.eq.s32.totalorder %s26, 0
      %p150 = por %p148, %p149
      %p151 = scmp.ne.s32.totalorder %s139, %s140
      %p152 = scmp.eq.s32.totalorder %s27, 1
      %p153 = por %p151, %p152
      %p155 = scmp.ne.s32.totalorder %s140, %s154
      %p156 = scmp.eq.s32.totalorder %s27, 0
      %p157 = por %p155, %p156
      %s158 = ssub.s32 %s28, %s40
      %s159 = ssub.s32 %s29, %s36
      %s160 = sor.u32 %s158, %s159
      %p161 = scmp.eq.s32.totalorder %s160, 0
      %s163 = sadd.s32 %s162, 1
      %s164 = scalar_select %p161, %s162, %s163
      %p167 = pneg %p161
      %p168 = scmp.eq.s32.totalorder %s21, 1
      %p169 = por %p167, %p168
      %p170 = scmp.ne.s32.totalorder %s162, %s165
      %p171 = scmp.eq.s32.totalorder %s21, 0
      %p172 = por %p170, %p171
      %p173 = scmp.ne.s32.totalorder %s162, %s165
      %p174 = scmp.eq.s32.totalorder %s26, 1
      %p175 = por %p173, %p174
      %p176 = scmp.ne.s32.totalorder %s165, %s166
      %p177 = scmp.eq.s32.totalorder %s26, 0
      %p178 = por %p176, %p177
      %p179 = scmp.ne.s32.totalorder %s165, %s166
      %p180 = scmp.eq.s32.totalorder %s27, 1
      %p181 = por %p179, %p180
      %p183 = scmp.ne.s32.totalorder %s166, %s182
      %p184 = scmp.eq.s32.totalorder %s27, 0
      %p185 = por %p183, %p184
      %p186 = scmp.le.s32.totalorder 1, %s21
      %p187 = scmp.lt.s32.totalorder %s21, 3
      %p188 = pnand %p186, %p187
      %p189 = pneg %p188
      // Predicated region
      $region9: #{tpu_custom_call.1} parent=5 // pred_check
        _
      $region10: #{tpu_custom_call.1} parent=5 // pred_check_branch
        %191 = sbr.rel (%p188) target = $region12
      $region11: #{tpu_custom_call.1} parent=5 // pred_region
        %s192 = ssub.s32 %s21, 1
        // Predicated region
        $region13: #{tpu_custom_call.1} parent=11 // pred_check
          %p193 = pneg %p108
        $region14: #{tpu_custom_call.1} parent=11 // pred_check_branch
          %195 = sbr.rel (%p193) target = $region16
        $region15: #{tpu_custom_call.1} parent=11 // pred_region
          %s197 = ssub.s32 32768, 32768
          %198 = vsyncadd [#allocation7], %s197
          %s199 = sshll.u32 [#allocation8], 4
          %s200 = int_to_ptr.vmem [resolvable:$true] %s199
          %205 = dma.hbm_to_vmem [thread:$0]  %s2, 32768, %s200, [#allocation7], 128, 128, 8
        $region16: #{tpu_custom_call.1} parent=11 // pred_fallthru
          _
        // Predicated region
        $region17: #{tpu_custom_call.1} parent=11 // pred_check
          %p206 = pneg %p129
        $region18: #{tpu_custom_call.1} parent=11 // pred_check_branch
          %208 = sbr.rel (%p206) target = $region20
        $region19: #{tpu_custom_call.1} parent=11 // pred_region
          %s210 = ssub.s32 1024, 1024
          %211 = vsyncadd [#allocation10], %s210
          %s212 = sshll.u32 [#allocation9], 4
          %s213 = int_to_ptr.vmem [resolvable:$true] %s212
          %218 = dma.hbm_to_vmem [thread:$0]  %s3, 1024, %s213, [#allocation10], 64, 64, 4
        $region20: #{tpu_custom_call.1} parent=11 // pred_fallthru
          _
        // Predicated region
        $region21: #{tpu_custom_call.1} parent=11 // pred_check
          %p219 = pneg %p150
        $region22: #{tpu_custom_call.1} parent=11 // pred_check_branch
          %221 = sbr.rel (%p219) target = $region24
        $region23: #{tpu_custom_call.1} parent=11 // pred_region
          %s223 = ssub.s32 1024, 1024
          %224 = vsyncadd [#allocation10], %s223
          %s225 = sshll.u32 [#allocation11], 4
          %s226 = int_to_ptr.vmem [resolvable:$true] %s225
          %231 = dma.hbm_to_vmem [thread:$0]  %s4, 1024, %s226, [#allocation10], 64, 64, 4
        $region24: #{tpu_custom_call.1} parent=11 // pred_fallthru
          _
      $region12: #{tpu_custom_call.1} parent=5 // pred_fallthru
        _
      %p232 = scmp.lt.s32.totalorder %s21, 2
      // Predicated region
      $region25: #{tpu_custom_call.1} parent=5 // pred_check
        %p233 = pneg %p232
      $region26: #{tpu_custom_call.1} parent=5 // pred_check_branch
        %235 = sbr.rel (%p233) target = $region28
      $region27: #{tpu_custom_call.1} parent=5 // pred_region
        // Predicated region
        $region29: #{tpu_custom_call.1} parent=27 // pred_check
          %p236 = pneg %p53
        $region30: #{tpu_custom_call.1} parent=27 // pred_check_branch
          %238 = sbr.rel (%p236) target = $region32
        $region31: #{tpu_custom_call.1} parent=27 // pred_region
          %s239 = sand.u32 %s43, 1
          %s240 = scalar_lea.sflag [#allocation4], %s239
          %s241 = sand.u32 %s43, 1
          %s242 = smul.addr %s241, 128
          %s243 = scalar_lea.vmem [#allocation3], %s242
          %s245 = ssub.s32 2048, 2048
          %246 = vsyncadd %s240, %s245
          %s247 = smul.addr %s28, 32
          %s248 = smul.addr %s247, 64
          %s249 = scalar_lea.hbm %s0, %s248
          %s250 = sshll.u32 %s243, 4
          %s251 = int_to_ptr.vmem [resolvable:$true] %s250
          %256 = dma.hbm_to_vmem [thread:$0]  %s249, 2048, %s251, %s240, 1024, 1024, 64
        $region32: #{tpu_custom_call.1} parent=27 // pred_fallthru
          _
        // Predicated region
        $region33: #{tpu_custom_call.1} parent=27 // pred_check
          %p257 = pneg %p81
        $region34: #{tpu_custom_call.1} parent=27 // pred_check_branch
          %259 = sbr.rel (%p257) target = $region36
        $region35: #{tpu_custom_call.1} parent=27 // pred_region
          %s260 = sand.u32 %s21, 1
          %s261 = scalar_lea.sflag [#allocation7], %s260
          %s262 = sand.u32 %s71, 1
          %s263 = smul.addr %s262, 128
          %s264 = scalar_lea.vmem [#allocation6], %s263
          %s265 = smul.u32 32, %s29
          %s267 = ssub.s32 2048, 2048
          %268 = vsyncadd %s261, %s267
          %s269 = smul.addr %s28, 32
          %s270 = sadd.s32 %s265, %s269
          %s271 = smul.addr %s270, 64
          %s272 = scalar_lea.hbm %s1, %s271
          %s273 = sshll.u32 %s264, 4
          %s274 = int_to_ptr.vmem [resolvable:$true] %s273
          %279 = dma.hbm_to_vmem [thread:$0]  %s272, 2048, %s274, %s261, 64, 64, 4
        $region36: #{tpu_custom_call.1} parent=27 // pred_fallthru
          _
      $region28: #{tpu_custom_call.1} parent=5 // pred_fallthru
        _
      %p280 = scmp.le.s32.totalorder 1, %s21
      %p281 = scmp.lt.s32.totalorder %s21, 3
      %p282 = pnand %p280, %p281
      %p283 = pneg %p282
      // Predicated region
      $region37: #{tpu_custom_call.1} parent=5 // pred_check
        _
      $region38: #{tpu_custom_call.1} parent=5 // pred_check_branch
        %285 = sbr.rel (%p282) target = $region40
      $region39: #{tpu_custom_call.1} parent=5 // pred_region
        %s286 = ssub.s32 %s21, 1
        %s287 = sand.u32 %s46, 1
        %s288 = scalar_lea.sflag [#allocation4], %s287
        %s289 = sand.u32 %s46, 1
        %s290 = smul.addr %s289, 128
        %s291 = scalar_lea.vmem [#allocation3], %s290
        // Predicated region
        $region41: #{tpu_custom_call.1} parent=39 // pred_check
          %p292 = pneg %p59
        $region42: #{tpu_custom_call.1} parent=39 // pred_check_branch
          %294 = sbr.rel (%p292) target = $region44
        $region43: #{tpu_custom_call.1} parent=39 // pred_region
          %295 = dma.done %s288, 2048
        $region44: #{tpu_custom_call.1} parent=39 // pred_fallthru
          _
        %s296 = sand.u32 %s26, 1
        %s297 = scalar_lea.sflag [#allocation7], %s296
        %s298 = sand.u32 %s74, 1
        %s299 = smul.addr %s298, 128
        %s300 = scalar_lea.vmem [#allocation6], %s299
        // Predicated region
        $region45: #{tpu_custom_call.1} parent=39 // pred_check
          %p301 = pneg %p87
        $region46: #{tpu_custom_call.1} parent=39 // pred_check_branch
          %303 = sbr.rel (%p301) target = $region48
        $region47: #{tpu_custom_call.1} parent=39 // pred_region
          %304 = dma.done %s297, 2048
        $region48: #{tpu_custom_call.1} parent=39 // pred_fallthru
          _
        // Predicated region
        $region49: #{tpu_custom_call.1} parent=39 // pred_check
          %p305 = pneg %p108
        $region50: #{tpu_custom_call.1} parent=39 // pred_check_branch
          %307 = sbr.rel (%p305) target = $region52
        $region51: #{tpu_custom_call.1} parent=39 // pred_region
          %308 = dma.done [#allocation7], 32768
        $region52: #{tpu_custom_call.1} parent=39 // pred_fallthru
          _
        // Predicated region
        $region53: #{tpu_custom_call.1} parent=39 // pred_check
          %p309 = pneg %p129
        $region54: #{tpu_custom_call.1} parent=39 // pred_check_branch
          %311 = sbr.rel (%p309) target = $region56
        $region55: #{tpu_custom_call.1} parent=39 // pred_region
          %312 = dma.done [#allocation10], 1024
        $region56: #{tpu_custom_call.1} parent=39 // pred_fallthru
          _
        // Predicated region
        $region57: #{tpu_custom_call.1} parent=39 // pred_check
          %p313 = pneg %p150
        $region58: #{tpu_custom_call.1} parent=39 // pred_check_branch
          %315 = sbr.rel (%p313) target = $region60
        $region59: #{tpu_custom_call.1} parent=39 // pred_region
          %316 = dma.done [#allocation10], 1024
        $region60: #{tpu_custom_call.1} parent=39 // pred_fallthru
          _
        %s317 = sand.u32 %s46, 1
        %s318 = scalar_lea.sflag [#allocation4], %s317
        %s319 = sand.u32 %s46, 1
        %s320 = smul.addr %s319, 128
        %s321 = scalar_lea.vmem [#allocation3], %s320
        %p322 = pneg %p59
        %p323 = pneg %p56
        %s324 = sand.u32 %s26, 1
        %s325 = scalar_lea.sflag [#allocation7], %s324
        %s326 = sand.u32 %s74, 1
        %s327 = smul.addr %s326, 128
        %s328 = scalar_lea.vmem [#allocation6], %s327
        %p329 = pneg %p87
        %p330 = pneg %p84
        %p331 = pneg %p108
        %p332 = pneg %p105
        %p333 = pneg %p129
        %p334 = pneg %p126
        %p335 = pneg %p150
        %p336 = pneg %p147
        %p337 = pneg %p178
        %p338 = pneg %p175
        %s339 = sand.u32 %s165, 1
        %s340 = scalar_lea.sflag [#allocation5], %s339
        %s341 = sand.u32 %s165, 1
        %s342 = smul.addr %s341, 128
        %s343 = scalar_lea.vmem [#allocation12], %s342
        %s344 = smul.u32 32, %s31
        %s345 = smul.u32 32, %s31
        %p347 = scmp.eq.s32.totalorder %s31, 0
        // Predicated region
        $region61: #{tpu_custom_call.1} parent=39 // pred_check
          %p348 = pneg %p347
        $region62: #{tpu_custom_call.1} parent=39 // pred_check_branch
          %350 = sbr.rel (%p348) target = $region64
        $region63: #{tpu_custom_call.1} parent=39 // pred_region
          %v351 = vld [vmem:[%s291] sm:$0xff]
          %v352 = vld [vmem:[%s291 + $0x8] sm:$0xff]
          %v353 = vld [vmem:[%s291 + $0x10] sm:$0xff]
          %v354 = vld [vmem:[%s291 + $0x18] sm:$0xff]
          %v355 = vld [vmem:[%s291 + $0x20] sm:$0xff]
          %v356 = vld [vmem:[%s291 + $0x28] sm:$0xff]
          %v357 = vld [vmem:[%s291 + $0x30] sm:$0xff]
          %v358 = vld [vmem:[%s291 + $0x38] sm:$0xff]
          %v359 = vld [vmem:[%s291 + $0x40] sm:$0xff]
          %v360 = vld [vmem:[%s291 + $0x48] sm:$0xff]
          %v361 = vld [vmem:[%s291 + $0x50] sm:$0xff]
          %v362 = vld [vmem:[%s291 + $0x58] sm:$0xff]
          %v363 = vld [vmem:[%s291 + $0x60] sm:$0xff]
          %v364 = vld [vmem:[%s291 + $0x68] sm:$0xff]
          %v365 = vld [vmem:[%s291 + $0x70] sm:$0xff]
          %v366 = vld [vmem:[%s291 + $0x78] sm:$0xff]
          %v367 = vld [vmem:[#allocation8] sm:$0xff]
          %v368 = vld [vmem:[#allocation8 + $0x8] sm:$0xff]
          %v369 = vld [vmem:[#allocation8 + $0x10] sm:$0xff]
          %v370 = vld [vmem:[#allocation8 + $0x18] sm:$0xff]
          %v371 = vld [vmem:[#allocation8 + $0x20] sm:$0xff]
          %v372 = vld [vmem:[#allocation8 + $0x28] sm:$0xff]
          %v373 = vld [vmem:[#allocation8 + $0x30] sm:$0xff]
          %v374 = vld [vmem:[#allocation8 + $0x38] sm:$0xff]
          %v375 = vld [vmem:[#allocation8 + $0x40] sm:$0xff]
          %v376 = vld [vmem:[#allocation8 + $0x48] sm:$0xff]
          %v377 = vld [vmem:[#allocation8 + $0x50] sm:$0xff]
          %v378 = vld [vmem:[#allocation8 + $0x58] sm:$0xff]
          %v379 = vld [vmem:[#allocation8 + $0x60] sm:$0xff]
          %v380 = vld [vmem:[#allocation8 + $0x68] sm:$0xff]
          %v381 = vld [vmem:[#allocation8 + $0x70] sm:$0xff]
          %v382 = vld [vmem:[#allocation8 + $0x78] sm:$0xff]
          %v383 = vld [vmem:[#allocation8 + $0x80] sm:$0xff]
          %v384 = vld [vmem:[#allocation8 + $0x88] sm:$0xff]
          %v385 = vld [vmem:[#allocation8 + $0x90] sm:$0xff]
          %v386 = vld [vmem:[#allocation8 + $0x98] sm:$0xff]
          %v387 = vld [vmem:[#allocation8 + $0xa0] sm:$0xff]
          %v388 = vld [vmem:[#allocation8 + $0xa8] sm:$0xff]
          %v389 = vld [vmem:[#allocation8 + $0xb0] sm:$0xff]
          %v390 = vld [vmem:[#allocation8 + $0xb8] sm:$0xff]
          %v391 = vld [vmem:[#allocation8 + $0xc0] sm:$0xff]
          %v392 = vld [vmem:[#allocation8 + $0xc8] sm:$0xff]
          %v393 = vld [vmem:[#allocation8 + $0xd0] sm:$0xff]
          %v394 = vld [vmem:[#allocation8 + $0xd8] sm:$0xff]
          %v395 = vld [vmem:[#allocation8 + $0xe0] sm:$0xff]
          %v396 = vld [vmem:[#allocation8 + $0xe8] sm:$0xff]
          %v397 = vld [vmem:[#allocation8 + $0xf0] sm:$0xff]
          %v398 = vld [vmem:[#allocation8 + $0xf8] sm:$0xff]
          %v399 = vld [vmem:[#allocation8 + $0x100] sm:$0xff]
          %v400 = vld [vmem:[#allocation8 + $0x108] sm:$0xff]
          %v401 = vld [vmem:[#allocation8 + $0x110] sm:$0xff]
          %v402 = vld [vmem:[#allocation8 + $0x118] sm:$0xff]
          %v403 = vld [vmem:[#allocation8 + $0x120] sm:$0xff]
          %v404 = vld [vmem:[#allocation8 + $0x128] sm:$0xff]
          %v405 = vld [vmem:[#allocation8 + $0x130] sm:$0xff]
          %v406 = vld [vmem:[#allocation8 + $0x138] sm:$0xff]
          %v407 = vld [vmem:[#allocation8 + $0x140] sm:$0xff]
          %v408 = vld [vmem:[#allocation8 + $0x148] sm:$0xff]
          %v409 = vld [vmem:[#allocation8 + $0x150] sm:$0xff]
          %v410 = vld [vmem:[#allocation8 + $0x158] sm:$0xff]
          %v411 = vld [vmem:[#allocation8 + $0x160] sm:$0xff]
          %v412 = vld [vmem:[#allocation8 + $0x168] sm:$0xff]
          %v413 = vld [vmem:[#allocation8 + $0x170] sm:$0xff]
          %v414 = vld [vmem:[#allocation8 + $0x178] sm:$0xff]
          %v415 = vld [vmem:[#allocation8 + $0x180] sm:$0xff]
          %v416 = vld [vmem:[#allocation8 + $0x188] sm:$0xff]
          %v417 = vld [vmem:[#allocation8 + $0x190] sm:$0xff]
          %v418 = vld [vmem:[#allocation8 + $0x198] sm:$0xff]
          %v419 = vld [vmem:[#allocation8 + $0x1a0] sm:$0xff]
          %v420 = vld [vmem:[#allocation8 + $0x1a8] sm:$0xff]
          %v421 = vld [vmem:[#allocation8 + $0x1b0] sm:$0xff]
          %v422 = vld [vmem:[#allocation8 + $0x1b8] sm:$0xff]
          %v423 = vld [vmem:[#allocation8 + $0x1c0] sm:$0xff]
          %v424 = vld [vmem:[#allocation8 + $0x1c8] sm:$0xff]
          %v425 = vld [vmem:[#allocation8 + $0x1d0] sm:$0xff]
          %v426 = vld [vmem:[#allocation8 + $0x1d8] sm:$0xff]
          %v427 = vld [vmem:[#allocation8 + $0x1e0] sm:$0xff]
          %v428 = vld [vmem:[#allocation8 + $0x1e8] sm:$0xff]
          %v429 = vld [vmem:[#allocation8 + $0x1f0] sm:$0xff]
          %v430 = vld [vmem:[#allocation8 + $0x1f8] sm:$0xff]
          %v431 = vld [vmem:[#allocation8 + $0x200] sm:$0xff]
          %v432 = vld [vmem:[#allocation8 + $0x208] sm:$0xff]
          %v433 = vld [vmem:[#allocation8 + $0x210] sm:$0xff]
          %v434 = vld [vmem:[#allocation8 + $0x218] sm:$0xff]
          %v435 = vld [vmem:[#allocation8 + $0x220] sm:$0xff]
          %v436 = vld [vmem:[#allocation8 + $0x228] sm:$0xff]
          %v437 = vld [vmem:[#allocation8 + $0x230] sm:$0xff]
          %v438 = vld [vmem:[#allocation8 + $0x238] sm:$0xff]
          %v439 = vld [vmem:[#allocation8 + $0x240] sm:$0xff]
          %v440 = vld [vmem:[#allocation8 + $0x248] sm:$0xff]
          %v441 = vld [vmem:[#allocation8 + $0x250] sm:$0xff]
          %v442 = vld [vmem:[#allocation8 + $0x258] sm:$0xff]
          %v443 = vld [vmem:[#allocation8 + $0x260] sm:$0xff]
          %v444 = vld [vmem:[#allocation8 + $0x268] sm:$0xff]
          %v445 = vld [vmem:[#allocation8 + $0x270] sm:$0xff]
          %v446 = vld [vmem:[#allocation8 + $0x278] sm:$0xff]
          %v447 = vld [vmem:[#allocation8 + $0x280] sm:$0xff]
          %v448 = vld [vmem:[#allocation8 + $0x288] sm:$0xff]
          %v449 = vld [vmem:[#allocation8 + $0x290] sm:$0xff]
          %v450 = vld [vmem:[#allocation8 + $0x298] sm:$0xff]
          %v451 = vld [vmem:[#allocation8 + $0x2a0] sm:$0xff]
          %v452 = vld [vmem:[#allocation8 + $0x2a8] sm:$0xff]
          %v453 = vld [vmem:[#allocation8 + $0x2b0] sm:$0xff]
          %v454 = vld [vmem:[#allocation8 + $0x2b8] sm:$0xff]
          %v455 = vld [vmem:[#allocation8 + $0x2c0] sm:$0xff]
          %v456 = vld [vmem:[#allocation8 + $0x2c8] sm:$0xff]
          %v457 = vld [vmem:[#allocation8 + $0x2d0] sm:$0xff]
          %v458 = vld [vmem:[#allocation8 + $0x2d8] sm:$0xff]
          %v459 = vld [vmem:[#allocation8 + $0x2e0] sm:$0xff]
          %v460 = vld [vmem:[#allocation8 + $0x2e8] sm:$0xff]
          %v461 = vld [vmem:[#allocation8 + $0x2f0] sm:$0xff]
          %v462 = vld [vmem:[#allocation8 + $0x2f8] sm:$0xff]
          %v463 = vld [vmem:[#allocation8 + $0x300] sm:$0xff]
          %v464 = vld [vmem:[#allocation8 + $0x308] sm:$0xff]
          %v465 = vld [vmem:[#allocation8 + $0x310] sm:$0xff]
          %v466 = vld [vmem:[#allocation8 + $0x318] sm:$0xff]
          %v467 = vld [vmem:[#allocation8 + $0x320] sm:$0xff]
          %v468 = vld [vmem:[#allocation8 + $0x328] sm:$0xff]
          %v469 = vld [vmem:[#allocation8 + $0x330] sm:$0xff]
          %v470 = vld [vmem:[#allocation8 + $0x338] sm:$0xff]
          %v471 = vld [vmem:[#allocation8 + $0x340] sm:$0xff]
          %v472 = vld [vmem:[#allocation8 + $0x348] sm:$0xff]
          %v473 = vld [vmem:[#allocation8 + $0x350] sm:$0xff]
          %v474 = vld [vmem:[#allocation8 + $0x358] sm:$0xff]
          %v475 = vld [vmem:[#allocation8 + $0x360] sm:$0xff]
          %v476 = vld [vmem:[#allocation8 + $0x368] sm:$0xff]
          %v477 = vld [vmem:[#allocation8 + $0x370] sm:$0xff]
          %v478 = vld [vmem:[#allocation8 + $0x378] sm:$0xff]
          %v479 = vld [vmem:[#allocation8 + $0x380] sm:$0xff]
          %v480 = vld [vmem:[#allocation8 + $0x388] sm:$0xff]
          %v481 = vld [vmem:[#allocation8 + $0x390] sm:$0xff]
          %v482 = vld [vmem:[#allocation8 + $0x398] sm:$0xff]
          %v483 = vld [vmem:[#allocation8 + $0x3a0] sm:$0xff]
          %v484 = vld [vmem:[#allocation8 + $0x3a8] sm:$0xff]
          %v485 = vld [vmem:[#allocation8 + $0x3b0] sm:$0xff]
          %v486 = vld [vmem:[#allocation8 + $0x3b8] sm:$0xff]
          %v487 = vld [vmem:[#allocation8 + $0x3c0] sm:$0xff]
          %v488 = vld [vmem:[#allocation8 + $0x3c8] sm:$0xff]
          %v489 = vld [vmem:[#allocation8 + $0x3d0] sm:$0xff]
          %v490 = vld [vmem:[#allocation8 + $0x3d8] sm:$0xff]
          %v491 = vld [vmem:[#allocation8 + $0x3e0] sm:$0xff]
          %v492 = vld [vmem:[#allocation8 + $0x3e8] sm:$0xff]
          %v493 = vld [vmem:[#allocation8 + $0x3f0] sm:$0xff]
          %v494 = vld [vmem:[#allocation8 + $0x3f8] sm:$0xff]
          %v495 = vld [vmem:[#allocation8 + $0x400] sm:$0xff]
          %v496 = vld [vmem:[#allocation8 + $0x408] sm:$0xff]
          %v497 = vld [vmem:[#allocation8 + $0x410] sm:$0xff]
          %v498 = vld [vmem:[#allocation8 + $0x418] sm:$0xff]
          %v499 = vld [vmem:[#allocation8 + $0x420] sm:$0xff]
          %v500 = vld [vmem:[#allocation8 + $0x428] sm:$0xff]
          %v501 = vld [vmem:[#allocation8 + $0x430] sm:$0xff]
          %v502 = vld [vmem:[#allocation8 + $0x438] sm:$0xff]
          %v503 = vld [vmem:[#allocation8 + $0x440] sm:$0xff]
          %v504 = vld [vmem:[#allocation8 + $0x448] sm:$0xff]
          %v505 = vld [vmem:[#allocation8 + $0x450] sm:$0xff]
          %v506 = vld [vmem:[#allocation8 + $0x458] sm:$0xff]
          %v507 = vld [vmem:[#allocation8 + $0x460] sm:$0xff]
          %v508 = vld [vmem:[#allocation8 + $0x468] sm:$0xff]
          %v509 = vld [vmem:[#allocation8 + $0x470] sm:$0xff]
          %v510 = vld [vmem:[#allocation8 + $0x478] sm:$0xff]
          %v511 = vld [vmem:[#allocation8 + $0x480] sm:$0xff]
          %v512 = vld [vmem:[#allocation8 + $0x488] sm:$0xff]
          %v513 = vld [vmem:[#allocation8 + $0x490] sm:$0xff]
          %v514 = vld [vmem:[#allocation8 + $0x498] sm:$0xff]
          %v515 = vld [vmem:[#allocation8 + $0x4a0] sm:$0xff]
          %v516 = vld [vmem:[#allocation8 + $0x4a8] sm:$0xff]
          %v517 = vld [vmem:[#allocation8 + $0x4b0] sm:$0xff]
          %v518 = vld [vmem:[#allocation8 + $0x4b8] sm:$0xff]
          %v519 = vld [vmem:[#allocation8 + $0x4c0] sm:$0xff]
          %v520 = vld [vmem:[#allocation8 + $0x4c8] sm:$0xff]
          %v521 = vld [vmem:[#allocation8 + $0x4d0] sm:$0xff]
          %v522 = vld [vmem:[#allocation8 + $0x4d8] sm:$0xff]
          %v523 = vld [vmem:[#allocation8 + $0x4e0] sm:$0xff]
          %v524 = vld [vmem:[#allocation8 + $0x4e8] sm:$0xff]
          %v525 = vld [vmem:[#allocation8 + $0x4f0] sm:$0xff]
          %v526 = vld [vmem:[#allocation8 + $0x4f8] sm:$0xff]
          %v527 = vld [vmem:[#allocation8 + $0x500] sm:$0xff]
          %v528 = vld [vmem:[#allocation8 + $0x508] sm:$0xff]
          %v529 = vld [vmem:[#allocation8 + $0x510] sm:$0xff]
          %v530 = vld [vmem:[#allocation8 + $0x518] sm:$0xff]
          %v531 = vld [vmem:[#allocation8 + $0x520] sm:$0xff]
          %v532 = vld [vmem:[#allocation8 + $0x528] sm:$0xff]
          %v533 = vld [vmem:[#allocation8 + $0x530] sm:$0xff]
          %v534 = vld [vmem:[#allocation8 + $0x538] sm:$0xff]
          %v535 = vld [vmem:[#allocation8 + $0x540] sm:$0xff]
          %v536 = vld [vmem:[#allocation8 + $0x548] sm:$0xff]
          %v537 = vld [vmem:[#allocation8 + $0x550] sm:$0xff]
          %v538 = vld [vmem:[#allocation8 + $0x558] sm:$0xff]
          %v539 = vld [vmem:[#allocation8 + $0x560] sm:$0xff]
          %v540 = vld [vmem:[#allocation8 + $0x568] sm:$0xff]
          %v541 = vld [vmem:[#allocation8 + $0x570] sm:$0xff]
          %v542 = vld [vmem:[#allocation8 + $0x578] sm:$0xff]
          %v543 = vld [vmem:[#allocation8 + $0x580] sm:$0xff]
          %v544 = vld [vmem:[#allocation8 + $0x588] sm:$0xff]
          %v545 = vld [vmem:[#allocation8 + $0x590] sm:$0xff]
          %v546 = vld [vmem:[#allocation8 + $0x598] sm:$0xff]
          %v547 = vld [vmem:[#allocation8 + $0x5a0] sm:$0xff]
          %v548 = vld [vmem:[#allocation8 + $0x5a8] sm:$0xff]
          %v549 = vld [vmem:[#allocation8 + $0x5b0] sm:$0xff]
          %v550 = vld [vmem:[#allocation8 + $0x5b8] sm:$0xff]
          %v551 = vld [vmem:[#allocation8 + $0x5c0] sm:$0xff]
          %v552 = vld [vmem:[#allocation8 + $0x5c8] sm:$0xff]
          %v553 = vld [vmem:[#allocation8 + $0x5d0] sm:$0xff]
          %v554 = vld [vmem:[#allocation8 + $0x5d8] sm:$0xff]
          %v555 = vld [vmem:[#allocation8 + $0x5e0] sm:$0xff]
          %v556 = vld [vmem:[#allocation8 + $0x5e8] sm:$0xff]
          %v557 = vld [vmem:[#allocation8 + $0x5f0] sm:$0xff]
          %v558 = vld [vmem:[#allocation8 + $0x5f8] sm:$0xff]
          %v559 = vld [vmem:[#allocation8 + $0x600] sm:$0xff]
          %v560 = vld [vmem:[#allocation8 + $0x608] sm:$0xff]
          %v561 = vld [vmem:[#allocation8 + $0x610] sm:$0xff]
          %v562 = vld [vmem:[#allocation8 + $0x618] sm:$0xff]
          %v563 = vld [vmem:[#allocation8 + $0x620] sm:$0xff]
          %v564 = vld [vmem:[#allocation8 + $0x628] sm:$0xff]
          %v565 = vld [vmem:[#allocation8 + $0x630] sm:$0xff]
          %v566 = vld [vmem:[#allocation8 + $0x638] sm:$0xff]
          %v567 = vld [vmem:[#allocation8 + $0x640] sm:$0xff]
          %v568 = vld [vmem:[#allocation8 + $0x648] sm:$0xff]
          %v569 = vld [vmem:[#allocation8 + $0x650] sm:$0xff]
          %v570 = vld [vmem:[#allocation8 + $0x658] sm:$0xff]
          %v571 = vld [vmem:[#allocation8 + $0x660] sm:$0xff]
          %v572 = vld [vmem:[#allocation8 + $0x668] sm:$0xff]
          %v573 = vld [vmem:[#allocation8 + $0x670] sm:$0xff]
          %v574 = vld [vmem:[#allocation8 + $0x678] sm:$0xff]
          %v575 = vld [vmem:[#allocation8 + $0x680] sm:$0xff]
          %v576 = vld [vmem:[#allocation8 + $0x688] sm:$0xff]
          %v577 = vld [vmem:[#allocation8 + $0x690] sm:$0xff]
          %v578 = vld [vmem:[#allocation8 + $0x698] sm:$0xff]
          %v579 = vld [vmem:[#allocation8 + $0x6a0] sm:$0xff]
          %v580 = vld [vmem:[#allocation8 + $0x6a8] sm:$0xff]
          %v581 = vld [vmem:[#allocation8 + $0x6b0] sm:$0xff]
          %v582 = vld [vmem:[#allocation8 + $0x6b8] sm:$0xff]
          %v583 = vld [vmem:[#allocation8 + $0x6c0] sm:$0xff]
          %v584 = vld [vmem:[#allocation8 + $0x6c8] sm:$0xff]
          %v585 = vld [vmem:[#allocation8 + $0x6d0] sm:$0xff]
          %v586 = vld [vmem:[#allocation8 + $0x6d8] sm:$0xff]
          %v587 = vld [vmem:[#allocation8 + $0x6e0] sm:$0xff]
          %v588 = vld [vmem:[#allocation8 + $0x6e8] sm:$0xff]
          %v589 = vld [vmem:[#allocation8 + $0x6f0] sm:$0xff]
          %v590 = vld [vmem:[#allocation8 + $0x6f8] sm:$0xff]
          %v591 = vld [vmem:[#allocation8 + $0x700] sm:$0xff]
          %v592 = vld [vmem:[#allocation8 + $0x708] sm:$0xff]
          %v593 = vld [vmem:[#allocation8 + $0x710] sm:$0xff]
          %v594 = vld [vmem:[#allocation8 + $0x718] sm:$0xff]
          %v595 = vld [vmem:[#allocation8 + $0x720] sm:$0xff]
          %v596 = vld [vmem:[#allocation8 + $0x728] sm:$0xff]
          %v597 = vld [vmem:[#allocation8 + $0x730] sm:$0xff]
          %v598 = vld [vmem:[#allocation8 + $0x738] sm:$0xff]
          %v599 = vld [vmem:[#allocation8 + $0x740] sm:$0xff]
          %v600 = vld [vmem:[#allocation8 + $0x748] sm:$0xff]
          %v601 = vld [vmem:[#allocation8 + $0x750] sm:$0xff]
          %v602 = vld [vmem:[#allocation8 + $0x758] sm:$0xff]
          %v603 = vld [vmem:[#allocation8 + $0x760] sm:$0xff]
          %v604 = vld [vmem:[#allocation8 + $0x768] sm:$0xff]
          %v605 = vld [vmem:[#allocation8 + $0x770] sm:$0xff]
          %v606 = vld [vmem:[#allocation8 + $0x778] sm:$0xff]
          %v607 = vld [vmem:[#allocation8 + $0x780] sm:$0xff]
          %v608 = vld [vmem:[#allocation8 + $0x788] sm:$0xff]
          %v609 = vld [vmem:[#allocation8 + $0x790] sm:$0xff]
          %v610 = vld [vmem:[#allocation8 + $0x798] sm:$0xff]
          %v611 = vld [vmem:[#allocation8 + $0x7a0] sm:$0xff]
          %v612 = vld [vmem:[#allocation8 + $0x7a8] sm:$0xff]
          %v613 = vld [vmem:[#allocation8 + $0x7b0] sm:$0xff]
          %v614 = vld [vmem:[#allocation8 + $0x7b8] sm:$0xff]
          %v615 = vld [vmem:[#allocation8 + $0x7c0] sm:$0xff]
          %v616 = vld [vmem:[#allocation8 + $0x7c8] sm:$0xff]
          %v617 = vld [vmem:[#allocation8 + $0x7d0] sm:$0xff]
          %v618 = vld [vmem:[#allocation8 + $0x7d8] sm:$0xff]
          %v619 = vld [vmem:[#allocation8 + $0x7e0] sm:$0xff]
          %v620 = vld [vmem:[#allocation8 + $0x7e8] sm:$0xff]
          %v621 = vld [vmem:[#allocation8 + $0x7f0] sm:$0xff]
          %v622 = vld [vmem:[#allocation8 + $0x7f8] sm:$0xff]
          %v639 = vunpack.c.l.b16 %v351
          %v640 = vunpack.c.h.b16 %v351
          %v641 = vunpack.c.l.b16 %v352
          %v642 = vunpack.c.h.b16 %v352
          %v643 = vunpack.c.l.b16 %v353
          %v644 = vunpack.c.h.b16 %v353
          %v645 = vunpack.c.l.b16 %v354
          %v646 = vunpack.c.h.b16 %v354
          %v647 = vunpack.c.l.b16 %v355
          %v648 = vunpack.c.h.b16 %v355
          %v649 = vunpack.c.l.b16 %v356
          %v650 = vunpack.c.h.b16 %v356
          %v651 = vunpack.c.l.b16 %v357
          %v652 = vunpack.c.h.b16 %v357
          %v653 = vunpack.c.l.b16 %v358
          %v654 = vunpack.c.h.b16 %v358
          %v655 = vunpack.c.l.b16 %v359
          %v656 = vunpack.c.h.b16 %v359
          %v657 = vunpack.c.l.b16 %v360
          %v658 = vunpack.c.h.b16 %v360
          %v659 = vunpack.c.l.b16 %v361
          %v660 = vunpack.c.h.b16 %v361
          %v661 = vunpack.c.l.b16 %v362
          %v662 = vunpack.c.h.b16 %v362
          %v663 = vunpack.c.l.b16 %v363
          %v664 = vunpack.c.h.b16 %v363
          %v665 = vunpack.c.l.b16 %v364
          %v666 = vunpack.c.h.b16 %v364
          %v667 = vunpack.c.l.b16 %v365
          %v668 = vunpack.c.h.b16 %v365
          %v669 = vunpack.c.l.b16 %v366
          %v670 = vunpack.c.h.b16 %v366
          %v671 = vpack.c.b16 %v655, %v639
          %v672 = vpack.c.b16 %v656, %v640
          %v673 = vpack.c.b16 %v657, %v641
          %v674 = vpack.c.b16 %v658, %v642
          %v675 = vpack.c.b16 %v659, %v643
          %v676 = vpack.c.b16 %v660, %v644
          %v677 = vpack.c.b16 %v661, %v645
          %v678 = vpack.c.b16 %v662, %v646
          %v679 = vpack.c.b16 %v663, %v647
          %v680 = vpack.c.b16 %v664, %v648
          %v681 = vpack.c.b16 %v665, %v649
          %v682 = vpack.c.b16 %v666, %v650
          %v683 = vpack.c.b16 %v667, %v651
          %v684 = vpack.c.b16 %v668, %v652
          %v685 = vpack.c.b16 %v669, %v653
          %v686 = vpack.c.b16 %v670, %v654
          %v959 = vunpack.c.l.b16 %v367
          %v960 = vunpack.c.h.b16 %v367
          %v961 = vunpack.c.l.b16 %v368
          %v962 = vunpack.c.h.b16 %v368
          %v963 = vunpack.c.l.b16 %v369
          %v964 = vunpack.c.h.b16 %v369
          %v965 = vunpack.c.l.b16 %v370
          %v966 = vunpack.c.h.b16 %v370
          %v967 = vunpack.c.l.b16 %v371
          %v968 = vunpack.c.h.b16 %v371
          %v969 = vunpack.c.l.b16 %v372
          %v970 = vunpack.c.h.b16 %v372
          %v971 = vunpack.c.l.b16 %v373
          %v972 = vunpack.c.h.b16 %v373
          %v973 = vunpack.c.l.b16 %v374
          %v974 = vunpack.c.h.b16 %v374
          %v975 = vunpack.c.l.b16 %v375
          %v976 = vunpack.c.h.b16 %v375
          %v977 = vunpack.c.l.b16 %v376
          %v978 = vunpack.c.h.b16 %v376
          %v979 = vunpack.c.l.b16 %v377
          %v980 = vunpack.c.h.b16 %v377
          %v981 = vunpack.c.l.b16 %v378
          %v982 = vunpack.c.h.b16 %v378
          %v983 = vunpack.c.l.b16 %v379
          %v984 = vunpack.c.h.b16 %v379
          %v985 = vunpack.c.l.b16 %v380
          %v986 = vunpack.c.h.b16 %v380
          %v987 = vunpack.c.l.b16 %v381
          %v988 = vunpack.c.h.b16 %v381
          %v989 = vunpack.c.l.b16 %v382
          %v990 = vunpack.c.h.b16 %v382
          %v991 = vunpack.c.l.b16 %v383
          %v992 = vunpack.c.h.b16 %v383
          %v993 = vunpack.c.l.b16 %v384
          %v994 = vunpack.c.h.b16 %v384
          %v995 = vunpack.c.l.b16 %v385
          %v996 = vunpack.c.h.b16 %v385
          %v997 = vunpack.c.l.b16 %v386
          %v998 = vunpack.c.h.b16 %v386
          %v999 = vunpack.c.l.b16 %v387
          %v1000 = vunpack.c.h.b16 %v387
          %v1001 = vunpack.c.l.b16 %v388
          %v1002 = vunpack.c.h.b16 %v388
          %v1003 = vunpack.c.l.b16 %v389
          %v1004 = vunpack.c.h.b16 %v389
          %v1005 = vunpack.c.l.b16 %v390
          %v1006 = vunpack.c.h.b16 %v390
          %v1007 = vunpack.c.l.b16 %v391
          %v1008 = vunpack.c.h.b16 %v391
          %v1009 = vunpack.c.l.b16 %v392
          %v1010 = vunpack.c.h.b16 %v392
          %v1011 = vunpack.c.l.b16 %v393
          %v1012 = vunpack.c.h.b16 %v393
          %v1013 = vunpack.c.l.b16 %v394
          %v1014 = vunpack.c.h.b16 %v394
          %v1015 = vunpack.c.l.b16 %v395
          %v1016 = vunpack.c.h.b16 %v395
          %v1017 = vunpack.c.l.b16 %v396
          %v1018 = vunpack.c.h.b16 %v396
          %v1019 = vunpack.c.l.b16 %v397
          %v1020 = vunpack.c.h.b16 %v397
          %v1021 = vunpack.c.l.b16 %v398
          %v1022 = vunpack.c.h.b16 %v398
          %v1023 = vunpack.c.l.b16 %v399
          %v1024 = vunpack.c.h.b16 %v399
          %v1025 = vunpack.c.l.b16 %v400
          %v1026 = vunpack.c.h.b16 %v400
          %v1027 = vunpack.c.l.b16 %v401
          %v1028 = vunpack.c.h.b16 %v401
          %v1029 = vunpack.c.l.b16 %v402
          %v1030 = vunpack.c.h.b16 %v402
          %v1031 = vunpack.c.l.b16 %v403
          %v1032 = vunpack.c.h.b16 %v403
          %v1033 = vunpack.c.l.b16 %v404
          %v1034 = vunpack.c.h.b16 %v404
          %v1035 = vunpack.c.l.b16 %v405
          %v1036 = vunpack.c.h.b16 %v405
          %v1037 = vunpack.c.l.b16 %v406
          %v1038 = vunpack.c.h.b16 %v406
          %v1039 = vunpack.c.l.b16 %v407
          %v1040 = vunpack.c.h.b16 %v407
          %v1041 = vunpack.c.l.b16 %v408
          %v1042 = vunpack.c.h.b16 %v408
          %v1043 = vunpack.c.l.b16 %v409
          %v1044 = vunpack.c.h.b16 %v409
          %v1045 = vunpack.c.l.b16 %v410
          %v1046 = vunpack.c.h.b16 %v410
          %v1047 = vunpack.c.l.b16 %v411
          %v1048 = vunpack.c.h.b16 %v411
          %v1049 = vunpack.c.l.b16 %v412
          %v1050 = vunpack.c.h.b16 %v412
          %v1051 = vunpack.c.l.b16 %v413
          %v1052 = vunpack.c.h.b16 %v413
          %v1053 = vunpack.c.l.b16 %v414
          %v1054 = vunpack.c.h.b16 %v414
          %v1055 = vunpack.c.l.b16 %v415
          %v1056 = vunpack.c.h.b16 %v415
          %v1057 = vunpack.c.l.b16 %v416
          %v1058 = vunpack.c.h.b16 %v416
          %v1059 = vunpack.c.l.b16 %v417
          %v1060 = vunpack.c.h.b16 %v417
          %v1061 = vunpack.c.l.b16 %v418
          %v1062 = vunpack.c.h.b16 %v418
          %v1063 = vunpack.c.l.b16 %v419
          %v1064 = vunpack.c.h.b16 %v419
          %v1065 = vunpack.c.l.b16 %v420
          %v1066 = vunpack.c.h.b16 %v420
          %v1067 = vunpack.c.l.b16 %v421
          %v1068 = vunpack.c.h.b16 %v421
          %v1069 = vunpack.c.l.b16 %v422
          %v1070 = vunpack.c.h.b16 %v422
          %v1071 = vunpack.c.l.b16 %v423
          %v1072 = vunpack.c.h.b16 %v423
          %v1073 = vunpack.c.l.b16 %v424
          %v1074 = vunpack.c.h.b16 %v424
          %v1075 = vunpack.c.l.b16 %v425
          %v1076 = vunpack.c.h.b16 %v425
          %v1077 = vunpack.c.l.b16 %v426
          %v1078 = vunpack.c.h.b16 %v426
          %v1079 = vunpack.c.l.b16 %v427
          %v1080 = vunpack.c.h.b16 %v427
          %v1081 = vunpack.c.l.b16 %v428
          %v1082 = vunpack.c.h.b16 %v428
          %v1083 = vunpack.c.l.b16 %v429
          %v1084 = vunpack.c.h.b16 %v429
          %v1085 = vunpack.c.l.b16 %v430
          %v1086 = vunpack.c.h.b16 %v430
          %v1087 = vunpack.c.l.b16 %v431
          %v1088 = vunpack.c.h.b16 %v431
          %v1089 = vunpack.c.l.b16 %v432
          %v1090 = vunpack.c.h.b16 %v432
          %v1091 = vunpack.c.l.b16 %v433
          %v1092 = vunpack.c.h.b16 %v433
          %v1093 = vunpack.c.l.b16 %v434
          %v1094 = vunpack.c.h.b16 %v434
          %v1095 = vunpack.c.l.b16 %v435
          %v1096 = vunpack.c.h.b16 %v435
          %v1097 = vunpack.c.l.b16 %v436
          %v1098 = vunpack.c.h.b16 %v436
          %v1099 = vunpack.c.l.b16 %v437
          %v1100 = vunpack.c.h.b16 %v437
          %v1101 = vunpack.c.l.b16 %v438
          %v1102 = vunpack.c.h.b16 %v438
          %v1103 = vunpack.c.l.b16 %v439
          %v1104 = vunpack.c.h.b16 %v439
          %v1105 = vunpack.c.l.b16 %v440
          %v1106 = vunpack.c.h.b16 %v440
          %v1107 = vunpack.c.l.b16 %v441
          %v1108 = vunpack.c.h.b16 %v441
          %v1109 = vunpack.c.l.b16 %v442
          %v1110 = vunpack.c.h.b16 %v442
          %v1111 = vunpack.c.l.b16 %v443
          %v1112 = vunpack.c.h.b16 %v443
          %v1113 = vunpack.c.l.b16 %v444
          %v1114 = vunpack.c.h.b16 %v444
          %v1115 = vunpack.c.l.b16 %v445
          %v1116 = vunpack.c.h.b16 %v445
          %v1117 = vunpack.c.l.b16 %v446
          %v1118 = vunpack.c.h.b16 %v446
          %v1119 = vunpack.c.l.b16 %v447
          %v1120 = vunpack.c.h.b16 %v447
          %v1121 = vunpack.c.l.b16 %v448
          %v1122 = vunpack.c.h.b16 %v448
          %v1123 = vunpack.c.l.b16 %v449
          %v1124 = vunpack.c.h.b16 %v449
          %v1125 = vunpack.c.l.b16 %v450
          %v1126 = vunpack.c.h.b16 %v450
          %v1127 = vunpack.c.l.b16 %v451
          %v1128 = vunpack.c.h.b16 %v451
          %v1129 = vunpack.c.l.b16 %v452
          %v1130 = vunpack.c.h.b16 %v452
          %v1131 = vunpack.c.l.b16 %v453
          %v1132 = vunpack.c.h.b16 %v453
          %v1133 = vunpack.c.l.b16 %v454
          %v1134 = vunpack.c.h.b16 %v454
          %v1135 = vunpack.c.l.b16 %v455
          %v1136 = vunpack.c.h.b16 %v455
          %v1137 = vunpack.c.l.b16 %v456
          %v1138 = vunpack.c.h.b16 %v456
          %v1139 = vunpack.c.l.b16 %v457
          %v1140 = vunpack.c.h.b16 %v457
          %v1141 = vunpack.c.l.b16 %v458
          %v1142 = vunpack.c.h.b16 %v458
          %v1143 = vunpack.c.l.b16 %v459
          %v1144 = vunpack.c.h.b16 %v459
          %v1145 = vunpack.c.l.b16 %v460
          %v1146 = vunpack.c.h.b16 %v460
          %v1147 = vunpack.c.l.b16 %v461
          %v1148 = vunpack.c.h.b16 %v461
          %v1149 = vunpack.c.l.b16 %v462
          %v1150 = vunpack.c.h.b16 %v462
          %v1151 = vunpack.c.l.b16 %v463
          %v1152 = vunpack.c.h.b16 %v463
          %v1153 = vunpack.c.l.b16 %v464
          %v1154 = vunpack.c.h.b16 %v464
          %v1155 = vunpack.c.l.b16 %v465
          %v1156 = vunpack.c.h.b16 %v465
          %v1157 = vunpack.c.l.b16 %v466
          %v1158 = vunpack.c.h.b16 %v466
          %v1159 = vunpack.c.l.b16 %v467
          %v1160 = vunpack.c.h.b16 %v467
          %v1161 = vunpack.c.l.b16 %v468
          %v1162 = vunpack.c.h.b16 %v468
          %v1163 = vunpack.c.l.b16 %v469
          %v1164 = vunpack.c.h.b16 %v469
          %v1165 = vunpack.c.l.b16 %v470
          %v1166 = vunpack.c.h.b16 %v470
          %v1167 = vunpack.c.l.b16 %v471
          %v1168 = vunpack.c.h.b16 %v471
          %v1169 = vunpack.c.l.b16 %v472
          %v1170 = vunpack.c.h.b16 %v472
          %v1171 = vunpack.c.l.b16 %v473
          %v1172 = vunpack.c.h.b16 %v473
          %v1173 = vunpack.c.l.b16 %v474
          %v1174 = vunpack.c.h.b16 %v474
          %v1175 = vunpack.c.l.b16 %v475
          %v1176 = vunpack.c.h.b16 %v475
          %v1177 = vunpack.c.l.b16 %v476
          %v1178 = vunpack.c.h.b16 %v476
          %v1179 = vunpack.c.l.b16 %v477
          %v1180 = vunpack.c.h.b16 %v477
          %v1181 = vunpack.c.l.b16 %v478
          %v1182 = vunpack.c.h.b16 %v478
          %v1183 = vunpack.c.l.b16 %v479
          %v1184 = vunpack.c.h.b16 %v479
          %v1185 = vunpack.c.l.b16 %v480
          %v1186 = vunpack.c.h.b16 %v480
          %v1187 = vunpack.c.l.b16 %v481
          %v1188 = vunpack.c.h.b16 %v481
          %v1189 = vunpack.c.l.b16 %v482
          %v1190 = vunpack.c.h.b16 %v482
          %v1191 = vunpack.c.l.b16 %v483
          %v1192 = vunpack.c.h.b16 %v483
          %v1193 = vunpack.c.l.b16 %v484
          %v1194 = vunpack.c.h.b16 %v484
          %v1195 = vunpack.c.l.b16 %v485
          %v1196 = vunpack.c.h.b16 %v485
          %v1197 = vunpack.c.l.b16 %v486
          %v1198 = vunpack.c.h.b16 %v486
          %v1199 = vunpack.c.l.b16 %v487
          %v1200 = vunpack.c.h.b16 %v487
          %v1201 = vunpack.c.l.b16 %v488
          %v1202 = vunpack.c.h.b16 %v488
          %v1203 = vunpack.c.l.b16 %v489
          %v1204 = vunpack.c.h.b16 %v489
          %v1205 = vunpack.c.l.b16 %v490
          %v1206 = vunpack.c.h.b16 %v490
          %v1207 = vunpack.c.l.b16 %v491
          %v1208 = vunpack.c.h.b16 %v491
          %v1209 = vunpack.c.l.b16 %v492
          %v1210 = vunpack.c.h.b16 %v492
          %v1211 = vunpack.c.l.b16 %v493
          %v1212 = vunpack.c.h.b16 %v493
          %v1213 = vunpack.c.l.b16 %v494
          %v1214 = vunpack.c.h.b16 %v494
          %v1215 = vunpack.c.l.b16 %v495
          %v1216 = vunpack.c.h.b16 %v495
          %v1217 = vunpack.c.l.b16 %v496
          %v1218 = vunpack.c.h.b16 %v496
          %v1219 = vunpack.c.l.b16 %v497
          %v1220 = vunpack.c.h.b16 %v497
          %v1221 = vunpack.c.l.b16 %v498
          %v1222 = vunpack.c.h.b16 %v498
          %v1223 = vunpack.c.l.b16 %v499
          %v1224 = vunpack.c.h.b16 %v499
          %v1225 = vunpack.c.l.b16 %v500
          %v1226 = vunpack.c.h.b16 %v500
          %v1227 = vunpack.c.l.b16 %v501
          %v1228 = vunpack.c.h.b16 %v501
          %v1229 = vunpack.c.l.b16 %v502
          %v1230 = vunpack.c.h.b16 %v502
          %v1231 = vunpack.c.l.b16 %v503
          %v1232 = vunpack.c.h.b16 %v503
          %v1233 = vunpack.c.l.b16 %v504
          %v1234 = vunpack.c.h.b16 %v504
          %v1235 = vunpack.c.l.b16 %v505
          %v1236 = vunpack.c.h.b16 %v505
          %v1237 = vunpack.c.l.b16 %v506
          %v1238 = vunpack.c.h.b16 %v506
          %v1239 = vunpack.c.l.b16 %v507
          %v1240 = vunpack.c.h.b16 %v507
          %v1241 = vunpack.c.l.b16 %v508
          %v1242 = vunpack.c.h.b16 %v508
          %v1243 = vunpack.c.l.b16 %v509
          %v1244 = vunpack.c.h.b16 %v509
          %v1245 = vunpack.c.l.b16 %v510
          %v1246 = vunpack.c.h.b16 %v510
          %v1247 = vunpack.c.l.b16 %v511
          %v1248 = vunpack.c.h.b16 %v511
          %v1249 = vunpack.c.l.b16 %v512
          %v1250 = vunpack.c.h.b16 %v512
          %v1251 = vunpack.c.l.b16 %v513
          %v1252 = vunpack.c.h.b16 %v513
          %v1253 = vunpack.c.l.b16 %v514
          %v1254 = vunpack.c.h.b16 %v514
          %v1255 = vunpack.c.l.b16 %v515
          %v1256 = vunpack.c.h.b16 %v515
          %v1257 = vunpack.c.l.b16 %v516
          %v1258 = vunpack.c.h.b16 %v516
          %v1259 = vunpack.c.l.b16 %v517
          %v1260 = vunpack.c.h.b16 %v517
          %v1261 = vunpack.c.l.b16 %v518
          %v1262 = vunpack.c.h.b16 %v518
          %v1263 = vunpack.c.l.b16 %v519
          %v1264 = vunpack.c.h.b16 %v519
          %v1265 = vunpack.c.l.b16 %v520
          %v1266 = vunpack.c.h.b16 %v520
          %v1267 = vunpack.c.l.b16 %v521
          %v1268 = vunpack.c.h.b16 %v521
          %v1269 = vunpack.c.l.b16 %v522
          %v1270 = vunpack.c.h.b16 %v522
          %v1271 = vunpack.c.l.b16 %v523
          %v1272 = vunpack.c.h.b16 %v523
          %v1273 = vunpack.c.l.b16 %v524
          %v1274 = vunpack.c.h.b16 %v524
          %v1275 = vunpack.c.l.b16 %v525
          %v1276 = vunpack.c.h.b16 %v525
          %v1277 = vunpack.c.l.b16 %v526
          %v1278 = vunpack.c.h.b16 %v526
          %v1279 = vunpack.c.l.b16 %v527
          %v1280 = vunpack.c.h.b16 %v527
          %v1281 = vunpack.c.l.b16 %v528
          %v1282 = vunpack.c.h.b16 %v528
          %v1283 = vunpack.c.l.b16 %v529
          %v1284 = vunpack.c.h.b16 %v529
          %v1285 = vunpack.c.l.b16 %v530
          %v1286 = vunpack.c.h.b16 %v530
          %v1287 = vunpack.c.l.b16 %v531
          %v1288 = vunpack.c.h.b16 %v531
          %v1289 = vunpack.c.l.b16 %v532
          %v1290 = vunpack.c.h.b16 %v532
          %v1291 = vunpack.c.l.b16 %v533
          %v1292 = vunpack.c.h.b16 %v533
          %v1293 = vunpack.c.l.b16 %v534
          %v1294 = vunpack.c.h.b16 %v534
          %v1295 = vunpack.c.l.b16 %v535
          %v1296 = vunpack.c.h.b16 %v535
          %v1297 = vunpack.c.l.b16 %v536
          %v1298 = vunpack.c.h.b16 %v536
          %v1299 = vunpack.c.l.b16 %v537
          %v1300 = vunpack.c.h.b16 %v537
          %v1301 = vunpack.c.l.b16 %v538
          %v1302 = vunpack.c.h.b16 %v538
          %v1303 = vunpack.c.l.b16 %v539
          %v1304 = vunpack.c.h.b16 %v539
          %v1305 = vunpack.c.l.b16 %v540
          %v1306 = vunpack.c.h.b16 %v540
          %v1307 = vunpack.c.l.b16 %v541
          %v1308 = vunpack.c.h.b16 %v541
          %v1309 = vunpack.c.l.b16 %v542
          %v1310 = vunpack.c.h.b16 %v542
          %v1311 = vunpack.c.l.b16 %v543
          %v1312 = vunpack.c.h.b16 %v543
          %v1313 = vunpack.c.l.b16 %v544
          %v1314 = vunpack.c.h.b16 %v544
          %v1315 = vunpack.c.l.b16 %v545
          %v1316 = vunpack.c.h.b16 %v545
          %v1317 = vunpack.c.l.b16 %v546
          %v1318 = vunpack.c.h.b16 %v546
          %v1319 = vunpack.c.l.b16 %v547
          %v1320 = vunpack.c.h.b16 %v547
          %v1321 = vunpack.c.l.b16 %v548
          %v1322 = vunpack.c.h.b16 %v548
          %v1323 = vunpack.c.l.b16 %v549
          %v1324 = vunpack.c.h.b16 %v549
          %v1325 = vunpack.c.l.b16 %v550
          %v1326 = vunpack.c.h.b16 %v550
          %v1327 = vunpack.c.l.b16 %v551
          %v1328 = vunpack.c.h.b16 %v551
          %v1329 = vunpack.c.l.b16 %v552
          %v1330 = vunpack.c.h.b16 %v552
          %v1331 = vunpack.c.l.b16 %v553
          %v1332 = vunpack.c.h.b16 %v553
          %v1333 = vunpack.c.l.b16 %v554
          %v1334 = vunpack.c.h.b16 %v554
          %v1335 = vunpack.c.l.b16 %v555
          %v1336 = vunpack.c.h.b16 %v555
          %v1337 = vunpack.c.l.b16 %v556
          %v1338 = vunpack.c.h.b16 %v556
          %v1339 = vunpack.c.l.b16 %v557
          %v1340 = vunpack.c.h.b16 %v557
          %v1341 = vunpack.c.l.b16 %v558
          %v1342 = vunpack.c.h.b16 %v558
          %v1343 = vunpack.c.l.b16 %v559
          %v1344 = vunpack.c.h.b16 %v559
          %v1345 = vunpack.c.l.b16 %v560
          %v1346 = vunpack.c.h.b16 %v560
          %v1347 = vunpack.c.l.b16 %v561
          %v1348 = vunpack.c.h.b16 %v561
          %v1349 = vunpack.c.l.b16 %v562
          %v1350 = vunpack.c.h.b16 %v562
          %v1351 = vunpack.c.l.b16 %v563
          %v1352 = vunpack.c.h.b16 %v563
          %v1353 = vunpack.c.l.b16 %v564
          %v1354 = vunpack.c.h.b16 %v564
          %v1355 = vunpack.c.l.b16 %v565
          %v1356 = vunpack.c.h.b16 %v565
          %v1357 = vunpack.c.l.b16 %v566
          %v1358 = vunpack.c.h.b16 %v566
          %v1359 = vunpack.c.l.b16 %v567
          %v1360 = vunpack.c.h.b16 %v567
          %v1361 = vunpack.c.l.b16 %v568
          %v1362 = vunpack.c.h.b16 %v568
          %v1363 = vunpack.c.l.b16 %v569
          %v1364 = vunpack.c.h.b16 %v569
          %v1365 = vunpack.c.l.b16 %v570
          %v1366 = vunpack.c.h.b16 %v570
          %v1367 = vunpack.c.l.b16 %v571
          %v1368 = vunpack.c.h.b16 %v571
          %v1369 = vunpack.c.l.b16 %v572
          %v1370 = vunpack.c.h.b16 %v572
          %v1371 = vunpack.c.l.b16 %v573
          %v1372 = vunpack.c.h.b16 %v573
          %v1373 = vunpack.c.l.b16 %v574
          %v1374 = vunpack.c.h.b16 %v574
          %v1375 = vunpack.c.l.b16 %v575
          %v1376 = vunpack.c.h.b16 %v575
          %v1377 = vunpack.c.l.b16 %v576
          %v1378 = vunpack.c.h.b16 %v576
          %v1379 = vunpack.c.l.b16 %v577
          %v1380 = vunpack.c.h.b16 %v577
          %v1381 = vunpack.c.l.b16 %v578
          %v1382 = vunpack.c.h.b16 %v578
          %v1383 = vunpack.c.l.b16 %v579
          %v1384 = vunpack.c.h.b16 %v579
          %v1385 = vunpack.c.l.b16 %v580
          %v1386 = vunpack.c.h.b16 %v580
          %v1387 = vunpack.c.l.b16 %v581
          %v1388 = vunpack.c.h.b16 %v581
          %v1389 = vunpack.c.l.b16 %v582
          %v1390 = vunpack.c.h.b16 %v582
          %v1391 = vunpack.c.l.b16 %v583
          %v1392 = vunpack.c.h.b16 %v583
          %v1393 = vunpack.c.l.b16 %v584
          %v1394 = vunpack.c.h.b16 %v584
          %v1395 = vunpack.c.l.b16 %v585
          %v1396 = vunpack.c.h.b16 %v585
          %v1397 = vunpack.c.l.b16 %v586
          %v1398 = vunpack.c.h.b16 %v586
          %v1399 = vunpack.c.l.b16 %v587
          %v1400 = vunpack.c.h.b16 %v587
          %v1401 = vunpack.c.l.b16 %v588
          %v1402 = vunpack.c.h.b16 %v588
          %v1403 = vunpack.c.l.b16 %v589
          %v1404 = vunpack.c.h.b16 %v589
          %v1405 = vunpack.c.l.b16 %v590
          %v1406 = vunpack.c.h.b16 %v590
          %v1407 = vunpack.c.l.b16 %v591
          %v1408 = vunpack.c.h.b16 %v591
          %v1409 = vunpack.c.l.b16 %v592
          %v1410 = vunpack.c.h.b16 %v592
          %v1411 = vunpack.c.l.b16 %v593
          %v1412 = vunpack.c.h.b16 %v593
          %v1413 = vunpack.c.l.b16 %v594
          %v1414 = vunpack.c.h.b16 %v594
          %v1415 = vunpack.c.l.b16 %v595
          %v1416 = vunpack.c.h.b16 %v595
          %v1417 = vunpack.c.l.b16 %v596
          %v1418 = vunpack.c.h.b16 %v596
          %v1419 = vunpack.c.l.b16 %v597
          %v1420 = vunpack.c.h.b16 %v597
          %v1421 = vunpack.c.l.b16 %v598
          %v1422 = vunpack.c.h.b16 %v598
          %v1423 = vunpack.c.l.b16 %v599
          %v1424 = vunpack.c.h.b16 %v599
          %v1425 = vunpack.c.l.b16 %v600
          %v1426 = vunpack.c.h.b16 %v600
          %v1427 = vunpack.c.l.b16 %v601
          %v1428 = vunpack.c.h.b16 %v601
          %v1429 = vunpack.c.l.b16 %v602
          %v1430 = vunpack.c.h.b16 %v602
          %v1431 = vunpack.c.l.b16 %v603
          %v1432 = vunpack.c.h.b16 %v603
          %v1433 = vunpack.c.l.b16 %v604
          %v1434 = vunpack.c.h.b16 %v604
          %v1435 = vunpack.c.l.b16 %v605
          %v1436 = vunpack.c.h.b16 %v605
          %v1437 = vunpack.c.l.b16 %v606
          %v1438 = vunpack.c.h.b16 %v606
          %v1439 = vunpack.c.l.b16 %v607
          %v1440 = vunpack.c.h.b16 %v607
          %v1441 = vunpack.c.l.b16 %v608
          %v1442 = vunpack.c.h.b16 %v608
          %v1443 = vunpack.c.l.b16 %v609
          %v1444 = vunpack.c.h.b16 %v609
          %v1445 = vunpack.c.l.b16 %v610
          %v1446 = vunpack.c.h.b16 %v610
          %v1447 = vunpack.c.l.b16 %v611
          %v1448 = vunpack.c.h.b16 %v611
          %v1449 = vunpack.c.l.b16 %v612
          %v1450 = vunpack.c.h.b16 %v612
          %v1451 = vunpack.c.l.b16 %v613
          %v1452 = vunpack.c.h.b16 %v613
          %v1453 = vunpack.c.l.b16 %v614
          %v1454 = vunpack.c.h.b16 %v614
          %v1455 = vunpack.c.l.b16 %v615
          %v1456 = vunpack.c.h.b16 %v615
          %v1457 = vunpack.c.l.b16 %v616
          %v1458 = vunpack.c.h.b16 %v616
          %v1459 = vunpack.c.l.b16 %v617
          %v1460 = vunpack.c.h.b16 %v617
          %v1461 = vunpack.c.l.b16 %v618
          %v1462 = vunpack.c.h.b16 %v618
          %v1463 = vunpack.c.l.b16 %v619
          %v1464 = vunpack.c.h.b16 %v619
          %v1465 = vunpack.c.l.b16 %v620
          %v1466 = vunpack.c.h.b16 %v620
          %v1467 = vunpack.c.l.b16 %v621
          %v1468 = vunpack.c.h.b16 %v621
          %v1469 = vunpack.c.l.b16 %v622
          %v1470 = vunpack.c.h.b16 %v622
          %v1471 = vpack.c.b16 %v961, %v959
          %v1472 = vpack.c.b16 %v962, %v960
          %v1473 = vpack.c.b16 %v965, %v963
          %v1474 = vpack.c.b16 %v966, %v964
          %v1475 = vpack.c.b16 %v969, %v967
          %v1476 = vpack.c.b16 %v970, %v968
          %v1477 = vpack.c.b16 %v973, %v971
          %v1478 = vpack.c.b16 %v974, %v972
          %v1479 = vpack.c.b16 %v977, %v975
          %v1480 = vpack.c.b16 %v978, %v976
          %v1481 = vpack.c.b16 %v981, %v979
          %v1482 = vpack.c.b16 %v982, %v980
          %v1483 = vpack.c.b16 %v985, %v983
          %v1484 = vpack.c.b16 %v986, %v984
          %v1485 = vpack.c.b16 %v989, %v987
          %v1486 = vpack.c.b16 %v990, %v988
          %v1487 = vpack.c.b16 %v993, %v991
          %v1488 = vpack.c.b16 %v994, %v992
          %v1489 = vpack.c.b16 %v997, %v995
          %v1490 = vpack.c.b16 %v998, %v996
          %v1491 = vpack.c.b16 %v1001, %v999
          %v1492 = vpack.c.b16 %v1002, %v1000
          %v1493 = vpack.c.b16 %v1005, %v1003
          %v1494 = vpack.c.b16 %v1006, %v1004
          %v1495 = vpack.c.b16 %v1009, %v1007
          %v1496 = vpack.c.b16 %v1010, %v1008
          %v1497 = vpack.c.b16 %v1013, %v1011
          %v1498 = vpack.c.b16 %v1014, %v1012
          %v1499 = vpack.c.b16 %v1017, %v1015
          %v1500 = vpack.c.b16 %v1018, %v1016
          %v1501 = vpack.c.b16 %v1021, %v1019
          %v1502 = vpack.c.b16 %v1022, %v1020
          %v1503 = vpack.c.b16 %v1025, %v1023
          %v1504 = vpack.c.b16 %v1026, %v1024
          %v1505 = vpack.c.b16 %v1029, %v1027
          %v1506 = vpack.c.b16 %v1030, %v1028
          %v1507 = vpack.c.b16 %v1033, %v1031
          %v1508 = vpack.c.b16 %v1034, %v1032
          %v1509 = vpack.c.b16 %v1037, %v1035
          %v1510 = vpack.c.b16 %v1038, %v1036
          %v1511 = vpack.c.b16 %v1041, %v1039
          %v1512 = vpack.c.b16 %v1042, %v1040
          %v1513 = vpack.c.b16 %v1045, %v1043
          %v1514 = vpack.c.b16 %v1046, %v1044
          %v1515 = vpack.c.b16 %v1049, %v1047
          %v1516 = vpack.c.b16 %v1050, %v1048
          %v1517 = vpack.c.b16 %v1053, %v1051
          %v1518 = vpack.c.b16 %v1054, %v1052
          %v1519 = vpack.c.b16 %v1057, %v1055
          %v1520 = vpack.c.b16 %v1058, %v1056
          %v1521 = vpack.c.b16 %v1061, %v1059
          %v1522 = vpack.c.b16 %v1062, %v1060
          %v1523 = vpack.c.b16 %v1065, %v1063
          %v1524 = vpack.c.b16 %v1066, %v1064
          %v1525 = vpack.c.b16 %v1069, %v1067
          %v1526 = vpack.c.b16 %v1070, %v1068
          %v1527 = vpack.c.b16 %v1073, %v1071
          %v1528 = vpack.c.b16 %v1074, %v1072
          %v1529 = vpack.c.b16 %v1077, %v1075
          %v1530 = vpack.c.b16 %v1078, %v1076
          %v1531 = vpack.c.b16 %v1081, %v1079
          %v1532 = vpack.c.b16 %v1082, %v1080
          %v1533 = vpack.c.b16 %v1085, %v1083
          %v1534 = vpack.c.b16 %v1086, %v1084
          %v1535 = vpack.c.b16 %v1089, %v1087
          %v1536 = vpack.c.b16 %v1090, %v1088
          %v1537 = vpack.c.b16 %v1093, %v1091
          %v1538 = vpack.c.b16 %v1094, %v1092
          %v1539 = vpack.c.b16 %v1097, %v1095
          %v1540 = vpack.c.b16 %v1098, %v1096
          %v1541 = vpack.c.b16 %v1101, %v1099
          %v1542 = vpack.c.b16 %v1102, %v1100
          %v1543 = vpack.c.b16 %v1105, %v1103
          %v1544 = vpack.c.b16 %v1106, %v1104
          %v1545 = vpack.c.b16 %v1109, %v1107
          %v1546 = vpack.c.b16 %v1110, %v1108
          %v1547 = vpack.c.b16 %v1113, %v1111
          %v1548 = vpack.c.b16 %v1114, %v1112
          %v1549 = vpack.c.b16 %v1117, %v1115
          %v1550 = vpack.c.b16 %v1118, %v1116
          %v1551 = vpack.c.b16 %v1121, %v1119
          %v1552 = vpack.c.b16 %v1122, %v1120
          %v1553 = vpack.c.b16 %v1125, %v1123
          %v1554 = vpack.c.b16 %v1126, %v1124
          %v1555 = vpack.c.b16 %v1129, %v1127
          %v1556 = vpack.c.b16 %v1130, %v1128
          %v1557 = vpack.c.b16 %v1133, %v1131
          %v1558 = vpack.c.b16 %v1134, %v1132
          %v1559 = vpack.c.b16 %v1137, %v1135
          %v1560 = vpack.c.b16 %v1138, %v1136
          %v1561 = vpack.c.b16 %v1141, %v1139
          %v1562 = vpack.c.b16 %v1142, %v1140
          %v1563 = vpack.c.b16 %v1145, %v1143
          %v1564 = vpack.c.b16 %v1146, %v1144
          %v1565 = vpack.c.b16 %v1149, %v1147
          %v1566 = vpack.c.b16 %v1150, %v1148
          %v1567 = vpack.c.b16 %v1153, %v1151
          %v1568 = vpack.c.b16 %v1154, %v1152
          %v1569 = vpack.c.b16 %v1157, %v1155
          %v1570 = vpack.c.b16 %v1158, %v1156
          %v1571 = vpack.c.b16 %v1161, %v1159
          %v1572 = vpack.c.b16 %v1162, %v1160
          %v1573 = vpack.c.b16 %v1165, %v1163
          %v1574 = vpack.c.b16 %v1166, %v1164
          %v1575 = vpack.c.b16 %v1169, %v1167
          %v1576 = vpack.c.b16 %v1170, %v1168
          %v1577 = vpack.c.b16 %v1173, %v1171
          %v1578 = vpack.c.b16 %v1174, %v1172
          %v1579 = vpack.c.b16 %v1177, %v1175
          %v1580 = vpack.c.b16 %v1178, %v1176
          %v1581 = vpack.c.b16 %v1181, %v1179
          %v1582 = vpack.c.b16 %v1182, %v1180
          %v1583 = vpack.c.b16 %v1185, %v1183
          %v1584 = vpack.c.b16 %v1186, %v1184
          %v1585 = vpack.c.b16 %v1189, %v1187
          %v1586 = vpack.c.b16 %v1190, %v1188
          %v1587 = vpack.c.b16 %v1193, %v1191
          %v1588 = vpack.c.b16 %v1194, %v1192
          %v1589 = vpack.c.b16 %v1197, %v1195
          %v1590 = vpack.c.b16 %v1198, %v1196
          %v1591 = vpack.c.b16 %v1201, %v1199
          %v1592 = vpack.c.b16 %v1202, %v1200
          %v1593 = vpack.c.b16 %v1205, %v1203
          %v1594 = vpack.c.b16 %v1206, %v1204
          %v1595 = vpack.c.b16 %v1209, %v1207
          %v1596 = vpack.c.b16 %v1210, %v1208
          %v1597 = vpack.c.b16 %v1213, %v1211
          %v1598 = vpack.c.b16 %v1214, %v1212
          %v1599 = vpack.c.b16 %v1217, %v1215
          %v1600 = vpack.c.b16 %v1218, %v1216
          %v1601 = vpack.c.b16 %v1221, %v1219
          %v1602 = vpack.c.b16 %v1222, %v1220
          %v1603 = vpack.c.b16 %v1225, %v1223
          %v1604 = vpack.c.b16 %v1226, %v1224
          %v1605 = vpack.c.b16 %v1229, %v1227
          %v1606 = vpack.c.b16 %v1230, %v1228
          %v1607 = vpack.c.b16 %v1233, %v1231
          %v1608 = vpack.c.b16 %v1234, %v1232
          %v1609 = vpack.c.b16 %v1237, %v1235
          %v1610 = vpack.c.b16 %v1238, %v1236
          %v1611 = vpack.c.b16 %v1241, %v1239
          %v1612 = vpack.c.b16 %v1242, %v1240
          %v1613 = vpack.c.b16 %v1245, %v1243
          %v1614 = vpack.c.b16 %v1246, %v1244
          %v1615 = vpack.c.b16 %v1249, %v1247
          %v1616 = vpack.c.b16 %v1250, %v1248
          %v1617 = vpack.c.b16 %v1253, %v1251
          %v1618 = vpack.c.b16 %v1254, %v1252
          %v1619 = vpack.c.b16 %v1257, %v1255
          %v1620 = vpack.c.b16 %v1258, %v1256
          %v1621 = vpack.c.b16 %v1261, %v1259
          %v1622 = vpack.c.b16 %v1262, %v1260
          %v1623 = vpack.c.b16 %v1265, %v1263
          %v1624 = vpack.c.b16 %v1266, %v1264
          %v1625 = vpack.c.b16 %v1269, %v1267
          %v1626 = vpack.c.b16 %v1270, %v1268
          %v1627 = vpack.c.b16 %v1273, %v1271
          %v1628 = vpack.c.b16 %v1274, %v1272
          %v1629 = vpack.c.b16 %v1277, %v1275
          %v1630 = vpack.c.b16 %v1278, %v1276
          %v1631 = vpack.c.b16 %v1281, %v1279
          %v1632 = vpack.c.b16 %v1282, %v1280
          %v1633 = vpack.c.b16 %v1285, %v1283
          %v1634 = vpack.c.b16 %v1286, %v1284
          %v1635 = vpack.c.b16 %v1289, %v1287
          %v1636 = vpack.c.b16 %v1290, %v1288
          %v1637 = vpack.c.b16 %v1293, %v1291
          %v1638 = vpack.c.b16 %v1294, %v1292
          %v1639 = vpack.c.b16 %v1297, %v1295
          %v1640 = vpack.c.b16 %v1298, %v1296
          %v1641 = vpack.c.b16 %v1301, %v1299
          %v1642 = vpack.c.b16 %v1302, %v1300
          %v1643 = vpack.c.b16 %v1305, %v1303
          %v1644 = vpack.c.b16 %v1306, %v1304
          %v1645 = vpack.c.b16 %v1309, %v1307
          %v1646 = vpack.c.b16 %v1310, %v1308
          %v1647 = vpack.c.b16 %v1313, %v1311
          %v1648 = vpack.c.b16 %v1314, %v1312
          %v1649 = vpack.c.b16 %v1317, %v1315
          %v1650 = vpack.c.b16 %v1318, %v1316
          %v1651 = vpack.c.b16 %v1321, %v1319
          %v1652 = vpack.c.b16 %v1322, %v1320
          %v1653 = vpack.c.b16 %v1325, %v1323
          %v1654 = vpack.c.b16 %v1326, %v1324
          %v1655 = vpack.c.b16 %v1329, %v1327
          %v1656 = vpack.c.b16 %v1330, %v1328
          %v1657 = vpack.c.b16 %v1333, %v1331
          %v1658 = vpack.c.b16 %v1334, %v1332
          %v1659 = vpack.c.b16 %v1337, %v1335
          %v1660 = vpack.c.b16 %v1338, %v1336
          %v1661 = vpack.c.b16 %v1341, %v1339
          %v1662 = vpack.c.b16 %v1342, %v1340
          %v1663 = vpack.c.b16 %v1345, %v1343
          %v1664 = vpack.c.b16 %v1346, %v1344
          %v1665 = vpack.c.b16 %v1349, %v1347
          %v1666 = vpack.c.b16 %v1350, %v1348
          %v1667 = vpack.c.b16 %v1353, %v1351
          %v1668 = vpack.c.b16 %v1354, %v1352
          %v1669 = vpack.c.b16 %v1357, %v1355
          %v1670 = vpack.c.b16 %v1358, %v1356
          %v1671 = vpack.c.b16 %v1361, %v1359
          %v1672 = vpack.c.b16 %v1362, %v1360
          %v1673 = vpack.c.b16 %v1365, %v1363
          %v1674 = vpack.c.b16 %v1366, %v1364
          %v1675 = vpack.c.b16 %v1369, %v1367
          %v1676 = vpack.c.b16 %v1370, %v1368
          %v1677 = vpack.c.b16 %v1373, %v1371
          %v1678 = vpack.c.b16 %v1374, %v1372
          %v1679 = vpack.c.b16 %v1377, %v1375
          %v1680 = vpack.c.b16 %v1378, %v1376
          %v1681 = vpack.c.b16 %v1381, %v1379
          %v1682 = vpack.c.b16 %v1382, %v1380
          %v1683 = vpack.c.b16 %v1385, %v1383
          %v1684 = vpack.c.b16 %v1386, %v1384
          %v1685 = vpack.c.b16 %v1389, %v1387
          %v1686 = vpack.c.b16 %v1390, %v1388
          %v1687 = vpack.c.b16 %v1393, %v1391
          %v1688 = vpack.c.b16 %v1394, %v1392
          %v1689 = vpack.c.b16 %v1397, %v1395
          %v1690 = vpack.c.b16 %v1398, %v1396
          %v1691 = vpack.c.b16 %v1401, %v1399
          %v1692 = vpack.c.b16 %v1402, %v1400
          %v1693 = vpack.c.b16 %v1405, %v1403
          %v1694 = vpack.c.b16 %v1406, %v1404
          %v1695 = vpack.c.b16 %v1409, %v1407
          %v1696 = vpack.c.b16 %v1410, %v1408
          %v1697 = vpack.c.b16 %v1413, %v1411
          %v1698 = vpack.c.b16 %v1414, %v1412
          %v1699 = vpack.c.b16 %v1417, %v1415
          %v1700 = vpack.c.b16 %v1418, %v1416
          %v1701 = vpack.c.b16 %v1421, %v1419
          %v1702 = vpack.c.b16 %v1422, %v1420
          %v1703 = vpack.c.b16 %v1425, %v1423
          %v1704 = vpack.c.b16 %v1426, %v1424
          %v1705 = vpack.c.b16 %v1429, %v1427
          %v1706 = vpack.c.b16 %v1430, %v1428
          %v1707 = vpack.c.b16 %v1433, %v1431
          %v1708 = vpack.c.b16 %v1434, %v1432
          %v1709 = vpack.c.b16 %v1437, %v1435
          %v1710 = vpack.c.b16 %v1438, %v1436
          %v1711 = vpack.c.b16 %v1441, %v1439
          %v1712 = vpack.c.b16 %v1442, %v1440
          %v1713 = vpack.c.b16 %v1445, %v1443
          %v1714 = vpack.c.b16 %v1446, %v1444
          %v1715 = vpack.c.b16 %v1449, %v1447
          %v1716 = vpack.c.b16 %v1450, %v1448
          %v1717 = vpack.c.b16 %v1453, %v1451
          %v1718 = vpack.c.b16 %v1454, %v1452
          %v1719 = vpack.c.b16 %v1457, %v1455
          %v1720 = vpack.c.b16 %v1458, %v1456
          %v1721 = vpack.c.b16 %v1461, %v1459
          %v1722 = vpack.c.b16 %v1462, %v1460
          %v1723 = vpack.c.b16 %v1465, %v1463
          %v1724 = vpack.c.b16 %v1466, %v1464
          %v1725 = vpack.c.b16 %v1469, %v1467
          %v1726 = vpack.c.b16 %v1470, %v1468
          %1983 = vmatprep.subr.bf16.mxu0 %v1486
          %1984 = vmatpush1.bf16.msra.mxu0 %v1485
          %1985 = vmatprep.subr.bf16.mxu0 %v1484
          %1986 = vmatpush1.bf16.msra.mxu0 %v1483
          %1987 = vmatprep.subr.bf16.mxu0 %v1482
          %1988 = vmatpush1.bf16.msra.mxu0 %v1481
          %1989 = vmatprep.subr.bf16.mxu0 %v1480
          %1990 = vmatpush1.bf16.msra.mxu0 %v1479
          %1991 = vmatprep.subr.bf16.mxu0 %v1478
          %1992 = vmatpush1.bf16.msra.mxu0 %v1477
          %1993 = vmatprep.subr.bf16.mxu0 %v1476
          %1994 = vmatpush1.bf16.msra.mxu0 %v1475
          %1995 = vmatprep.subr.bf16.mxu0 %v1474
          %1996 = vmatpush1.bf16.msra.mxu0 %v1473
          %1997 = vmatprep.subr.bf16.mxu0 %v1472
          %1998 = vmatpush1.bf16.msra.mxu0 %v1471
          %1999 = vmatprep.subr.bf16.mxu0 %v1502
          %2000 = vmatpush2.bf16.msra.mxu0 %v1501
          %2001 = vmatprep.subr.bf16.mxu0 %v1500
          %2002 = vmatpush2.bf16.msra.mxu0 %v1499
          %2003 = vmatprep.subr.bf16.mxu0 %v1498
          %2004 = vmatpush2.bf16.msra.mxu0 %v1497
          %2005 = vmatprep.subr.bf16.mxu0 %v1496
          %2006 = vmatpush2.bf16.msra.mxu0 %v1495
          %2007 = vmatprep.subr.bf16.mxu0 %v1494
          %2008 = vmatpush2.bf16.msra.mxu0 %v1493
          %2009 = vmatprep.subr.bf16.mxu0 %v1492
          %2010 = vmatpush2.bf16.msra.mxu0 %v1491
          %2011 = vmatprep.subr.bf16.mxu0 %v1490
          %2012 = vmatpush2.bf16.msra.mxu0 %v1489
          %2013 = vmatprep.subr.bf16.mxu0 %v1488
          %2014 = vmatpush2.bf16.msra.mxu0 %v1487
          %2015 = vmatprep.mubr.bf16.mxu0 %v672
          %2016 = vmatmul.mubr.bf16.gmra.mxu0 %v671
          %v2017 = vpop.f32.mrf.mxu0
          %v2018 = vadd.f32 0.0, %v2017
          %v2019 = vpop.f32.mrf.mxu0
          %v2020 = vadd.f32 0.0, %v2019
          %v2021 = vpop.f32.mrf.mxu0
          %v2022 = vadd.f32 0.0, %v2021
          %v2023 = vpop.f32.mrf.mxu0
          %v2024 = vadd.f32 0.0, %v2023
          %2025 = vdwg.mxu0
          %2026 = vmatprep.subr.bf16.mxu0 %v1518
          %2027 = vmatpush1.bf16.msra.mxu0 %v1517
          %2028 = vmatprep.subr.bf16.mxu0 %v1516
          %2029 = vmatpush1.bf16.msra.mxu0 %v1515
          %2030 = vmatprep.subr.bf16.mxu0 %v1514
          %2031 = vmatpush1.bf16.msra.mxu0 %v1513
          %2032 = vmatprep.subr.bf16.mxu0 %v1512
          %2033 = vmatpush1.bf16.msra.mxu0 %v1511
          %2034 = vmatprep.subr.bf16.mxu0 %v1510
          %2035 = vmatpush1.bf16.msra.mxu0 %v1509
          %2036 = vmatprep.subr.bf16.mxu0 %v1508
          %2037 = vmatpush1.bf16.msra.mxu0 %v1507
          %2038 = vmatprep.subr.bf16.mxu0 %v1506
          %2039 = vmatpush1.bf16.msra.mxu0 %v1505
          %2040 = vmatprep.subr.bf16.mxu0 %v1504
          %2041 = vmatpush1.bf16.msra.mxu0 %v1503
          %2042 = vmatprep.subr.bf16.mxu0 %v1534
          %2043 = vmatpush2.bf16.msra.mxu0 %v1533
          %2044 = vmatprep.subr.bf16.mxu0 %v1532
          %2045 = vmatpush2.bf16.msra.mxu0 %v1531
          %2046 = vmatprep.subr.bf16.mxu0 %v1530
          %2047 = vmatpush2.bf16.msra.mxu0 %v1529
          %2048 = vmatprep.subr.bf16.mxu0 %v1528
          %2049 = vmatpush2.bf16.msra.mxu0 %v1527
          %2050 = vmatprep.subr.bf16.mxu0 %v1526
          %2051 = vmatpush2.bf16.msra.mxu0 %v1525
          %2052 = vmatprep.subr.bf16.mxu0 %v1524
          %2053 = vmatpush2.bf16.msra.mxu0 %v1523
          %2054 = vmatprep.subr.bf16.mxu0 %v1522
          %2055 = vmatpush2.bf16.msra.mxu0 %v1521
          %2056 = vmatprep.subr.bf16.mxu0 %v1520
          %2057 = vmatpush2.bf16.msra.mxu0 %v1519
          %2058 = vmatprep.mubr.bf16.mxu0 %v674
          %2059 = vmatmul.mubr.bf16.gmra.mxu0 %v673
          %v2060 = vpop.f32.mrf.mxu0
          %v2061 = vadd.f32 %v2018, %v2060
          %v2062 = vpop.f32.mrf.mxu0
          %v2063 = vadd.f32 %v2020, %v2062
          %v2064 = vpop.f32.mrf.mxu0
          %v2065 = vadd.f32 %v2022, %v2064
          %v2066 = vpop.f32.mrf.mxu0
          %v2067 = vadd.f32 %v2024, %v2066
          %2068 = vdwg.mxu0
          %2069 = vmatprep.subr.bf16.mxu0 %v1550
          %2070 = vmatpush1.bf16.msra.mxu0 %v1549
          %2071 = vmatprep.subr.bf16.mxu0 %v1548
          %2072 = vmatpush1.bf16.msra.mxu0 %v1547
          %2073 = vmatprep.subr.bf16.mxu0 %v1546
          %2074 = vmatpush1.bf16.msra.mxu0 %v1545
          %2075 = vmatprep.subr.bf16.mxu0 %v1544
          %2076 = vmatpush1.bf16.msra.mxu0 %v1543
          %2077 = vmatprep.subr.bf16.mxu0 %v1542
          %2078 = vmatpush1.bf16.msra.mxu0 %v1541
          %2079 = vmatprep.subr.bf16.mxu0 %v1540
          %2080 = vmatpush1.bf16.msra.mxu0 %v1539
          %2081 = vmatprep.subr.bf16.mxu0 %v1538
          %2082 = vmatpush1.bf16.msra.mxu0 %v1537
          %2083 = vmatprep.subr.bf16.mxu0 %v1536
          %2084 = vmatpush1.bf16.msra.mxu0 %v1535
          %2085 = vmatprep.subr.bf16.mxu0 %v1566
          %2086 = vmatpush2.bf16.msra.mxu0 %v1565
          %2087 = vmatprep.subr.bf16.mxu0 %v1564
          %2088 = vmatpush2.bf16.msra.mxu0 %v1563
          %2089 = vmatprep.subr.bf16.mxu0 %v1562
          %2090 = vmatpush2.bf16.msra.mxu0 %v1561
          %2091 = vmatprep.subr.bf16.mxu0 %v1560
          %2092 = vmatpush2.bf16.msra.mxu0 %v1559
          %2093 = vmatprep.subr.bf16.mxu0 %v1558
          %2094 = vmatpush2.bf16.msra.mxu0 %v1557
          %2095 = vmatprep.subr.bf16.mxu0 %v1556
          %2096 = vmatpush2.bf16.msra.mxu0 %v1555
          %2097 = vmatprep.subr.bf16.mxu0 %v1554
          %2098 = vmatpush2.bf16.msra.mxu0 %v1553
          %2099 = vmatprep.subr.bf16.mxu0 %v1552
          %2100 = vmatpush2.bf16.msra.mxu0 %v1551
          %2101 = vmatprep.mubr.bf16.mxu0 %v676
          %2102 = vmatmul.mubr.bf16.gmra.mxu0 %v675
          %v2103 = vpop.f32.mrf.mxu0
          %v2104 = vadd.f32 %v2061, %v2103
          %v2105 = vpop.f32.mrf.mxu0
          %v2106 = vadd.f32 %v2063, %v2105
          %v2107 = vpop.f32.mrf.mxu0
          %v2108 = vadd.f32 %v2065, %v2107
          %v2109 = vpop.f32.mrf.mxu0
          %v2110 = vadd.f32 %v2067, %v2109
          %2111 = vdwg.mxu0
          %2112 = vmatprep.subr.bf16.mxu0 %v1582
          %2113 = vmatpush1.bf16.msra.mxu0 %v1581
          %2114 = vmatprep.subr.bf16.mxu0 %v1580
          %2115 = vmatpush1.bf16.msra.mxu0 %v1579
          %2116 = vmatprep.subr.bf16.mxu0 %v1578
          %2117 = vmatpush1.bf16.msra.mxu0 %v1577
          %2118 = vmatprep.subr.bf16.mxu0 %v1576
          %2119 = vmatpush1.bf16.msra.mxu0 %v1575
          %2120 = vmatprep.subr.bf16.mxu0 %v1574
          %2121 = vmatpush1.bf16.msra.mxu0 %v1573
          %2122 = vmatprep.subr.bf16.mxu0 %v1572
          %2123 = vmatpush1.bf16.msra.mxu0 %v1571
          %2124 = vmatprep.subr.bf16.mxu0 %v1570
          %2125 = vmatpush1.bf16.msra.mxu0 %v1569
          %2126 = vmatprep.subr.bf16.mxu0 %v1568
          %2127 = vmatpush1.bf16.msra.mxu0 %v1567
          %2128 = vmatprep.subr.bf16.mxu0 %v1598
          %2129 = vmatpush2.bf16.msra.mxu0 %v1597
          %2130 = vmatprep.subr.bf16.mxu0 %v1596
          %2131 = vmatpush2.bf16.msra.mxu0 %v1595
          %2132 = vmatprep.subr.bf16.mxu0 %v1594
          %2133 = vmatpush2.bf16.msra.mxu0 %v1593
          %2134 = vmatprep.subr.bf16.mxu0 %v1592
          %2135 = vmatpush2.bf16.msra.mxu0 %v1591
          %2136 = vmatprep.subr.bf16.mxu0 %v1590
          %2137 = vmatpush2.bf16.msra.mxu0 %v1589
          %2138 = vmatprep.subr.bf16.mxu0 %v1588
          %2139 = vmatpush2.bf16.msra.mxu0 %v1587
          %2140 = vmatprep.subr.bf16.mxu0 %v1586
          %2141 = vmatpush2.bf16.msra.mxu0 %v1585
          %2142 = vmatprep.subr.bf16.mxu0 %v1584
          %2143 = vmatpush2.bf16.msra.mxu0 %v1583
          %2144 = vmatprep.mubr.bf16.mxu0 %v678
          %2145 = vmatmul.mubr.bf16.gmra.mxu0 %v677
          %v2146 = vpop.f32.mrf.mxu0
          %v2147 = vadd.f32 %v2104, %v2146
          %v2148 = vpop.f32.mrf.mxu0
          %v2149 = vadd.f32 %v2106, %v2148
          %v2150 = vpop.f32.mrf.mxu0
          %v2151 = vadd.f32 %v2108, %v2150
          %v2152 = vpop.f32.mrf.mxu0
          %v2153 = vadd.f32 %v2110, %v2152
          %2154 = vdwg.mxu0
          %2155 = vmatprep.subr.bf16.mxu0 %v1614
          %2156 = vmatpush1.bf16.msra.mxu0 %v1613
          %2157 = vmatprep.subr.bf16.mxu0 %v1612
          %2158 = vmatpush1.bf16.msra.mxu0 %v1611
          %2159 = vmatprep.subr.bf16.mxu0 %v1610
          %2160 = vmatpush1.bf16.msra.mxu0 %v1609
          %2161 = vmatprep.subr.bf16.mxu0 %v1608
          %2162 = vmatpush1.bf16.msra.mxu0 %v1607
          %2163 = vmatprep.subr.bf16.mxu0 %v1606
          %2164 = vmatpush1.bf16.msra.mxu0 %v1605
          %2165 = vmatprep.subr.bf16.mxu0 %v1604
          %2166 = vmatpush1.bf16.msra.mxu0 %v1603
          %2167 = vmatprep.subr.bf16.mxu0 %v1602
          %2168 = vmatpush1.bf16.msra.mxu0 %v1601
          %2169 = vmatprep.subr.bf16.mxu0 %v1600
          %2170 = vmatpush1.bf16.msra.mxu0 %v1599
          %2171 = vmatprep.subr.bf16.mxu0 %v1630
          %2172 = vmatpush2.bf16.msra.mxu0 %v1629
          %2173 = vmatprep.subr.bf16.mxu0 %v1628
          %2174 = vmatpush2.bf16.msra.mxu0 %v1627
          %2175 = vmatprep.subr.bf16.mxu0 %v1626
          %2176 = vmatpush2.bf16.msra.mxu0 %v1625
          %2177 = vmatprep.subr.bf16.mxu0 %v1624
          %2178 = vmatpush2.bf16.msra.mxu0 %v1623
          %2179 = vmatprep.subr.bf16.mxu0 %v1622
          %2180 = vmatpush2.bf16.msra.mxu0 %v1621
          %2181 = vmatprep.subr.bf16.mxu0 %v1620
          %2182 = vmatpush2.bf16.msra.mxu0 %v1619
          %2183 = vmatprep.subr.bf16.mxu0 %v1618
          %2184 = vmatpush2.bf16.msra.mxu0 %v1617
          %2185 = vmatprep.subr.bf16.mxu0 %v1616
          %2186 = vmatpush2.bf16.msra.mxu0 %v1615
          %2187 = vmatprep.mubr.bf16.mxu0 %v680
          %2188 = vmatmul.mubr.bf16.gmra.mxu0 %v679
          %v2189 = vpop.f32.mrf.mxu0
          %v2190 = vadd.f32 %v2147, %v2189
          %v2191 = vpop.f32.mrf.mxu0
          %v2192 = vadd.f32 %v2149, %v2191
          %v2193 = vpop.f32.mrf.mxu0
          %v2194 = vadd.f32 %v2151, %v2193
          %v2195 = vpop.f32.mrf.mxu0
          %v2196 = vadd.f32 %v2153, %v2195
          %2197 = vdwg.mxu0
          %2198 = vmatprep.subr.bf16.mxu0 %v1646
          %2199 = vmatpush1.bf16.msra.mxu0 %v1645
          %2200 = vmatprep.subr.bf16.mxu0 %v1644
          %2201 = vmatpush1.bf16.msra.mxu0 %v1643
          %2202 = vmatprep.subr.bf16.mxu0 %v1642
          %2203 = vmatpush1.bf16.msra.mxu0 %v1641
          %2204 = vmatprep.subr.bf16.mxu0 %v1640
          %2205 = vmatpush1.bf16.msra.mxu0 %v1639
          %2206 = vmatprep.subr.bf16.mxu0 %v1638
          %2207 = vmatpush1.bf16.msra.mxu0 %v1637
          %2208 = vmatprep.subr.bf16.mxu0 %v1636
          %2209 = vmatpush1.bf16.msra.mxu0 %v1635
          %2210 = vmatprep.subr.bf16.mxu0 %v1634
          %2211 = vmatpush1.bf16.msra.mxu0 %v1633
          %2212 = vmatprep.subr.bf16.mxu0 %v1632
          %2213 = vmatpush1.bf16.msra.mxu0 %v1631
          %2214 = vmatprep.subr.bf16.mxu0 %v1662
          %2215 = vmatpush2.bf16.msra.mxu0 %v1661
          %2216 = vmatprep.subr.bf16.mxu0 %v1660
          %2217 = vmatpush2.bf16.msra.mxu0 %v1659
          %2218 = vmatprep.subr.bf16.mxu0 %v1658
          %2219 = vmatpush2.bf16.msra.mxu0 %v1657
          %2220 = vmatprep.subr.bf16.mxu0 %v1656
          %2221 = vmatpush2.bf16.msra.mxu0 %v1655
          %2222 = vmatprep.subr.bf16.mxu0 %v1654
          %2223 = vmatpush2.bf16.msra.mxu0 %v1653
          %2224 = vmatprep.subr.bf16.mxu0 %v1652
          %2225 = vmatpush2.bf16.msra.mxu0 %v1651
          %2226 = vmatprep.subr.bf16.mxu0 %v1650
          %2227 = vmatpush2.bf16.msra.mxu0 %v1649
          %2228 = vmatprep.subr.bf16.mxu0 %v1648
          %2229 = vmatpush2.bf16.msra.mxu0 %v1647
          %2230 = vmatprep.mubr.bf16.mxu0 %v682
          %2231 = vmatmul.mubr.bf16.gmra.mxu0 %v681
          %v2232 = vpop.f32.mrf.mxu0
          %v2233 = vadd.f32 %v2190, %v2232
          %v2234 = vpop.f32.mrf.mxu0
          %v2235 = vadd.f32 %v2192, %v2234
          %v2236 = vpop.f32.mrf.mxu0
          %v2237 = vadd.f32 %v2194, %v2236
          %v2238 = vpop.f32.mrf.mxu0
          %v2239 = vadd.f32 %v2196, %v2238
          %2240 = vdwg.mxu0
          %2241 = vmatprep.subr.bf16.mxu0 %v1678
          %2242 = vmatpush1.bf16.msra.mxu0 %v1677
          %2243 = vmatprep.subr.bf16.mxu0 %v1676
          %2244 = vmatpush1.bf16.msra.mxu0 %v1675
          %2245 = vmatprep.subr.bf16.mxu0 %v1674
          %2246 = vmatpush1.bf16.msra.mxu0 %v1673
          %2247 = vmatprep.subr.bf16.mxu0 %v1672
          %2248 = vmatpush1.bf16.msra.mxu0 %v1671
          %2249 = vmatprep.subr.bf16.mxu0 %v1670
          %2250 = vmatpush1.bf16.msra.mxu0 %v1669
          %2251 = vmatprep.subr.bf16.mxu0 %v1668
          %2252 = vmatpush1.bf16.msra.mxu0 %v1667
          %2253 = vmatprep.subr.bf16.mxu0 %v1666
          %2254 = vmatpush1.bf16.msra.mxu0 %v1665
          %2255 = vmatprep.subr.bf16.mxu0 %v1664
          %2256 = vmatpush1.bf16.msra.mxu0 %v1663
          %2257 = vmatprep.subr.bf16.mxu0 %v1694
          %2258 = vmatpush2.bf16.msra.mxu0 %v1693
          %2259 = vmatprep.subr.bf16.mxu0 %v1692
          %2260 = vmatpush2.bf16.msra.mxu0 %v1691
          %2261 = vmatprep.subr.bf16.mxu0 %v1690
          %2262 = vmatpush2.bf16.msra.mxu0 %v1689
          %2263 = vmatprep.subr.bf16.mxu0 %v1688
          %2264 = vmatpush2.bf16.msra.mxu0 %v1687
          %2265 = vmatprep.subr.bf16.mxu0 %v1686
          %2266 = vmatpush2.bf16.msra.mxu0 %v1685
          %2267 = vmatprep.subr.bf16.mxu0 %v1684
          %2268 = vmatpush2.bf16.msra.mxu0 %v1683
          %2269 = vmatprep.subr.bf16.mxu0 %v1682
          %2270 = vmatpush2.bf16.msra.mxu0 %v1681
          %2271 = vmatprep.subr.bf16.mxu0 %v1680
          %2272 = vmatpush2.bf16.msra.mxu0 %v1679
          %2273 = vmatprep.mubr.bf16.mxu0 %v684
          %2274 = vmatmul.mubr.bf16.gmra.mxu0 %v683
          %v2275 = vpop.f32.mrf.mxu0
          %v2276 = vadd.f32 %v2233, %v2275
          %v2277 = vpop.f32.mrf.mxu0
          %v2278 = vadd.f32 %v2235, %v2277
          %v2279 = vpop.f32.mrf.mxu0
          %v2280 = vadd.f32 %v2237, %v2279
          %v2281 = vpop.f32.mrf.mxu0
          %v2282 = vadd.f32 %v2239, %v2281
          %2283 = vdwg.mxu0
          %2284 = vmatprep.subr.bf16.mxu0 %v1710
          %2285 = vmatpush1.bf16.msra.mxu0 %v1709
          %2286 = vmatprep.subr.bf16.mxu0 %v1708
          %2287 = vmatpush1.bf16.msra.mxu0 %v1707
          %2288 = vmatprep.subr.bf16.mxu0 %v1706
          %2289 = vmatpush1.bf16.msra.mxu0 %v1705
          %2290 = vmatprep.subr.bf16.mxu0 %v1704
          %2291 = vmatpush1.bf16.msra.mxu0 %v1703
          %2292 = vmatprep.subr.bf16.mxu0 %v1702
          %2293 = vmatpush1.bf16.msra.mxu0 %v1701
          %2294 = vmatprep.subr.bf16.mxu0 %v1700
          %2295 = vmatpush1.bf16.msra.mxu0 %v1699
          %2296 = vmatprep.subr.bf16.mxu0 %v1698
          %2297 = vmatpush1.bf16.msra.mxu0 %v1697
          %2298 = vmatprep.subr.bf16.mxu0 %v1696
          %2299 = vmatpush1.bf16.msra.mxu0 %v1695
          %2300 = vmatprep.subr.bf16.mxu0 %v1726
          %2301 = vmatpush2.bf16.msra.mxu0 %v1725
          %2302 = vmatprep.subr.bf16.mxu0 %v1724
          %2303 = vmatpush2.bf16.msra.mxu0 %v1723
          %2304 = vmatprep.subr.bf16.mxu0 %v1722
          %2305 = vmatpush2.bf16.msra.mxu0 %v1721
          %2306 = vmatprep.subr.bf16.mxu0 %v1720
          %2307 = vmatpush2.bf16.msra.mxu0 %v1719
          %2308 = vmatprep.subr.bf16.mxu0 %v1718
          %2309 = vmatpush2.bf16.msra.mxu0 %v1717
          %2310 = vmatprep.subr.bf16.mxu0 %v1716
          %2311 = vmatpush2.bf16.msra.mxu0 %v1715
          %2312 = vmatprep.subr.bf16.mxu0 %v1714
          %2313 = vmatpush2.bf16.msra.mxu0 %v1713
          %2314 = vmatprep.subr.bf16.mxu0 %v1712
          %2315 = vmatpush2.bf16.msra.mxu0 %v1711
          %2316 = vmatprep.mubr.bf16.mxu0 %v686
          %2317 = vmatmul.mubr.bf16.gmra.mxu0 %v685
          %v2318 = vpop.f32.mrf.mxu0
          %v2319 = vadd.f32 %v2276, %v2318
          %v2320 = vpop.f32.mrf.mxu0
          %v2321 = vadd.f32 %v2278, %v2320
          %v2322 = vpop.f32.mrf.mxu0
          %v2323 = vadd.f32 %v2280, %v2322
          %v2324 = vpop.f32.mrf.mxu0
          %v2325 = vadd.f32 %v2282, %v2324
          %2326 = vdwg.mxu0
          %v2327 = vpack.c.bf16 %v2323, %v2319
          %v2328 = vpack.c.bf16 %v2325, %v2321
          %v2331 = vunpack.c.l.b16 %v2327
          %v2332 = vunpack.c.l.b16 %v2328
          %v2333 = vunpack.c.h.b16 %v2327
          %v2334 = vunpack.c.h.b16 %v2328
          %v2335 = vpack.c.b16 %v2332, %v2331
          %v2336 = vpack.c.b16 %v2334, %v2333
          %2339 = vst [vmem:[#allocation2] sm:$0xff] %v2335
          %2340 = vst [vmem:[#allocation2 + $0x8] sm:$0xff] %v2336
        $region64: #{tpu_custom_call.1} parent=39 // pred_fallthru
          _
        %v2341 = vld [vmem:[%s300] sm:$0xf]
        %v2342 = vld [vmem:[%s300 + $0x4] sm:$0xf]
        %v2343 = vld [vmem:[%s300 + $0x8] sm:$0xf]
        %v2344 = vld [vmem:[%s300 + $0xc] sm:$0xf]
        %v2345 = vld [vmem:[%s300 + $0x10] sm:$0xf]
        %v2346 = vld [vmem:[%s300 + $0x14] sm:$0xf]
        %v2347 = vld [vmem:[%s300 + $0x18] sm:$0xf]
        %v2348 = vld [vmem:[%s300 + $0x1c] sm:$0xf]
        %v2349 = vld [vmem:[%s300 + $0x20] sm:$0xf]
        %v2350 = vld [vmem:[%s300 + $0x24] sm:$0xf]
        %v2351 = vld [vmem:[%s300 + $0x28] sm:$0xf]
        %v2352 = vld [vmem:[%s300 + $0x2c] sm:$0xf]
        %v2353 = vld [vmem:[%s300 + $0x30] sm:$0xf]
        %v2354 = vld [vmem:[%s300 + $0x34] sm:$0xf]
        %v2355 = vld [vmem:[%s300 + $0x38] sm:$0xf]
        %v2356 = vld [vmem:[%s300 + $0x3c] sm:$0xf]
        %v2357 = vld [vmem:[%s300 + $0x40] sm:$0xf]
        %v2358 = vld [vmem:[%s300 + $0x44] sm:$0xf]
        %v2359 = vld [vmem:[%s300 + $0x48] sm:$0xf]
        %v2360 = vld [vmem:[%s300 + $0x4c] sm:$0xf]
        %v2361 = vld [vmem:[%s300 + $0x50] sm:$0xf]
        %v2362 = vld [vmem:[%s300 + $0x54] sm:$0xf]
        %v2363 = vld [vmem:[%s300 + $0x58] sm:$0xf]
        %v2364 = vld [vmem:[%s300 + $0x5c] sm:$0xf]
        %v2365 = vld [vmem:[%s300 + $0x60] sm:$0xf]
        %v2366 = vld [vmem:[%s300 + $0x64] sm:$0xf]
        %v2367 = vld [vmem:[%s300 + $0x68] sm:$0xf]
        %v2368 = vld [vmem:[%s300 + $0x6c] sm:$0xf]
        %v2369 = vld [vmem:[%s300 + $0x70] sm:$0xf]
        %v2370 = vld [vmem:[%s300 + $0x74] sm:$0xf]
        %v2371 = vld [vmem:[%s300 + $0x78] sm:$0xf]
        %v2372 = vld [vmem:[%s300 + $0x7c] sm:$0xf]
        %v2373 = vld [vmem:[#allocation9] sm:$0xf]
        %v2374 = vld [vmem:[#allocation9 + $0x4] sm:$0xf]
        %v2375 = vld [vmem:[#allocation9 + $0x8] sm:$0xf]
        %v2376 = vld [vmem:[#allocation9 + $0xc] sm:$0xf]
        %v2377 = vld [vmem:[#allocation9 + $0x10] sm:$0xf]
        %v2378 = vld [vmem:[#allocation9 + $0x14] sm:$0xf]
        %v2379 = vld [vmem:[#allocation9 + $0x18] sm:$0xf]
        %v2380 = vld [vmem:[#allocation9 + $0x1c] sm:$0xf]
        %v2381 = vld [vmem:[#allocation9 + $0x20] sm:$0xf]
        %v2382 = vld [vmem:[#allocation9 + $0x24] sm:$0xf]
        %v2383 = vld [vmem:[#allocation9 + $0x28] sm:$0xf]
        %v2384 = vld [vmem:[#allocation9 + $0x2c] sm:$0xf]
        %v2385 = vld [vmem:[#allocation9 + $0x30] sm:$0xf]
        %v2386 = vld [vmem:[#allocation9 + $0x34] sm:$0xf]
        %v2387 = vld [vmem:[#allocation9 + $0x38] sm:$0xf]
        %v2388 = vld [vmem:[#allocation9 + $0x3c] sm:$0xf]
        %v2421 = vunpack.c.l.b16 %v2341
        %v2422 = vunpack.c.l.b16 %v2342
        %v2423 = vunpack.c.l.b16 %v2343
        %v2424 = vunpack.c.l.b16 %v2344
        %v2425 = vunpack.c.l.b16 %v2345
        %v2426 = vunpack.c.l.b16 %v2346
        %v2427 = vunpack.c.l.b16 %v2347
        %v2428 = vunpack.c.l.b16 %v2348
        %v2429 = vunpack.c.l.b16 %v2349
        %v2430 = vunpack.c.l.b16 %v2350
        %v2431 = vunpack.c.l.b16 %v2351
        %v2432 = vunpack.c.l.b16 %v2352
        %v2433 = vunpack.c.l.b16 %v2353
        %v2434 = vunpack.c.l.b16 %v2354
        %v2435 = vunpack.c.l.b16 %v2355
        %v2436 = vunpack.c.l.b16 %v2356
        %v2437 = vunpack.c.l.b16 %v2357
        %v2438 = vunpack.c.l.b16 %v2358
        %v2439 = vunpack.c.l.b16 %v2359
        %v2440 = vunpack.c.l.b16 %v2360
        %v2441 = vunpack.c.l.b16 %v2361
        %v2442 = vunpack.c.l.b16 %v2362
        %v2443 = vunpack.c.l.b16 %v2363
        %v2444 = vunpack.c.l.b16 %v2364
        %v2445 = vunpack.c.l.b16 %v2365
        %v2446 = vunpack.c.l.b16 %v2366
        %v2447 = vunpack.c.l.b16 %v2367
        %v2448 = vunpack.c.l.b16 %v2368
        %v2449 = vunpack.c.l.b16 %v2369
        %v2450 = vunpack.c.l.b16 %v2370
        %v2451 = vunpack.c.l.b16 %v2371
        %v2452 = vunpack.c.l.b16 %v2372
        %v2453 = vpack.c.b16 %v2422, %v2421
        %v2454 = vpack.c.b16 %v2424, %v2423
        %v2455 = vpack.c.b16 %v2426, %v2425
        %v2456 = vpack.c.b16 %v2428, %v2427
        %v2457 = vpack.c.b16 %v2430, %v2429
        %v2458 = vpack.c.b16 %v2432, %v2431
        %v2459 = vpack.c.b16 %v2434, %v2433
        %v2460 = vpack.c.b16 %v2436, %v2435
        %v2461 = vpack.c.b16 %v2438, %v2437
        %v2462 = vpack.c.b16 %v2440, %v2439
        %v2463 = vpack.c.b16 %v2442, %v2441
        %v2464 = vpack.c.b16 %v2444, %v2443
        %v2465 = vpack.c.b16 %v2446, %v2445
        %v2466 = vpack.c.b16 %v2448, %v2447
        %v2467 = vpack.c.b16 %v2450, %v2449
        %v2468 = vpack.c.b16 %v2452, %v2451
        %v2501 = vunpack.c.l.b16 %v2373
        %v2502 = vunpack.c.l.b16 %v2374
        %v2503 = vunpack.c.l.b16 %v2375
        %v2504 = vunpack.c.l.b16 %v2376
        %v2505 = vunpack.c.l.b16 %v2377
        %v2506 = vunpack.c.l.b16 %v2378
        %v2507 = vunpack.c.l.b16 %v2379
        %v2508 = vunpack.c.l.b16 %v2380
        %v2509 = vunpack.c.l.b16 %v2381
        %v2510 = vunpack.c.l.b16 %v2382
        %v2511 = vunpack.c.l.b16 %v2383
        %v2512 = vunpack.c.l.b16 %v2384
        %v2513 = vunpack.c.l.b16 %v2385
        %v2514 = vunpack.c.l.b16 %v2386
        %v2515 = vunpack.c.l.b16 %v2387
        %v2516 = vunpack.c.l.b16 %v2388
        %v2517 = vpack.c.b16 %v2502, %v2501
        %v2518 = vpack.c.b16 %v2504, %v2503
        %v2519 = vpack.c.b16 %v2506, %v2505
        %v2520 = vpack.c.b16 %v2508, %v2507
        %v2521 = vpack.c.b16 %v2510, %v2509
        %v2522 = vpack.c.b16 %v2512, %v2511
        %v2523 = vpack.c.b16 %v2514, %v2513
        %v2524 = vpack.c.b16 %v2516, %v2515
        %2533 = vmatprep.subr.bf16.mxu0 0
        %2534 = vmatpush1.bf16.msra.mxu0 %v2524
        %2535 = vmatprep.subr.bf16.mxu0 0
        %2536 = vmatpush1.bf16.msra.mxu0 %v2523
        %2537 = vmatprep.subr.bf16.mxu0 0
        %2538 = vmatpush1.bf16.msra.mxu0 %v2522
        %2539 = vmatprep.subr.bf16.mxu0 0
        %2540 = vmatpush1.bf16.msra.mxu0 %v2521
        %2541 = vmatprep.subr.bf16.mxu0 0
        %2542 = vmatpush1.bf16.msra.mxu0 %v2520
        %2543 = vmatprep.subr.bf16.mxu0 0
        %2544 = vmatpush1.bf16.msra.mxu0 %v2519
        %2545 = vmatprep.subr.bf16.mxu0 0
        %2546 = vmatpush1.bf16.msra.mxu0 %v2518
        %2547 = vmatprep.subr.bf16.mxu0 0
        %2548 = vmatpush1.bf16.msra.mxu0 %v2517
        %2549 = vmatprep.subr.bf16.mxu0 0
        %2550 = vmatpush2.bf16.msra.mxu0 0
        %2551 = vmatprep.subr.bf16.mxu0 0
        %2552 = vmatpush2.bf16.msra.mxu0 0
        %2553 = vmatprep.subr.bf16.mxu0 0
        %2554 = vmatpush2.bf16.msra.mxu0 0
        %2555 = vmatprep.subr.bf16.mxu0 0
        %2556 = vmatpush2.bf16.msra.mxu0 0
        %2557 = vmatprep.subr.bf16.mxu0 0
        %2558 = vmatpush2.bf16.msra.mxu0 0
        %2559 = vmatprep.subr.bf16.mxu0 0
        %2560 = vmatpush2.bf16.msra.mxu0 0
        %2561 = vmatprep.subr.bf16.mxu0 0
        %2562 = vmatpush2.bf16.msra.mxu0 0
        %2563 = vmatprep.subr.bf16.mxu0 0
        %2564 = vmatpush2.bf16.msra.mxu0 0
        %2565 = vmatprep.mubr.bf16.mxu0 0
        %2566 = vmatmul.mubr.bf16.gmra.mxu0 %v2453
        %v2567 = vpop.f32.mrf.mxu0
        %v2568 = vadd.f32 0.0, %v2567
        %v2569 = vpop.f32.mrf.mxu0
        %v2570 = vpop.f32.mrf.mxu0
        %v2571 = vadd.f32 0.0, %v2570
        %v2572 = vpop.f32.mrf.mxu0
        %2573 = vmatprep.mubr.bf16.mxu0 0
        %2574 = vmatmul.mubr.bf16.gmra.mxu0 %v2454
        %v2575 = vpop.f32.mrf.mxu0
        %v2576 = vadd.f32 0.0, %v2575
        %v2577 = vpop.f32.mrf.mxu0
        %v2578 = vpop.f32.mrf.mxu0
        %v2579 = vadd.f32 0.0, %v2578
        %v2580 = vpop.f32.mrf.mxu0
        %2581 = vmatprep.mubr.bf16.mxu0 0
        %2582 = vmatmul.mubr.bf16.gmra.mxu0 %v2455
        %v2583 = vpop.f32.mrf.mxu0
        %v2584 = vadd.f32 0.0, %v2583
        %v2585 = vpop.f32.mrf.mxu0
        %v2586 = vpop.f32.mrf.mxu0
        %v2587 = vadd.f32 0.0, %v2586
        %v2588 = vpop.f32.mrf.mxu0
        %2589 = vmatprep.mubr.bf16.mxu0 0
        %2590 = vmatmul.mubr.bf16.gmra.mxu0 %v2456
        %v2591 = vpop.f32.mrf.mxu0
        %v2592 = vadd.f32 0.0, %v2591
        %v2593 = vpop.f32.mrf.mxu0
        %v2594 = vpop.f32.mrf.mxu0
        %v2595 = vadd.f32 0.0, %v2594
        %v2596 = vpop.f32.mrf.mxu0
        %2597 = vmatprep.mubr.bf16.mxu0 0
        %2598 = vmatmul.mubr.bf16.gmra.mxu0 %v2457
        %v2599 = vpop.f32.mrf.mxu0
        %v2600 = vadd.f32 0.0, %v2599
        %v2601 = vpop.f32.mrf.mxu0
        %v2602 = vpop.f32.mrf.mxu0
        %v2603 = vadd.f32 0.0, %v2602
        %v2604 = vpop.f32.mrf.mxu0
        %2605 = vmatprep.mubr.bf16.mxu0 0
        %2606 = vmatmul.mubr.bf16.gmra.mxu0 %v2458
        %v2607 = vpop.f32.mrf.mxu0
        %v2608 = vadd.f32 0.0, %v2607
        %v2609 = vpop.f32.mrf.mxu0
        %v2610 = vpop.f32.mrf.mxu0
        %v2611 = vadd.f32 0.0, %v2610
        %v2612 = vpop.f32.mrf.mxu0
        %2613 = vmatprep.mubr.bf16.mxu0 0
        %2614 = vmatmul.mubr.bf16.gmra.mxu0 %v2459
        %v2615 = vpop.f32.mrf.mxu0
        %v2616 = vadd.f32 0.0, %v2615
        %v2617 = vpop.f32.mrf.mxu0
        %v2618 = vpop.f32.mrf.mxu0
        %v2619 = vadd.f32 0.0, %v2618
        %v2620 = vpop.f32.mrf.mxu0
        %2621 = vmatprep.mubr.bf16.mxu0 0
        %2622 = vmatmul.mubr.bf16.gmra.mxu0 %v2460
        %v2623 = vpop.f32.mrf.mxu0
        %v2624 = vadd.f32 0.0, %v2623
        %v2625 = vpop.f32.mrf.mxu0
        %v2626 = vpop.f32.mrf.mxu0
        %v2627 = vadd.f32 0.0, %v2626
        %v2628 = vpop.f32.mrf.mxu0
        %2629 = vmatprep.mubr.bf16.mxu0 0
        %2630 = vmatmul.mubr.bf16.gmra.mxu0 %v2461
        %v2631 = vpop.f32.mrf.mxu0
        %v2632 = vadd.f32 0.0, %v2631
        %v2633 = vpop.f32.mrf.mxu0
        %v2634 = vpop.f32.mrf.mxu0
        %v2635 = vadd.f32 0.0, %v2634
        %v2636 = vpop.f32.mrf.mxu0
        %2637 = vmatprep.mubr.bf16.mxu0 0
        %2638 = vmatmul.mubr.bf16.gmra.mxu0 %v2462
        %v2639 = vpop.f32.mrf.mxu0
        %v2640 = vadd.f32 0.0, %v2639
        %v2641 = vpop.f32.mrf.mxu0
        %v2642 = vpop.f32.mrf.mxu0
        %v2643 = vadd.f32 0.0, %v2642
        %v2644 = vpop.f32.mrf.mxu0
        %2645 = vmatprep.mubr.bf16.mxu0 0
        %2646 = vmatmul.mubr.bf16.gmra.mxu0 %v2463
        %v2647 = vpop.f32.mrf.mxu0
        %v2648 = vadd.f32 0.0, %v2647
        %v2649 = vpop.f32.mrf.mxu0
        %v2650 = vpop.f32.mrf.mxu0
        %v2651 = vadd.f32 0.0, %v2650
        %v2652 = vpop.f32.mrf.mxu0
        %2653 = vmatprep.mubr.bf16.mxu0 0
        %2654 = vmatmul.mubr.bf16.gmra.mxu0 %v2464
        %v2655 = vpop.f32.mrf.mxu0
        %v2656 = vadd.f32 0.0, %v2655
        %v2657 = vpop.f32.mrf.mxu0
        %v2658 = vpop.f32.mrf.mxu0
        %v2659 = vadd.f32 0.0, %v2658
        %v2660 = vpop.f32.mrf.mxu0
        %2661 = vmatprep.mubr.bf16.mxu0 0
        %2662 = vmatmul.mubr.bf16.gmra.mxu0 %v2465
        %v2663 = vpop.f32.mrf.mxu0
        %v2664 = vadd.f32 0.0, %v2663
        %v2665 = vpop.f32.mrf.mxu0
        %v2666 = vpop.f32.mrf.mxu0
        %v2667 = vadd.f32 0.0, %v2666
        %v2668 = vpop.f32.mrf.mxu0
        %2669 = vmatprep.mubr.bf16.mxu0 0
        %2670 = vmatmul.mubr.bf16.gmra.mxu0 %v2466
        %v2671 = vpop.f32.mrf.mxu0
        %v2672 = vadd.f32 0.0, %v2671
        %v2673 = vpop.f32.mrf.mxu0
        %v2674 = vpop.f32.mrf.mxu0
        %v2675 = vadd.f32 0.0, %v2674
        %v2676 = vpop.f32.mrf.mxu0
        %2677 = vmatprep.mubr.bf16.mxu0 0
        %2678 = vmatmul.mubr.bf16.gmra.mxu0 %v2467
        %v2679 = vpop.f32.mrf.mxu0
        %v2680 = vadd.f32 0.0, %v2679
        %v2681 = vpop.f32.mrf.mxu0
        %v2682 = vpop.f32.mrf.mxu0
        %v2683 = vadd.f32 0.0, %v2682
        %v2684 = vpop.f32.mrf.mxu0
        %2685 = vmatprep.mubr.bf16.mxu0 0
        %2686 = vmatmul.mubr.bf16.gmra.mxu0 %v2468
        %v2687 = vpop.f32.mrf.mxu0
        %v2688 = vadd.f32 0.0, %v2687
        %v2689 = vpop.f32.mrf.mxu0
        %v2690 = vpop.f32.mrf.mxu0
        %v2691 = vadd.f32 0.0, %v2690
        %v2692 = vpop.f32.mrf.mxu0
        %2693 = vdwg.mxu0
        %v2694 = vpack.c.bf16 %v2571, %v2568
        %v2695 = vpack.c.bf16 %v2579, %v2576
        %v2696 = vpack.c.bf16 %v2587, %v2584
        %v2697 = vpack.c.bf16 %v2595, %v2592
        %v2698 = vpack.c.bf16 %v2603, %v2600
        %v2699 = vpack.c.bf16 %v2611, %v2608
        %v2700 = vpack.c.bf16 %v2619, %v2616
        %v2701 = vpack.c.bf16 %v2627, %v2624
        %v2702 = vpack.c.bf16 %v2635, %v2632
        %v2703 = vpack.c.bf16 %v2643, %v2640
        %v2704 = vpack.c.bf16 %v2651, %v2648
        %v2705 = vpack.c.bf16 %v2659, %v2656
        %v2706 = vpack.c.bf16 %v2667, %v2664
        %v2707 = vpack.c.bf16 %v2675, %v2672
        %v2708 = vpack.c.bf16 %v2683, %v2680
        %v2709 = vpack.c.bf16 %v2691, %v2688
        %v2710 = vld [vmem:[#allocation2] sm:$0xff]
        %v2711 = vld [vmem:[#allocation2 + $0x8] sm:$0xff]
        %v2714 = vunpack.c.l.b16 %v2710
        %v2715 = vunpack.c.l.b16 %v2711
        %v2716 = vpack.c.b16 %v2715, %v2714
        %vm2717 = vcmask 261120
        %v2719 = vsel %vm2717, %v2694, 0
        %v2722 = vsel %vm2717, %v2695, 0
        %v2725 = vsel %vm2717, %v2696, 0
        %v2728 = vsel %vm2717, %v2697, 0
        %v2731 = vsel %vm2717, %v2698, 0
        %v2734 = vsel %vm2717, %v2699, 0
        %v2737 = vsel %vm2717, %v2700, 0
        %v2740 = vsel %vm2717, %v2701, 0
        %v2743 = vsel %vm2717, %v2702, 0
        %v2746 = vsel %vm2717, %v2703, 0
        %v2749 = vsel %vm2717, %v2704, 0
        %v2752 = vsel %vm2717, %v2705, 0
        %v2755 = vsel %vm2717, %v2706, 0
        %v2758 = vsel %vm2717, %v2707, 0
        %v2761 = vsel %vm2717, %v2708, 0
        %v2764 = vsel %vm2717, %v2709, 0
        %v2767 = vsel %vm2717, %v2716, 0
        %2769 = vmatprep.subr.bf16.mxu0 0
        %2770 = vmatpush1.bf16.xpose.msra.mxu0 0
        %2771 = vmatprep.subr.bf16.mxu0 0
        %2772 = vmatpush1.bf16.xpose.msra.mxu0 0
        %2773 = vmatprep.subr.bf16.mxu0 0
        %2774 = vmatpush1.bf16.xpose.msra.mxu0 0
        %2775 = vmatprep.subr.bf16.mxu0 0
        %2776 = vmatpush1.bf16.xpose.msra.mxu0 0
        %2777 = vmatprep.subr.bf16.mxu0 0
        %2778 = vmatpush1.bf16.xpose.msra.mxu0 0
        %2779 = vmatprep.subr.bf16.mxu0 0
        %2780 = vmatpush1.bf16.xpose.msra.mxu0 0
        %2781 = vmatprep.subr.bf16.mxu0 0
        %2782 = vmatpush1.bf16.xpose.msra.mxu0 0
        %2783 = vmatprep.subr.bf16.mxu0 0
        %2784 = vmatpush1.bf16.xpose.msra.mxu0 %v2767
        %2785 = vmatprep.subr.bf16.mxu0 0
        %2786 = vmatpush2.bf16.xpose.msra.mxu0 0
        %2787 = vmatprep.subr.bf16.mxu0 0
        %2788 = vmatpush2.bf16.xpose.msra.mxu0 0
        %2789 = vmatprep.subr.bf16.mxu0 0
        %2790 = vmatpush2.bf16.xpose.msra.mxu0 0
        %2791 = vmatprep.subr.bf16.mxu0 0
        %2792 = vmatpush2.bf16.xpose.msra.mxu0 0
        %2793 = vmatprep.subr.bf16.mxu0 0
        %2794 = vmatpush2.bf16.xpose.msra.mxu0 0
        %2795 = vmatprep.subr.bf16.mxu0 0
        %2796 = vmatpush2.bf16.xpose.msra.mxu0 0
        %2797 = vmatprep.subr.bf16.mxu0 0
        %2798 = vmatpush2.bf16.xpose.msra.mxu0 0
        %2799 = vmatprep.subr.bf16.mxu0 0
        %2800 = vmatpush2.bf16.xpose.msra.mxu0 0
        %2801 = vmatprep.mubr.bf16.mxu0 0
        %2802 = vmatmul.mubr.bf16.gmra.mxu0 %v2719
        %v2803 = vpop.f32.mrf.mxu0
        %v2804 = vadd.f32 0.0, %v2803
        %v2805 = vpop.f32.mrf.mxu0
        %v2806 = vpop.f32.mrf.mxu0
        %v2807 = vadd.f32 0.0, %v2806
        %v2808 = vpop.f32.mrf.mxu0
        %2809 = vmatprep.mubr.bf16.mxu0 0
        %2810 = vmatmul.mubr.bf16.gmra.mxu0 %v2722
        %v2811 = vpop.f32.mrf.mxu0
        %v2812 = vadd.f32 0.0, %v2811
        %v2813 = vpop.f32.mrf.mxu0
        %v2814 = vpop.f32.mrf.mxu0
        %v2815 = vadd.f32 0.0, %v2814
        %v2816 = vpop.f32.mrf.mxu0
        %2817 = vmatprep.mubr.bf16.mxu0 0
        %2818 = vmatmul.mubr.bf16.gmra.mxu0 %v2725
        %v2819 = vpop.f32.mrf.mxu0
        %v2820 = vadd.f32 0.0, %v2819
        %v2821 = vpop.f32.mrf.mxu0
        %v2822 = vpop.f32.mrf.mxu0
        %v2823 = vadd.f32 0.0, %v2822
        %v2824 = vpop.f32.mrf.mxu0
        %2825 = vmatprep.mubr.bf16.mxu0 0
        %2826 = vmatmul.mubr.bf16.gmra.mxu0 %v2728
        %v2827 = vpop.f32.mrf.mxu0
        %v2828 = vadd.f32 0.0, %v2827
        %v2829 = vpop.f32.mrf.mxu0
        %v2830 = vpop.f32.mrf.mxu0
        %v2831 = vadd.f32 0.0, %v2830
        %v2832 = vpop.f32.mrf.mxu0
        %2833 = vmatprep.mubr.bf16.mxu0 0
        %2834 = vmatmul.mubr.bf16.gmra.mxu0 %v2731
        %v2835 = vpop.f32.mrf.mxu0
        %v2836 = vadd.f32 0.0, %v2835
        %v2837 = vpop.f32.mrf.mxu0
        %v2838 = vpop.f32.mrf.mxu0
        %v2839 = vadd.f32 0.0, %v2838
        %v2840 = vpop.f32.mrf.mxu0
        %2841 = vmatprep.mubr.bf16.mxu0 0
        %2842 = vmatmul.mubr.bf16.gmra.mxu0 %v2734
        %v2843 = vpop.f32.mrf.mxu0
        %v2844 = vadd.f32 0.0, %v2843
        %v2845 = vpop.f32.mrf.mxu0
        %v2846 = vpop.f32.mrf.mxu0
        %v2847 = vadd.f32 0.0, %v2846
        %v2848 = vpop.f32.mrf.mxu0
        %2849 = vmatprep.mubr.bf16.mxu0 0
        %2850 = vmatmul.mubr.bf16.gmra.mxu0 %v2737
        %v2851 = vpop.f32.mrf.mxu0
        %v2852 = vadd.f32 0.0, %v2851
        %v2853 = vpop.f32.mrf.mxu0
        %v2854 = vpop.f32.mrf.mxu0
        %v2855 = vadd.f32 0.0, %v2854
        %v2856 = vpop.f32.mrf.mxu0
        %2857 = vmatprep.mubr.bf16.mxu0 0
        %2858 = vmatmul.mubr.bf16.gmra.mxu0 %v2740
        %v2859 = vpop.f32.mrf.mxu0
        %v2860 = vadd.f32 0.0, %v2859
        %v2861 = vpop.f32.mrf.mxu0
        %v2862 = vpop.f32.mrf.mxu0
        %v2863 = vadd.f32 0.0, %v2862
        %v2864 = vpop.f32.mrf.mxu0
        %2865 = vmatprep.mubr.bf16.mxu0 0
        %2866 = vmatmul.mubr.bf16.gmra.mxu0 %v2743
        %v2867 = vpop.f32.mrf.mxu0
        %v2868 = vadd.f32 0.0, %v2867
        %v2869 = vpop.f32.mrf.mxu0
        %v2870 = vpop.f32.mrf.mxu0
        %v2871 = vadd.f32 0.0, %v2870
        %v2872 = vpop.f32.mrf.mxu0
        %2873 = vmatprep.mubr.bf16.mxu0 0
        %2874 = vmatmul.mubr.bf16.gmra.mxu0 %v2746
        %v2875 = vpop.f32.mrf.mxu0
        %v2876 = vadd.f32 0.0, %v2875
        %v2877 = vpop.f32.mrf.mxu0
        %v2878 = vpop.f32.mrf.mxu0
        %v2879 = vadd.f32 0.0, %v2878
        %v2880 = vpop.f32.mrf.mxu0
        %2881 = vmatprep.mubr.bf16.mxu0 0
        %2882 = vmatmul.mubr.bf16.gmra.mxu0 %v2749
        %v2883 = vpop.f32.mrf.mxu0
        %v2884 = vadd.f32 0.0, %v2883
        %v2885 = vpop.f32.mrf.mxu0
        %v2886 = vpop.f32.mrf.mxu0
        %v2887 = vadd.f32 0.0, %v2886
        %v2888 = vpop.f32.mrf.mxu0
        %2889 = vmatprep.mubr.bf16.mxu0 0
        %2890 = vmatmul.mubr.bf16.gmra.mxu0 %v2752
        %v2891 = vpop.f32.mrf.mxu0
        %v2892 = vadd.f32 0.0, %v2891
        %v2893 = vpop.f32.mrf.mxu0
        %v2894 = vpop.f32.mrf.mxu0
        %v2895 = vadd.f32 0.0, %v2894
        %v2896 = vpop.f32.mrf.mxu0
        %2897 = vmatprep.mubr.bf16.mxu0 0
        %2898 = vmatmul.mubr.bf16.gmra.mxu0 %v2755
        %v2899 = vpop.f32.mrf.mxu0
        %v2900 = vadd.f32 0.0, %v2899
        %v2901 = vpop.f32.mrf.mxu0
        %v2902 = vpop.f32.mrf.mxu0
        %v2903 = vadd.f32 0.0, %v2902
        %v2904 = vpop.f32.mrf.mxu0
        %2905 = vmatprep.mubr.bf16.mxu0 0
        %2906 = vmatmul.mubr.bf16.gmra.mxu0 %v2758
        %v2907 = vpop.f32.mrf.mxu0
        %v2908 = vadd.f32 0.0, %v2907
        %v2909 = vpop.f32.mrf.mxu0
        %v2910 = vpop.f32.mrf.mxu0
        %v2911 = vadd.f32 0.0, %v2910
        %v2912 = vpop.f32.mrf.mxu0
        %2913 = vmatprep.mubr.bf16.mxu0 0
        %2914 = vmatmul.mubr.bf16.gmra.mxu0 %v2761
        %v2915 = vpop.f32.mrf.mxu0
        %v2916 = vadd.f32 0.0, %v2915
        %v2917 = vpop.f32.mrf.mxu0
        %v2918 = vpop.f32.mrf.mxu0
        %v2919 = vadd.f32 0.0, %v2918
        %v2920 = vpop.f32.mrf.mxu0
        %2921 = vmatprep.mubr.bf16.mxu0 0
        %2922 = vmatmul.mubr.bf16.gmra.mxu0 %v2764
        %v2923 = vpop.f32.mrf.mxu0
        %v2924 = vadd.f32 0.0, %v2923
        %v2925 = vpop.f32.mrf.mxu0
        %v2926 = vpop.f32.mrf.mxu0
        %v2927 = vadd.f32 0.0, %v2926
        %v2928 = vpop.f32.mrf.mxu0
        %2929 = vdwg.mxu0
        %vm2930 = vcmask 130048
        %v2931 = vsel %vm2930, %v2804, -inf
        %2932 = vmax.xlane.f32.xlu0 %v2931
        %v2933 = vpop.xlane.xlu0 %2932
        %v2934 = vsel %vm2930, %v2807, -inf
        %2935 = vmax.xlane.f32.xlu0 %v2934
        %v2936 = vpop.xlane.xlu0 %2935
        %v2937 = vsel %vm2930, %v2812, -inf
        %2938 = vmax.xlane.f32.xlu0 %v2937
        %v2939 = vpop.xlane.xlu0 %2938
        %v2940 = vsel %vm2930, %v2815, -inf
        %2941 = vmax.xlane.f32.xlu0 %v2940
        %v2942 = vpop.xlane.xlu0 %2941
        %v2943 = vsel %vm2930, %v2820, -inf
        %2944 = vmax.xlane.f32.xlu0 %v2943
        %v2945 = vpop.xlane.xlu0 %2944
        %v2946 = vsel %vm2930, %v2823, -inf
        %2947 = vmax.xlane.f32.xlu0 %v2946
        %v2948 = vpop.xlane.xlu0 %2947
        %v2949 = vsel %vm2930, %v2828, -inf
        %2950 = vmax.xlane.f32.xlu0 %v2949
        %v2951 = vpop.xlane.xlu0 %2950
        %v2952 = vsel %vm2930, %v2831, -inf
        %2953 = vmax.xlane.f32.xlu0 %v2952
        %v2954 = vpop.xlane.xlu0 %2953
        %v2955 = vsel %vm2930, %v2836, -inf
        %2956 = vmax.xlane.f32.xlu0 %v2955
        %v2957 = vpop.xlane.xlu0 %2956
        %v2958 = vsel %vm2930, %v2839, -inf
        %2959 = vmax.xlane.f32.xlu0 %v2958
        %v2960 = vpop.xlane.xlu0 %2959
        %v2961 = vsel %vm2930, %v2844, -inf
        %2962 = vmax.xlane.f32.xlu0 %v2961
        %v2963 = vpop.xlane.xlu0 %2962
        %v2964 = vsel %vm2930, %v2847, -inf
        %2965 = vmax.xlane.f32.xlu0 %v2964
        %v2966 = vpop.xlane.xlu0 %2965
        %v2967 = vsel %vm2930, %v2852, -inf
        %2968 = vmax.xlane.f32.xlu0 %v2967
        %v2969 = vpop.xlane.xlu0 %2968
        %v2970 = vsel %vm2930, %v2855, -inf
        %2971 = vmax.xlane.f32.xlu0 %v2970
        %v2972 = vpop.xlane.xlu0 %2971
        %v2973 = vsel %vm2930, %v2860, -inf
        %2974 = vmax.xlane.f32.xlu0 %v2973
        %v2975 = vpop.xlane.xlu0 %2974
        %v2976 = vsel %vm2930, %v2863, -inf
        %2977 = vmax.xlane.f32.xlu0 %v2976
        %v2978 = vpop.xlane.xlu0 %2977
        %v2979 = vsel %vm2930, %v2868, -inf
        %2980 = vmax.xlane.f32.xlu0 %v2979
        %v2981 = vpop.xlane.xlu0 %2980
        %v2982 = vsel %vm2930, %v2871, -inf
        %2983 = vmax.xlane.f32.xlu0 %v2982
        %v2984 = vpop.xlane.xlu0 %2983
        %v2985 = vsel %vm2930, %v2876, -inf
        %2986 = vmax.xlane.f32.xlu0 %v2985
        %v2987 = vpop.xlane.xlu0 %2986
        %v2988 = vsel %vm2930, %v2879, -inf
        %2989 = vmax.xlane.f32.xlu0 %v2988
        %v2990 = vpop.xlane.xlu0 %2989
        %v2991 = vsel %vm2930, %v2884, -inf
        %2992 = vmax.xlane.f32.xlu0 %v2991
        %v2993 = vpop.xlane.xlu0 %2992
        %v2994 = vsel %vm2930, %v2887, -inf
        %2995 = vmax.xlane.f32.xlu0 %v2994
        %v2996 = vpop.xlane.xlu0 %2995
        %v2997 = vsel %vm2930, %v2892, -inf
        %2998 = vmax.xlane.f32.xlu0 %v2997
        %v2999 = vpop.xlane.xlu0 %2998
        %v3000 = vsel %vm2930, %v2895, -inf
        %3001 = vmax.xlane.f32.xlu0 %v3000
        %v3002 = vpop.xlane.xlu0 %3001
        %v3003 = vsel %vm2930, %v2900, -inf
        %3004 = vmax.xlane.f32.xlu0 %v3003
        %v3005 = vpop.xlane.xlu0 %3004
        %v3006 = vsel %vm2930, %v2903, -inf
        %3007 = vmax.xlane.f32.xlu0 %v3006
        %v3008 = vpop.xlane.xlu0 %3007
        %v3009 = vsel %vm2930, %v2908, -inf
        %3010 = vmax.xlane.f32.xlu0 %v3009
        %v3011 = vpop.xlane.xlu0 %3010
        %v3012 = vsel %vm2930, %v2911, -inf
        %3013 = vmax.xlane.f32.xlu0 %v3012
        %v3014 = vpop.xlane.xlu0 %3013
        %v3015 = vsel %vm2930, %v2916, -inf
        %3016 = vmax.xlane.f32.xlu0 %v3015
        %v3017 = vpop.xlane.xlu0 %3016
        %v3018 = vsel %vm2930, %v2919, -inf
        %3019 = vmax.xlane.f32.xlu0 %v3018
        %v3020 = vpop.xlane.xlu0 %3019
        %v3021 = vsel %vm2930, %v2924, -inf
        %3022 = vmax.xlane.f32.xlu0 %v3021
        %v3023 = vpop.xlane.xlu0 %3022
        %v3024 = vsel %vm2930, %v2927, -inf
        %3025 = vmax.xlane.f32.xlu0 %v3024
        %v3026 = vpop.xlane.xlu0 %3025
        %v3027 = vsub.f32 %v2804, %v2933
        %v3028 = vsub.f32 %v2807, %v2936
        %v3029 = vsub.f32 %v2812, %v2939
        %v3030 = vsub.f32 %v2815, %v2942
        %v3031 = vsub.f32 %v2820, %v2945
        %v3032 = vsub.f32 %v2823, %v2948
        %v3033 = vsub.f32 %v2828, %v2951
        %v3034 = vsub.f32 %v2831, %v2954
        %v3035 = vsub.f32 %v2836, %v2957
        %v3036 = vsub.f32 %v2839, %v2960
        %v3037 = vsub.f32 %v2844, %v2963
        %v3038 = vsub.f32 %v2847, %v2966
        %v3039 = vsub.f32 %v2852, %v2969
        %v3040 = vsub.f32 %v2855, %v2972
        %v3041 = vsub.f32 %v2860, %v2975
        %v3042 = vsub.f32 %v2863, %v2978
        %v3043 = vsub.f32 %v2868, %v2981
        %v3044 = vsub.f32 %v2871, %v2984
        %v3045 = vsub.f32 %v2876, %v2987
        %v3046 = vsub.f32 %v2879, %v2990
        %v3047 = vsub.f32 %v2884, %v2993
        %v3048 = vsub.f32 %v2887, %v2996
        %v3049 = vsub.f32 %v2892, %v2999
        %v3050 = vsub.f32 %v2895, %v3002
        %v3051 = vsub.f32 %v2900, %v3005
        %v3052 = vsub.f32 %v2903, %v3008
        %v3053 = vsub.f32 %v2908, %v3011
        %v3054 = vsub.f32 %v2911, %v3014
        %v3055 = vsub.f32 %v2916, %v3017
        %v3056 = vsub.f32 %v2919, %v3020
        %v3057 = vsub.f32 %v2924, %v3023
        %v3058 = vsub.f32 %v2927, %v3026
        %v3059 = vmul.f32 %v3027, 1.442695
        %v3060 = vpow.pop %v3059
        %v3061 = vmul.f32 %v3028, 1.442695
        %v3062 = vpow.pop %v3061
        %v3063 = vmul.f32 %v3029, 1.442695
        %v3064 = vpow.pop %v3063
        %v3065 = vmul.f32 %v3030, 1.442695
        %v3066 = vpow.pop %v3065
        %v3067 = vmul.f32 %v3031, 1.442695
        %v3068 = vpow.pop %v3067
        %v3069 = vmul.f32 %v3032, 1.442695
        %v3070 = vpow.pop %v3069
        %v3071 = vmul.f32 %v3033, 1.442695
        %v3072 = vpow.pop %v3071
        %v3073 = vmul.f32 %v3034, 1.442695
        %v3074 = vpow.pop %v3073
        %v3075 = vmul.f32 %v3035, 1.442695
        %v3076 = vpow.pop %v3075
        %v3077 = vmul.f32 %v3036, 1.442695
        %v3078 = vpow.pop %v3077
        %v3079 = vmul.f32 %v3037, 1.442695
        %v3080 = vpow.pop %v3079
        %v3081 = vmul.f32 %v3038, 1.442695
        %v3082 = vpow.pop %v3081
        %v3083 = vmul.f32 %v3039, 1.442695
        %v3084 = vpow.pop %v3083
        %v3085 = vmul.f32 %v3040, 1.442695
        %v3086 = vpow.pop %v3085
        %v3087 = vmul.f32 %v3041, 1.442695
        %v3088 = vpow.pop %v3087
        %v3089 = vmul.f32 %v3042, 1.442695
        %v3090 = vpow.pop %v3089
        %v3091 = vmul.f32 %v3043, 1.442695
        %v3092 = vpow.pop %v3091
        %v3093 = vmul.f32 %v3044, 1.442695
        %v3094 = vpow.pop %v3093
        %v3095 = vmul.f32 %v3045, 1.442695
        %v3096 = vpow.pop %v3095
        %v3097 = vmul.f32 %v3046, 1.442695
        %v3098 = vpow.pop %v3097
        %v3099 = vmul.f32 %v3047, 1.442695
        %v3100 = vpow.pop %v3099
        %v3101 = vmul.f32 %v3048, 1.442695
        %v3102 = vpow.pop %v3101
        %v3103 = vmul.f32 %v3049, 1.442695
        %v3104 = vpow.pop %v3103
        %v3105 = vmul.f32 %v3050, 1.442695
        %v3106 = vpow.pop %v3105
        %v3107 = vmul.f32 %v3051, 1.442695
        %v3108 = vpow.pop %v3107
        %v3109 = vmul.f32 %v3052, 1.442695
        %v3110 = vpow.pop %v3109
        %v3111 = vmul.f32 %v3053, 1.442695
        %v3112 = vpow.pop %v3111
        %v3113 = vmul.f32 %v3054, 1.442695
        %v3114 = vpow.pop %v3113
        %v3115 = vmul.f32 %v3055, 1.442695
        %v3116 = vpow.pop %v3115
        %v3117 = vmul.f32 %v3056, 1.442695
        %v3118 = vpow.pop %v3117
        %v3119 = vmul.f32 %v3057, 1.442695
        %v3120 = vpow.pop %v3119
        %v3121 = vmul.f32 %v3058, 1.442695
        %v3122 = vpow.pop %v3121
        %v3123 = vsel %vm2930, %v3060, 0.0
        %3124 = vadd.xlane.f32.xlu0 %v3123
        %v3125 = vpop.xlane.xlu0 %3124
        %v3126 = vsel %vm2930, %v3062, 0.0
        %3127 = vadd.xlane.f32.xlu0 %v3126
        %v3128 = vpop.xlane.xlu0 %3127
        %v3129 = vsel %vm2930, %v3064, 0.0
        %3130 = vadd.xlane.f32.xlu0 %v3129
        %v3131 = vpop.xlane.xlu0 %3130
        %v3132 = vsel %vm2930, %v3066, 0.0
        %3133 = vadd.xlane.f32.xlu0 %v3132
        %v3134 = vpop.xlane.xlu0 %3133
        %v3135 = vsel %vm2930, %v3068, 0.0
        %3136 = vadd.xlane.f32.xlu0 %v3135
        %v3137 = vpop.xlane.xlu0 %3136
        %v3138 = vsel %vm2930, %v3070, 0.0
        %3139 = vadd.xlane.f32.xlu0 %v3138
        %v3140 = vpop.xlane.xlu0 %3139
        %v3141 = vsel %vm2930, %v3072, 0.0
        %3142 = vadd.xlane.f32.xlu0 %v3141
        %v3143 = vpop.xlane.xlu0 %3142
        %v3144 = vsel %vm2930, %v3074, 0.0
        %3145 = vadd.xlane.f32.xlu0 %v3144
        %v3146 = vpop.xlane.xlu0 %3145
        %v3147 = vsel %vm2930, %v3076, 0.0
        %3148 = vadd.xlane.f32.xlu0 %v3147
        %v3149 = vpop.xlane.xlu0 %3148
        %v3150 = vsel %vm2930, %v3078, 0.0
        %3151 = vadd.xlane.f32.xlu0 %v3150
        %v3152 = vpop.xlane.xlu0 %3151
        %v3153 = vsel %vm2930, %v3080, 0.0
        %3154 = vadd.xlane.f32.xlu0 %v3153
        %v3155 = vpop.xlane.xlu0 %3154
        %v3156 = vsel %vm2930, %v3082, 0.0
        %3157 = vadd.xlane.f32.xlu0 %v3156
        %v3158 = vpop.xlane.xlu0 %3157
        %v3159 = vsel %vm2930, %v3084, 0.0
        %3160 = vadd.xlane.f32.xlu0 %v3159
        %v3161 = vpop.xlane.xlu0 %3160
        %v3162 = vsel %vm2930, %v3086, 0.0
        %3163 = vadd.xlane.f32.xlu0 %v3162
        %v3164 = vpop.xlane.xlu0 %3163
        %v3165 = vsel %vm2930, %v3088, 0.0
        %3166 = vadd.xlane.f32.xlu0 %v3165
        %v3167 = vpop.xlane.xlu0 %3166
        %v3168 = vsel %vm2930, %v3090, 0.0
        %3169 = vadd.xlane.f32.xlu0 %v3168
        %v3170 = vpop.xlane.xlu0 %3169
        %v3171 = vsel %vm2930, %v3092, 0.0
        %3172 = vadd.xlane.f32.xlu0 %v3171
        %v3173 = vpop.xlane.xlu0 %3172
        %v3174 = vsel %vm2930, %v3094, 0.0
        %3175 = vadd.xlane.f32.xlu0 %v3174
        %v3176 = vpop.xlane.xlu0 %3175
        %v3177 = vsel %vm2930, %v3096, 0.0
        %3178 = vadd.xlane.f32.xlu0 %v3177
        %v3179 = vpop.xlane.xlu0 %3178
        %v3180 = vsel %vm2930, %v3098, 0.0
        %3181 = vadd.xlane.f32.xlu0 %v3180
        %v3182 = vpop.xlane.xlu0 %3181
        %v3183 = vsel %vm2930, %v3100, 0.0
        %3184 = vadd.xlane.f32.xlu0 %v3183
        %v3185 = vpop.xlane.xlu0 %3184
        %v3186 = vsel %vm2930, %v3102, 0.0
        %3187 = vadd.xlane.f32.xlu0 %v3186
        %v3188 = vpop.xlane.xlu0 %3187
        %v3189 = vsel %vm2930, %v3104, 0.0
        %3190 = vadd.xlane.f32.xlu0 %v3189
        %v3191 = vpop.xlane.xlu0 %3190
        %v3192 = vsel %vm2930, %v3106, 0.0
        %3193 = vadd.xlane.f32.xlu0 %v3192
        %v3194 = vpop.xlane.xlu0 %3193
        %v3195 = vsel %vm2930, %v3108, 0.0
        %3196 = vadd.xlane.f32.xlu0 %v3195
        %v3197 = vpop.xlane.xlu0 %3196
        %v3198 = vsel %vm2930, %v3110, 0.0
        %3199 = vadd.xlane.f32.xlu0 %v3198
        %v3200 = vpop.xlane.xlu0 %3199
        %v3201 = vsel %vm2930, %v3112, 0.0
        %3202 = vadd.xlane.f32.xlu0 %v3201
        %v3203 = vpop.xlane.xlu0 %3202
        %v3204 = vsel %vm2930, %v3114, 0.0
        %3205 = vadd.xlane.f32.xlu0 %v3204
        %v3206 = vpop.xlane.xlu0 %3205
        %v3207 = vsel %vm2930, %v3116, 0.0
        %3208 = vadd.xlane.f32.xlu0 %v3207
        %v3209 = vpop.xlane.xlu0 %3208
        %v3210 = vsel %vm2930, %v3118, 0.0
        %3211 = vadd.xlane.f32.xlu0 %v3210
        %v3212 = vpop.xlane.xlu0 %3211
        %v3213 = vsel %vm2930, %v3120, 0.0
        %3214 = vadd.xlane.f32.xlu0 %v3213
        %v3215 = vpop.xlane.xlu0 %3214
        %v3216 = vsel %vm2930, %v3122, 0.0
        %3217 = vadd.xlane.f32.xlu0 %v3216
        %v3218 = vpop.xlane.xlu0 %3217
        %v3219 = vrcp.pop %v3125
        %v3220 = vrcp.pop %v3128
        %v3221 = vrcp.pop %v3131
        %v3222 = vrcp.pop %v3134
        %v3223 = vrcp.pop %v3137
        %v3224 = vrcp.pop %v3140
        %v3225 = vrcp.pop %v3143
        %v3226 = vrcp.pop %v3146
        %v3227 = vrcp.pop %v3149
        %v3228 = vrcp.pop %v3152
        %v3229 = vrcp.pop %v3155
        %v3230 = vrcp.pop %v3158
        %v3231 = vrcp.pop %v3161
        %v3232 = vrcp.pop %v3164
        %v3233 = vrcp.pop %v3167
        %v3234 = vrcp.pop %v3170
        %v3235 = vrcp.pop %v3173
        %v3236 = vrcp.pop %v3176
        %v3237 = vrcp.pop %v3179
        %v3238 = vrcp.pop %v3182
        %v3239 = vrcp.pop %v3185
        %v3240 = vrcp.pop %v3188
        %v3241 = vrcp.pop %v3191
        %v3242 = vrcp.pop %v3194
        %v3243 = vrcp.pop %v3197
        %v3244 = vrcp.pop %v3200
        %v3245 = vrcp.pop %v3203
        %v3246 = vrcp.pop %v3206
        %v3247 = vrcp.pop %v3209
        %v3248 = vrcp.pop %v3212
        %v3249 = vrcp.pop %v3215
        %v3250 = vrcp.pop %v3218
        %v3251 = vmul.f32 %v3060, %v3219
        %v3252 = vmul.f32 %v3062, %v3220
        %v3253 = vmul.f32 %v3064, %v3221
        %v3254 = vmul.f32 %v3066, %v3222
        %v3255 = vmul.f32 %v3068, %v3223
        %v3256 = vmul.f32 %v3070, %v3224
        %v3257 = vmul.f32 %v3072, %v3225
        %v3258 = vmul.f32 %v3074, %v3226
        %v3259 = vmul.f32 %v3076, %v3227
        %v3260 = vmul.f32 %v3078, %v3228
        %v3261 = vmul.f32 %v3080, %v3229
        %v3262 = vmul.f32 %v3082, %v3230
        %v3263 = vmul.f32 %v3084, %v3231
        %v3264 = vmul.f32 %v3086, %v3232
        %v3265 = vmul.f32 %v3088, %v3233
        %v3266 = vmul.f32 %v3090, %v3234
        %v3267 = vmul.f32 %v3092, %v3235
        %v3268 = vmul.f32 %v3094, %v3236
        %v3269 = vmul.f32 %v3096, %v3237
        %v3270 = vmul.f32 %v3098, %v3238
        %v3271 = vmul.f32 %v3100, %v3239
        %v3272 = vmul.f32 %v3102, %v3240
        %v3273 = vmul.f32 %v3104, %v3241
        %v3274 = vmul.f32 %v3106, %v3242
        %v3275 = vmul.f32 %v3108, %v3243
        %v3276 = vmul.f32 %v3110, %v3244
        %v3277 = vmul.f32 %v3112, %v3245
        %v3278 = vmul.f32 %v3114, %v3246
        %v3279 = vmul.f32 %v3116, %v3247
        %v3280 = vmul.f32 %v3118, %v3248
        %v3281 = vmul.f32 %v3120, %v3249
        %v3282 = vmul.f32 %v3122, %v3250
        %v3283 = vpack.c.bf16 %v3252, %v3251
        %v3284 = vpack.c.bf16 %v3254, %v3253
        %v3285 = vpack.c.bf16 %v3256, %v3255
        %v3286 = vpack.c.bf16 %v3258, %v3257
        %v3287 = vpack.c.bf16 %v3260, %v3259
        %v3288 = vpack.c.bf16 %v3262, %v3261
        %v3289 = vpack.c.bf16 %v3264, %v3263
        %v3290 = vpack.c.bf16 %v3266, %v3265
        %v3291 = vpack.c.bf16 %v3268, %v3267
        %v3292 = vpack.c.bf16 %v3270, %v3269
        %v3293 = vpack.c.bf16 %v3272, %v3271
        %v3294 = vpack.c.bf16 %v3274, %v3273
        %v3295 = vpack.c.bf16 %v3276, %v3275
        %v3296 = vpack.c.bf16 %v3278, %v3277
        %v3297 = vpack.c.bf16 %v3280, %v3279
        %v3298 = vpack.c.bf16 %v3282, %v3281
        %v3299 = vunpack.c.h.b16 %v2710
        %v3300 = vunpack.c.h.b16 %v2711
        %v3301 = vpack.c.b16 %v3300, %v3299
        %v3304 = vsel %vm2930, %v3283, 0
        %v3307 = vsel %vm2930, %v3284, 0
        %v3310 = vsel %vm2930, %v3285, 0
        %v3313 = vsel %vm2930, %v3286, 0
        %v3316 = vsel %vm2930, %v3287, 0
        %v3319 = vsel %vm2930, %v3288, 0
        %v3322 = vsel %vm2930, %v3289, 0
        %v3325 = vsel %vm2930, %v3290, 0
        %v3328 = vsel %vm2930, %v3291, 0
        %v3331 = vsel %vm2930, %v3292, 0
        %v3334 = vsel %vm2930, %v3293, 0
        %v3337 = vsel %vm2930, %v3294, 0
        %v3340 = vsel %vm2930, %v3295, 0
        %v3343 = vsel %vm2930, %v3296, 0
        %v3346 = vsel %vm2930, %v3297, 0
        %v3349 = vsel %vm2930, %v3298, 0
        %3351 = vmatprep.subr.bf16.mxu0 0
        %3352 = vmatpush1.bf16.msra.mxu0 0
        %3353 = vmatprep.subr.bf16.mxu0 0
        %3354 = vmatpush1.bf16.msra.mxu0 0
        %3355 = vmatprep.subr.bf16.mxu0 0
        %3356 = vmatpush1.bf16.msra.mxu0 0
        %3357 = vmatprep.subr.bf16.mxu0 0
        %3358 = vmatpush1.bf16.msra.mxu0 0
        %3359 = vmatprep.subr.bf16.mxu0 0
        %3360 = vmatpush1.bf16.msra.mxu0 0
        %3361 = vmatprep.subr.bf16.mxu0 0
        %3362 = vmatpush1.bf16.msra.mxu0 0
        %3363 = vmatprep.subr.bf16.mxu0 0
        %3364 = vmatpush1.bf16.msra.mxu0 0
        %3365 = vmatprep.subr.bf16.mxu0 0
        %3366 = vmatpush1.bf16.msra.mxu0 %v3301
        %3367 = vmatprep.subr.bf16.mxu0 0
        %3368 = vmatpush2.bf16.msra.mxu0 0
        %3369 = vmatprep.subr.bf16.mxu0 0
        %3370 = vmatpush2.bf16.msra.mxu0 0
        %3371 = vmatprep.subr.bf16.mxu0 0
        %3372 = vmatpush2.bf16.msra.mxu0 0
        %3373 = vmatprep.subr.bf16.mxu0 0
        %3374 = vmatpush2.bf16.msra.mxu0 0
        %3375 = vmatprep.subr.bf16.mxu0 0
        %3376 = vmatpush2.bf16.msra.mxu0 0
        %3377 = vmatprep.subr.bf16.mxu0 0
        %3378 = vmatpush2.bf16.msra.mxu0 0
        %3379 = vmatprep.subr.bf16.mxu0 0
        %3380 = vmatpush2.bf16.msra.mxu0 0
        %3381 = vmatprep.subr.bf16.mxu0 0
        %3382 = vmatpush2.bf16.msra.mxu0 0
        %3383 = vmatprep.mubr.bf16.mxu0 0
        %3384 = vmatmul.mubr.bf16.gmra.mxu0 %v3304
        %v3385 = vpop.f32.mrf.mxu0
        %v3386 = vadd.f32 0.0, %v3385
        %v3387 = vpop.f32.mrf.mxu0
        %v3388 = vpop.f32.mrf.mxu0
        %v3389 = vadd.f32 0.0, %v3388
        %v3390 = vpop.f32.mrf.mxu0
        %3391 = vmatprep.mubr.bf16.mxu0 0
        %3392 = vmatmul.mubr.bf16.gmra.mxu0 %v3307
        %v3393 = vpop.f32.mrf.mxu0
        %v3394 = vadd.f32 0.0, %v3393
        %v3395 = vpop.f32.mrf.mxu0
        %v3396 = vpop.f32.mrf.mxu0
        %v3397 = vadd.f32 0.0, %v3396
        %v3398 = vpop.f32.mrf.mxu0
        %3399 = vmatprep.mubr.bf16.mxu0 0
        %3400 = vmatmul.mubr.bf16.gmra.mxu0 %v3310
        %v3401 = vpop.f32.mrf.mxu0
        %v3402 = vadd.f32 0.0, %v3401
        %v3403 = vpop.f32.mrf.mxu0
        %v3404 = vpop.f32.mrf.mxu0
        %v3405 = vadd.f32 0.0, %v3404
        %v3406 = vpop.f32.mrf.mxu0
        %3407 = vmatprep.mubr.bf16.mxu0 0
        %3408 = vmatmul.mubr.bf16.gmra.mxu0 %v3313
        %v3409 = vpop.f32.mrf.mxu0
        %v3410 = vadd.f32 0.0, %v3409
        %v3411 = vpop.f32.mrf.mxu0
        %v3412 = vpop.f32.mrf.mxu0
        %v3413 = vadd.f32 0.0, %v3412
        %v3414 = vpop.f32.mrf.mxu0
        %3415 = vmatprep.mubr.bf16.mxu0 0
        %3416 = vmatmul.mubr.bf16.gmra.mxu0 %v3316
        %v3417 = vpop.f32.mrf.mxu0
        %v3418 = vadd.f32 0.0, %v3417
        %v3419 = vpop.f32.mrf.mxu0
        %v3420 = vpop.f32.mrf.mxu0
        %v3421 = vadd.f32 0.0, %v3420
        %v3422 = vpop.f32.mrf.mxu0
        %3423 = vmatprep.mubr.bf16.mxu0 0
        %3424 = vmatmul.mubr.bf16.gmra.mxu0 %v3319
        %v3425 = vpop.f32.mrf.mxu0
        %v3426 = vadd.f32 0.0, %v3425
        %v3427 = vpop.f32.mrf.mxu0
        %v3428 = vpop.f32.mrf.mxu0
        %v3429 = vadd.f32 0.0, %v3428
        %v3430 = vpop.f32.mrf.mxu0
        %3431 = vmatprep.mubr.bf16.mxu0 0
        %3432 = vmatmul.mubr.bf16.gmra.mxu0 %v3322
        %v3433 = vpop.f32.mrf.mxu0
        %v3434 = vadd.f32 0.0, %v3433
        %v3435 = vpop.f32.mrf.mxu0
        %v3436 = vpop.f32.mrf.mxu0
        %v3437 = vadd.f32 0.0, %v3436
        %v3438 = vpop.f32.mrf.mxu0
        %3439 = vmatprep.mubr.bf16.mxu0 0
        %3440 = vmatmul.mubr.bf16.gmra.mxu0 %v3325
        %v3441 = vpop.f32.mrf.mxu0
        %v3442 = vadd.f32 0.0, %v3441
        %v3443 = vpop.f32.mrf.mxu0
        %v3444 = vpop.f32.mrf.mxu0
        %v3445 = vadd.f32 0.0, %v3444
        %v3446 = vpop.f32.mrf.mxu0
        %3447 = vmatprep.mubr.bf16.mxu0 0
        %3448 = vmatmul.mubr.bf16.gmra.mxu0 %v3328
        %v3449 = vpop.f32.mrf.mxu0
        %v3450 = vadd.f32 0.0, %v3449
        %v3451 = vpop.f32.mrf.mxu0
        %v3452 = vpop.f32.mrf.mxu0
        %v3453 = vadd.f32 0.0, %v3452
        %v3454 = vpop.f32.mrf.mxu0
        %3455 = vmatprep.mubr.bf16.mxu0 0
        %3456 = vmatmul.mubr.bf16.gmra.mxu0 %v3331
        %v3457 = vpop.f32.mrf.mxu0
        %v3458 = vadd.f32 0.0, %v3457
        %v3459 = vpop.f32.mrf.mxu0
        %v3460 = vpop.f32.mrf.mxu0
        %v3461 = vadd.f32 0.0, %v3460
        %v3462 = vpop.f32.mrf.mxu0
        %3463 = vmatprep.mubr.bf16.mxu0 0
        %3464 = vmatmul.mubr.bf16.gmra.mxu0 %v3334
        %v3465 = vpop.f32.mrf.mxu0
        %v3466 = vadd.f32 0.0, %v3465
        %v3467 = vpop.f32.mrf.mxu0
        %v3468 = vpop.f32.mrf.mxu0
        %v3469 = vadd.f32 0.0, %v3468
        %v3470 = vpop.f32.mrf.mxu0
        %3471 = vmatprep.mubr.bf16.mxu0 0
        %3472 = vmatmul.mubr.bf16.gmra.mxu0 %v3337
        %v3473 = vpop.f32.mrf.mxu0
        %v3474 = vadd.f32 0.0, %v3473
        %v3475 = vpop.f32.mrf.mxu0
        %v3476 = vpop.f32.mrf.mxu0
        %v3477 = vadd.f32 0.0, %v3476
        %v3478 = vpop.f32.mrf.mxu0
        %3479 = vmatprep.mubr.bf16.mxu0 0
        %3480 = vmatmul.mubr.bf16.gmra.mxu0 %v3340
        %v3481 = vpop.f32.mrf.mxu0
        %v3482 = vadd.f32 0.0, %v3481
        %v3483 = vpop.f32.mrf.mxu0
        %v3484 = vpop.f32.mrf.mxu0
        %v3485 = vadd.f32 0.0, %v3484
        %v3486 = vpop.f32.mrf.mxu0
        %3487 = vmatprep.mubr.bf16.mxu0 0
        %3488 = vmatmul.mubr.bf16.gmra.mxu0 %v3343
        %v3489 = vpop.f32.mrf.mxu0
        %v3490 = vadd.f32 0.0, %v3489
        %v3491 = vpop.f32.mrf.mxu0
        %v3492 = vpop.f32.mrf.mxu0
        %v3493 = vadd.f32 0.0, %v3492
        %v3494 = vpop.f32.mrf.mxu0
        %3495 = vmatprep.mubr.bf16.mxu0 0
        %3496 = vmatmul.mubr.bf16.gmra.mxu0 %v3346
        %v3497 = vpop.f32.mrf.mxu0
        %v3498 = vadd.f32 0.0, %v3497
        %v3499 = vpop.f32.mrf.mxu0
        %v3500 = vpop.f32.mrf.mxu0
        %v3501 = vadd.f32 0.0, %v3500
        %v3502 = vpop.f32.mrf.mxu0
        %3503 = vmatprep.mubr.bf16.mxu0 0
        %3504 = vmatmul.mubr.bf16.gmra.mxu0 %v3349
        %v3505 = vpop.f32.mrf.mxu0
        %v3506 = vadd.f32 0.0, %v3505
        %v3507 = vpop.f32.mrf.mxu0
        %v3508 = vpop.f32.mrf.mxu0
        %v3509 = vadd.f32 0.0, %v3508
        %v3510 = vpop.f32.mrf.mxu0
        %3511 = vdwg.mxu0
        %3528 = vrot.lane.b32.xlu0 %v2694, 96
        %v3529 = vpop.permute.xlu0 %3528
        %3530 = vrot.lane.b32.xlu0 %v2695, 96
        %v3531 = vpop.permute.xlu0 %3530
        %3532 = vrot.lane.b32.xlu0 %v2696, 96
        %v3533 = vpop.permute.xlu0 %3532
        %3534 = vrot.lane.b32.xlu0 %v2697, 96
        %v3535 = vpop.permute.xlu0 %3534
        %3536 = vrot.lane.b32.xlu0 %v2698, 96
        %v3537 = vpop.permute.xlu0 %3536
        %3538 = vrot.lane.b32.xlu0 %v2699, 96
        %v3539 = vpop.permute.xlu0 %3538
        %3540 = vrot.lane.b32.xlu0 %v2700, 96
        %v3541 = vpop.permute.xlu0 %3540
        %3542 = vrot.lane.b32.xlu0 %v2701, 96
        %v3543 = vpop.permute.xlu0 %3542
        %3544 = vrot.lane.b32.xlu0 %v2702, 96
        %v3545 = vpop.permute.xlu0 %3544
        %3546 = vrot.lane.b32.xlu0 %v2703, 96
        %v3547 = vpop.permute.xlu0 %3546
        %3548 = vrot.lane.b32.xlu0 %v2704, 96
        %v3549 = vpop.permute.xlu0 %3548
        %3550 = vrot.lane.b32.xlu0 %v2705, 96
        %v3551 = vpop.permute.xlu0 %3550
        %3552 = vrot.lane.b32.xlu0 %v2706, 96
        %v3553 = vpop.permute.xlu0 %3552
        %3554 = vrot.lane.b32.xlu0 %v2707, 96
        %v3555 = vpop.permute.xlu0 %3554
        %3556 = vrot.lane.b32.xlu0 %v2708, 96
        %v3557 = vpop.permute.xlu0 %3556
        %3558 = vrot.lane.b32.xlu0 %v2709, 96
        %v3559 = vpop.permute.xlu0 %3558
        %3560 = vrot.lane.b32.xlu0 %v2716, 96
        %v3561 = vpop.permute.xlu0 %3560
        %v3563 = vsel %vm2717, %v3529, 0
        %v3566 = vsel %vm2717, %v3531, 0
        %v3569 = vsel %vm2717, %v3533, 0
        %v3572 = vsel %vm2717, %v3535, 0
        %v3575 = vsel %vm2717, %v3537, 0
        %v3578 = vsel %vm2717, %v3539, 0
        %v3581 = vsel %vm2717, %v3541, 0
        %v3584 = vsel %vm2717, %v3543, 0
        %v3587 = vsel %vm2717, %v3545, 0
        %v3590 = vsel %vm2717, %v3547, 0
        %v3593 = vsel %vm2717, %v3549, 0
        %v3596 = vsel %vm2717, %v3551, 0
        %v3599 = vsel %vm2717, %v3553, 0
        %v3602 = vsel %vm2717, %v3555, 0
        %v3605 = vsel %vm2717, %v3557, 0
        %v3608 = vsel %vm2717, %v3559, 0
        %v3611 = vsel %vm2717, %v3561, 0
        %3613 = vmatprep.subr.bf16.mxu0 0
        %3614 = vmatpush1.bf16.xpose.msra.mxu0 0
        %3615 = vmatprep.subr.bf16.mxu0 0
        %3616 = vmatpush1.bf16.xpose.msra.mxu0 0
        %3617 = vmatprep.subr.bf16.mxu0 0
        %3618 = vmatpush1.bf16.xpose.msra.mxu0 0
        %3619 = vmatprep.subr.bf16.mxu0 0
        %3620 = vmatpush1.bf16.xpose.msra.mxu0 0
        %3621 = vmatprep.subr.bf16.mxu0 0
        %3622 = vmatpush1.bf16.xpose.msra.mxu0 0
        %3623 = vmatprep.subr.bf16.mxu0 0
        %3624 = vmatpush1.bf16.xpose.msra.mxu0 0
        %3625 = vmatprep.subr.bf16.mxu0 0
        %3626 = vmatpush1.bf16.xpose.msra.mxu0 0
        %3627 = vmatprep.subr.bf16.mxu0 0
        %3628 = vmatpush1.bf16.xpose.msra.mxu0 %v3611
        %3629 = vmatprep.subr.bf16.mxu0 0
        %3630 = vmatpush2.bf16.xpose.msra.mxu0 0
        %3631 = vmatprep.subr.bf16.mxu0 0
        %3632 = vmatpush2.bf16.xpose.msra.mxu0 0
        %3633 = vmatprep.subr.bf16.mxu0 0
        %3634 = vmatpush2.bf16.xpose.msra.mxu0 0
        %3635 = vmatprep.subr.bf16.mxu0 0
        %3636 = vmatpush2.bf16.xpose.msra.mxu0 0
        %3637 = vmatprep.subr.bf16.mxu0 0
        %3638 = vmatpush2.bf16.xpose.msra.mxu0 0
        %3639 = vmatprep.subr.bf16.mxu0 0
        %3640 = vmatpush2.bf16.xpose.msra.mxu0 0
        %3641 = vmatprep.subr.bf16.mxu0 0
        %3642 = vmatpush2.bf16.xpose.msra.mxu0 0
        %3643 = vmatprep.subr.bf16.mxu0 0
        %3644 = vmatpush2.bf16.xpose.msra.mxu0 0
        %3645 = vmatprep.mubr.bf16.mxu0 0
        %3646 = vmatmul.mubr.bf16.gmra.mxu0 %v3563
        %v3647 = vpop.f32.mrf.mxu0
        %v3648 = vadd.f32 0.0, %v3647
        %v3649 = vpop.f32.mrf.mxu0
        %v3650 = vpop.f32.mrf.mxu0
        %v3651 = vadd.f32 0.0, %v3650
        %v3652 = vpop.f32.mrf.mxu0
        %3653 = vmatprep.mubr.bf16.mxu0 0
        %3654 = vmatmul.mubr.bf16.gmra.mxu0 %v3566
        %v3655 = vpop.f32.mrf.mxu0
        %v3656 = vadd.f32 0.0, %v3655
        %v3657 = vpop.f32.mrf.mxu0
        %v3658 = vpop.f32.mrf.mxu0
        %v3659 = vadd.f32 0.0, %v3658
        %v3660 = vpop.f32.mrf.mxu0
        %3661 = vmatprep.mubr.bf16.mxu0 0
        %3662 = vmatmul.mubr.bf16.gmra.mxu0 %v3569
        %v3663 = vpop.f32.mrf.mxu0
        %v3664 = vadd.f32 0.0, %v3663
        %v3665 = vpop.f32.mrf.mxu0
        %v3666 = vpop.f32.mrf.mxu0
        %v3667 = vadd.f32 0.0, %v3666
        %v3668 = vpop.f32.mrf.mxu0
        %3669 = vmatprep.mubr.bf16.mxu0 0
        %3670 = vmatmul.mubr.bf16.gmra.mxu0 %v3572
        %v3671 = vpop.f32.mrf.mxu0
        %v3672 = vadd.f32 0.0, %v3671
        %v3673 = vpop.f32.mrf.mxu0
        %v3674 = vpop.f32.mrf.mxu0
        %v3675 = vadd.f32 0.0, %v3674
        %v3676 = vpop.f32.mrf.mxu0
        %3677 = vmatprep.mubr.bf16.mxu0 0
        %3678 = vmatmul.mubr.bf16.gmra.mxu0 %v3575
        %v3679 = vpop.f32.mrf.mxu0
        %v3680 = vadd.f32 0.0, %v3679
        %v3681 = vpop.f32.mrf.mxu0
        %v3682 = vpop.f32.mrf.mxu0
        %v3683 = vadd.f32 0.0, %v3682
        %v3684 = vpop.f32.mrf.mxu0
        %3685 = vmatprep.mubr.bf16.mxu0 0
        %3686 = vmatmul.mubr.bf16.gmra.mxu0 %v3578
        %v3687 = vpop.f32.mrf.mxu0
        %v3688 = vadd.f32 0.0, %v3687
        %v3689 = vpop.f32.mrf.mxu0
        %v3690 = vpop.f32.mrf.mxu0
        %v3691 = vadd.f32 0.0, %v3690
        %v3692 = vpop.f32.mrf.mxu0
        %3693 = vmatprep.mubr.bf16.mxu0 0
        %3694 = vmatmul.mubr.bf16.gmra.mxu0 %v3581
        %v3695 = vpop.f32.mrf.mxu0
        %v3696 = vadd.f32 0.0, %v3695
        %v3697 = vpop.f32.mrf.mxu0
        %v3698 = vpop.f32.mrf.mxu0
        %v3699 = vadd.f32 0.0, %v3698
        %v3700 = vpop.f32.mrf.mxu0
        %3701 = vmatprep.mubr.bf16.mxu0 0
        %3702 = vmatmul.mubr.bf16.gmra.mxu0 %v3584
        %v3703 = vpop.f32.mrf.mxu0
        %v3704 = vadd.f32 0.0, %v3703
        %v3705 = vpop.f32.mrf.mxu0
        %v3706 = vpop.f32.mrf.mxu0
        %v3707 = vadd.f32 0.0, %v3706
        %v3708 = vpop.f32.mrf.mxu0
        %3709 = vmatprep.mubr.bf16.mxu0 0
        %3710 = vmatmul.mubr.bf16.gmra.mxu0 %v3587
        %v3711 = vpop.f32.mrf.mxu0
        %v3712 = vadd.f32 0.0, %v3711
        %v3713 = vpop.f32.mrf.mxu0
        %v3714 = vpop.f32.mrf.mxu0
        %v3715 = vadd.f32 0.0, %v3714
        %v3716 = vpop.f32.mrf.mxu0
        %3717 = vmatprep.mubr.bf16.mxu0 0
        %3718 = vmatmul.mubr.bf16.gmra.mxu0 %v3590
        %v3719 = vpop.f32.mrf.mxu0
        %v3720 = vadd.f32 0.0, %v3719
        %v3721 = vpop.f32.mrf.mxu0
        %v3722 = vpop.f32.mrf.mxu0
        %v3723 = vadd.f32 0.0, %v3722
        %v3724 = vpop.f32.mrf.mxu0
        %3725 = vmatprep.mubr.bf16.mxu0 0
        %3726 = vmatmul.mubr.bf16.gmra.mxu0 %v3593
        %v3727 = vpop.f32.mrf.mxu0
        %v3728 = vadd.f32 0.0, %v3727
        %v3729 = vpop.f32.mrf.mxu0
        %v3730 = vpop.f32.mrf.mxu0
        %v3731 = vadd.f32 0.0, %v3730
        %v3732 = vpop.f32.mrf.mxu0
        %3733 = vmatprep.mubr.bf16.mxu0 0
        %3734 = vmatmul.mubr.bf16.gmra.mxu0 %v3596
        %v3735 = vpop.f32.mrf.mxu0
        %v3736 = vadd.f32 0.0, %v3735
        %v3737 = vpop.f32.mrf.mxu0
        %v3738 = vpop.f32.mrf.mxu0
        %v3739 = vadd.f32 0.0, %v3738
        %v3740 = vpop.f32.mrf.mxu0
        %3741 = vmatprep.mubr.bf16.mxu0 0
        %3742 = vmatmul.mubr.bf16.gmra.mxu0 %v3599
        %v3743 = vpop.f32.mrf.mxu0
        %v3744 = vadd.f32 0.0, %v3743
        %v3745 = vpop.f32.mrf.mxu0
        %v3746 = vpop.f32.mrf.mxu0
        %v3747 = vadd.f32 0.0, %v3746
        %v3748 = vpop.f32.mrf.mxu0
        %3749 = vmatprep.mubr.bf16.mxu0 0
        %3750 = vmatmul.mubr.bf16.gmra.mxu0 %v3602
        %v3751 = vpop.f32.mrf.mxu0
        %v3752 = vadd.f32 0.0, %v3751
        %v3753 = vpop.f32.mrf.mxu0
        %v3754 = vpop.f32.mrf.mxu0
        %v3755 = vadd.f32 0.0, %v3754
        %v3756 = vpop.f32.mrf.mxu0
        %3757 = vmatprep.mubr.bf16.mxu0 0
        %3758 = vmatmul.mubr.bf16.gmra.mxu0 %v3605
        %v3759 = vpop.f32.mrf.mxu0
        %v3760 = vadd.f32 0.0, %v3759
        %v3761 = vpop.f32.mrf.mxu0
        %v3762 = vpop.f32.mrf.mxu0
        %v3763 = vadd.f32 0.0, %v3762
        %v3764 = vpop.f32.mrf.mxu0
        %3765 = vmatprep.mubr.bf16.mxu0 0
        %3766 = vmatmul.mubr.bf16.gmra.mxu0 %v3608
        %v3767 = vpop.f32.mrf.mxu0
        %v3768 = vadd.f32 0.0, %v3767
        %v3769 = vpop.f32.mrf.mxu0
        %v3770 = vpop.f32.mrf.mxu0
        %v3771 = vadd.f32 0.0, %v3770
        %v3772 = vpop.f32.mrf.mxu0
        %3773 = vdwg.mxu0
        %v3774 = vsel %vm2930, %v3648, -inf
        %3775 = vmax.xlane.f32.xlu0 %v3774
        %v3776 = vpop.xlane.xlu0 %3775
        %v3777 = vsel %vm2930, %v3651, -inf
        %3778 = vmax.xlane.f32.xlu0 %v3777
        %v3779 = vpop.xlane.xlu0 %3778
        %v3780 = vsel %vm2930, %v3656, -inf
        %3781 = vmax.xlane.f32.xlu0 %v3780
        %v3782 = vpop.xlane.xlu0 %3781
        %v3783 = vsel %vm2930, %v3659, -inf
        %3784 = vmax.xlane.f32.xlu0 %v3783
        %v3785 = vpop.xlane.xlu0 %3784
        %v3786 = vsel %vm2930, %v3664, -inf
        %3787 = vmax.xlane.f32.xlu0 %v3786
        %v3788 = vpop.xlane.xlu0 %3787
        %v3789 = vsel %vm2930, %v3667, -inf
        %3790 = vmax.xlane.f32.xlu0 %v3789
        %v3791 = vpop.xlane.xlu0 %3790
        %v3792 = vsel %vm2930, %v3672, -inf
        %3793 = vmax.xlane.f32.xlu0 %v3792
        %v3794 = vpop.xlane.xlu0 %3793
        %v3795 = vsel %vm2930, %v3675, -inf
        %3796 = vmax.xlane.f32.xlu0 %v3795
        %v3797 = vpop.xlane.xlu0 %3796
        %v3798 = vsel %vm2930, %v3680, -inf
        %3799 = vmax.xlane.f32.xlu0 %v3798
        %v3800 = vpop.xlane.xlu0 %3799
        %v3801 = vsel %vm2930, %v3683, -inf
        %3802 = vmax.xlane.f32.xlu0 %v3801
        %v3803 = vpop.xlane.xlu0 %3802
        %v3804 = vsel %vm2930, %v3688, -inf
        %3805 = vmax.xlane.f32.xlu0 %v3804
        %v3806 = vpop.xlane.xlu0 %3805
        %v3807 = vsel %vm2930, %v3691, -inf
        %3808 = vmax.xlane.f32.xlu0 %v3807
        %v3809 = vpop.xlane.xlu0 %3808
        %v3810 = vsel %vm2930, %v3696, -inf
        %3811 = vmax.xlane.f32.xlu0 %v3810
        %v3812 = vpop.xlane.xlu0 %3811
        %v3813 = vsel %vm2930, %v3699, -inf
        %3814 = vmax.xlane.f32.xlu0 %v3813
        %v3815 = vpop.xlane.xlu0 %3814
        %v3816 = vsel %vm2930, %v3704, -inf
        %3817 = vmax.xlane.f32.xlu0 %v3816
        %v3818 = vpop.xlane.xlu0 %3817
        %v3819 = vsel %vm2930, %v3707, -inf
        %3820 = vmax.xlane.f32.xlu0 %v3819
        %v3821 = vpop.xlane.xlu0 %3820
        %v3822 = vsel %vm2930, %v3712, -inf
        %3823 = vmax.xlane.f32.xlu0 %v3822
        %v3824 = vpop.xlane.xlu0 %3823
        %v3825 = vsel %vm2930, %v3715, -inf
        %3826 = vmax.xlane.f32.xlu0 %v3825
        %v3827 = vpop.xlane.xlu0 %3826
        %v3828 = vsel %vm2930, %v3720, -inf
        %3829 = vmax.xlane.f32.xlu0 %v3828
        %v3830 = vpop.xlane.xlu0 %3829
        %v3831 = vsel %vm2930, %v3723, -inf
        %3832 = vmax.xlane.f32.xlu0 %v3831
        %v3833 = vpop.xlane.xlu0 %3832
        %v3834 = vsel %vm2930, %v3728, -inf
        %3835 = vmax.xlane.f32.xlu0 %v3834
        %v3836 = vpop.xlane.xlu0 %3835
        %v3837 = vsel %vm2930, %v3731, -inf
        %3838 = vmax.xlane.f32.xlu0 %v3837
        %v3839 = vpop.xlane.xlu0 %3838
        %v3840 = vsel %vm2930, %v3736, -inf
        %3841 = vmax.xlane.f32.xlu0 %v3840
        %v3842 = vpop.xlane.xlu0 %3841
        %v3843 = vsel %vm2930, %v3739, -inf
        %3844 = vmax.xlane.f32.xlu0 %v3843
        %v3845 = vpop.xlane.xlu0 %3844
        %v3846 = vsel %vm2930, %v3744, -inf
        %3847 = vmax.xlane.f32.xlu0 %v3846
        %v3848 = vpop.xlane.xlu0 %3847
        %v3849 = vsel %vm2930, %v3747, -inf
        %3850 = vmax.xlane.f32.xlu0 %v3849
        %v3851 = vpop.xlane.xlu0 %3850
        %v3852 = vsel %vm2930, %v3752, -inf
        %3853 = vmax.xlane.f32.xlu0 %v3852
        %v3854 = vpop.xlane.xlu0 %3853
        %v3855 = vsel %vm2930, %v3755, -inf
        %3856 = vmax.xlane.f32.xlu0 %v3855
        %v3857 = vpop.xlane.xlu0 %3856
        %v3858 = vsel %vm2930, %v3760, -inf
        %3859 = vmax.xlane.f32.xlu0 %v3858
        %v3860 = vpop.xlane.xlu0 %3859
        %v3861 = vsel %vm2930, %v3763, -inf
        %3862 = vmax.xlane.f32.xlu0 %v3861
        %v3863 = vpop.xlane.xlu0 %3862
        %v3864 = vsel %vm2930, %v3768, -inf
        %3865 = vmax.xlane.f32.xlu0 %v3864
        %v3866 = vpop.xlane.xlu0 %3865
        %v3867 = vsel %vm2930, %v3771, -inf
        %3868 = vmax.xlane.f32.xlu0 %v3867
        %v3869 = vpop.xlane.xlu0 %3868
        %v3870 = vsub.f32 %v3648, %v3776
        %v3871 = vsub.f32 %v3651, %v3779
        %v3872 = vsub.f32 %v3656, %v3782
        %v3873 = vsub.f32 %v3659, %v3785
        %v3874 = vsub.f32 %v3664, %v3788
        %v3875 = vsub.f32 %v3667, %v3791
        %v3876 = vsub.f32 %v3672, %v3794
        %v3877 = vsub.f32 %v3675, %v3797
        %v3878 = vsub.f32 %v3680, %v3800
        %v3879 = vsub.f32 %v3683, %v3803
        %v3880 = vsub.f32 %v3688, %v3806
        %v3881 = vsub.f32 %v3691, %v3809
        %v3882 = vsub.f32 %v3696, %v3812
        %v3883 = vsub.f32 %v3699, %v3815
        %v3884 = vsub.f32 %v3704, %v3818
        %v3885 = vsub.f32 %v3707, %v3821
        %v3886 = vsub.f32 %v3712, %v3824
        %v3887 = vsub.f32 %v3715, %v3827
        %v3888 = vsub.f32 %v3720, %v3830
        %v3889 = vsub.f32 %v3723, %v3833
        %v3890 = vsub.f32 %v3728, %v3836
        %v3891 = vsub.f32 %v3731, %v3839
        %v3892 = vsub.f32 %v3736, %v3842
        %v3893 = vsub.f32 %v3739, %v3845
        %v3894 = vsub.f32 %v3744, %v3848
        %v3895 = vsub.f32 %v3747, %v3851
        %v3896 = vsub.f32 %v3752, %v3854
        %v3897 = vsub.f32 %v3755, %v3857
        %v3898 = vsub.f32 %v3760, %v3860
        %v3899 = vsub.f32 %v3763, %v3863
        %v3900 = vsub.f32 %v3768, %v3866
        %v3901 = vsub.f32 %v3771, %v3869
        %v3902 = vmul.f32 %v3870, 1.442695
        %v3903 = vpow.pop %v3902
        %v3904 = vmul.f32 %v3871, 1.442695
        %v3905 = vpow.pop %v3904
        %v3906 = vmul.f32 %v3872, 1.442695
        %v3907 = vpow.pop %v3906
        %v3908 = vmul.f32 %v3873, 1.442695
        %v3909 = vpow.pop %v3908
        %v3910 = vmul.f32 %v3874, 1.442695
        %v3911 = vpow.pop %v3910
        %v3912 = vmul.f32 %v3875, 1.442695
        %v3913 = vpow.pop %v3912
        %v3914 = vmul.f32 %v3876, 1.442695
        %v3915 = vpow.pop %v3914
        %v3916 = vmul.f32 %v3877, 1.442695
        %v3917 = vpow.pop %v3916
        %v3918 = vmul.f32 %v3878, 1.442695
        %v3919 = vpow.pop %v3918
        %v3920 = vmul.f32 %v3879, 1.442695
        %v3921 = vpow.pop %v3920
        %v3922 = vmul.f32 %v3880, 1.442695
        %v3923 = vpow.pop %v3922
        %v3924 = vmul.f32 %v3881, 1.442695
        %v3925 = vpow.pop %v3924
        %v3926 = vmul.f32 %v3882, 1.442695
        %v3927 = vpow.pop %v3926
        %v3928 = vmul.f32 %v3883, 1.442695
        %v3929 = vpow.pop %v3928
        %v3930 = vmul.f32 %v3884, 1.442695
        %v3931 = vpow.pop %v3930
        %v3932 = vmul.f32 %v3885, 1.442695
        %v3933 = vpow.pop %v3932
        %v3934 = vmul.f32 %v3886, 1.442695
        %v3935 = vpow.pop %v3934
        %v3936 = vmul.f32 %v3887, 1.442695
        %v3937 = vpow.pop %v3936
        %v3938 = vmul.f32 %v3888, 1.442695
        %v3939 = vpow.pop %v3938
        %v3940 = vmul.f32 %v3889, 1.442695
        %v3941 = vpow.pop %v3940
        %v3942 = vmul.f32 %v3890, 1.442695
        %v3943 = vpow.pop %v3942
        %v3944 = vmul.f32 %v3891, 1.442695
        %v3945 = vpow.pop %v3944
        %v3946 = vmul.f32 %v3892, 1.442695
        %v3947 = vpow.pop %v3946
        %v3948 = vmul.f32 %v3893, 1.442695
        %v3949 = vpow.pop %v3948
        %v3950 = vmul.f32 %v3894, 1.442695
        %v3951 = vpow.pop %v3950
        %v3952 = vmul.f32 %v3895, 1.442695
        %v3953 = vpow.pop %v3952
        %v3954 = vmul.f32 %v3896, 1.442695
        %v3955 = vpow.pop %v3954
        %v3956 = vmul.f32 %v3897, 1.442695
        %v3957 = vpow.pop %v3956
        %v3958 = vmul.f32 %v3898, 1.442695
        %v3959 = vpow.pop %v3958
        %v3960 = vmul.f32 %v3899, 1.442695
        %v3961 = vpow.pop %v3960
        %v3962 = vmul.f32 %v3900, 1.442695
        %v3963 = vpow.pop %v3962
        %v3964 = vmul.f32 %v3901, 1.442695
        %v3965 = vpow.pop %v3964
        %v3966 = vsel %vm2930, %v3903, 0.0
        %3967 = vadd.xlane.f32.xlu0 %v3966
        %v3968 = vpop.xlane.xlu0 %3967
        %v3969 = vsel %vm2930, %v3905, 0.0
        %3970 = vadd.xlane.f32.xlu0 %v3969
        %v3971 = vpop.xlane.xlu0 %3970
        %v3972 = vsel %vm2930, %v3907, 0.0
        %3973 = vadd.xlane.f32.xlu0 %v3972
        %v3974 = vpop.xlane.xlu0 %3973
        %v3975 = vsel %vm2930, %v3909, 0.0
        %3976 = vadd.xlane.f32.xlu0 %v3975
        %v3977 = vpop.xlane.xlu0 %3976
        %v3978 = vsel %vm2930, %v3911, 0.0
        %3979 = vadd.xlane.f32.xlu0 %v3978
        %v3980 = vpop.xlane.xlu0 %3979
        %v3981 = vsel %vm2930, %v3913, 0.0
        %3982 = vadd.xlane.f32.xlu0 %v3981
        %v3983 = vpop.xlane.xlu0 %3982
        %v3984 = vsel %vm2930, %v3915, 0.0
        %3985 = vadd.xlane.f32.xlu0 %v3984
        %v3986 = vpop.xlane.xlu0 %3985
        %v3987 = vsel %vm2930, %v3917, 0.0
        %3988 = vadd.xlane.f32.xlu0 %v3987
        %v3989 = vpop.xlane.xlu0 %3988
        %v3990 = vsel %vm2930, %v3919, 0.0
        %3991 = vadd.xlane.f32.xlu0 %v3990
        %v3992 = vpop.xlane.xlu0 %3991
        %v3993 = vsel %vm2930, %v3921, 0.0
        %3994 = vadd.xlane.f32.xlu0 %v3993
        %v3995 = vpop.xlane.xlu0 %3994
        %v3996 = vsel %vm2930, %v3923, 0.0
        %3997 = vadd.xlane.f32.xlu0 %v3996
        %v3998 = vpop.xlane.xlu0 %3997
        %v3999 = vsel %vm2930, %v3925, 0.0
        %4000 = vadd.xlane.f32.xlu0 %v3999
        %v4001 = vpop.xlane.xlu0 %4000
        %v4002 = vsel %vm2930, %v3927, 0.0
        %4003 = vadd.xlane.f32.xlu0 %v4002
        %v4004 = vpop.xlane.xlu0 %4003
        %v4005 = vsel %vm2930, %v3929, 0.0
        %4006 = vadd.xlane.f32.xlu0 %v4005
        %v4007 = vpop.xlane.xlu0 %4006
        %v4008 = vsel %vm2930, %v3931, 0.0
        %4009 = vadd.xlane.f32.xlu0 %v4008
        %v4010 = vpop.xlane.xlu0 %4009
        %v4011 = vsel %vm2930, %v3933, 0.0
        %4012 = vadd.xlane.f32.xlu0 %v4011
        %v4013 = vpop.xlane.xlu0 %4012
        %v4014 = vsel %vm2930, %v3935, 0.0
        %4015 = vadd.xlane.f32.xlu0 %v4014
        %v4016 = vpop.xlane.xlu0 %4015
        %v4017 = vsel %vm2930, %v3937, 0.0
        %4018 = vadd.xlane.f32.xlu0 %v4017
        %v4019 = vpop.xlane.xlu0 %4018
        %v4020 = vsel %vm2930, %v3939, 0.0
        %4021 = vadd.xlane.f32.xlu0 %v4020
        %v4022 = vpop.xlane.xlu0 %4021
        %v4023 = vsel %vm2930, %v3941, 0.0
        %4024 = vadd.xlane.f32.xlu0 %v4023
        %v4025 = vpop.xlane.xlu0 %4024
        %v4026 = vsel %vm2930, %v3943, 0.0
        %4027 = vadd.xlane.f32.xlu0 %v4026
        %v4028 = vpop.xlane.xlu0 %4027
        %v4029 = vsel %vm2930, %v3945, 0.0
        %4030 = vadd.xlane.f32.xlu0 %v4029
        %v4031 = vpop.xlane.xlu0 %4030
        %v4032 = vsel %vm2930, %v3947, 0.0
        %4033 = vadd.xlane.f32.xlu0 %v4032
        %v4034 = vpop.xlane.xlu0 %4033
        %v4035 = vsel %vm2930, %v3949, 0.0
        %4036 = vadd.xlane.f32.xlu0 %v4035
        %v4037 = vpop.xlane.xlu0 %4036
        %v4038 = vsel %vm2930, %v3951, 0.0
        %4039 = vadd.xlane.f32.xlu0 %v4038
        %v4040 = vpop.xlane.xlu0 %4039
        %v4041 = vsel %vm2930, %v3953, 0.0
        %4042 = vadd.xlane.f32.xlu0 %v4041
        %v4043 = vpop.xlane.xlu0 %4042
        %v4044 = vsel %vm2930, %v3955, 0.0
        %4045 = vadd.xlane.f32.xlu0 %v4044
        %v4046 = vpop.xlane.xlu0 %4045
        %v4047 = vsel %vm2930, %v3957, 0.0
        %4048 = vadd.xlane.f32.xlu0 %v4047
        %v4049 = vpop.xlane.xlu0 %4048
        %v4050 = vsel %vm2930, %v3959, 0.0
        %4051 = vadd.xlane.f32.xlu0 %v4050
        %v4052 = vpop.xlane.xlu0 %4051
        %v4053 = vsel %vm2930, %v3961, 0.0
        %4054 = vadd.xlane.f32.xlu0 %v4053
        %v4055 = vpop.xlane.xlu0 %4054
        %v4056 = vsel %vm2930, %v3963, 0.0
        %4057 = vadd.xlane.f32.xlu0 %v4056
        %v4058 = vpop.xlane.xlu0 %4057
        %v4059 = vsel %vm2930, %v3965, 0.0
        %4060 = vadd.xlane.f32.xlu0 %v4059
        %v4061 = vpop.xlane.xlu0 %4060
        %v4062 = vrcp.pop %v3968
        %v4063 = vrcp.pop %v3971
        %v4064 = vrcp.pop %v3974
        %v4065 = vrcp.pop %v3977
        %v4066 = vrcp.pop %v3980
        %v4067 = vrcp.pop %v3983
        %v4068 = vrcp.pop %v3986
        %v4069 = vrcp.pop %v3989
        %v4070 = vrcp.pop %v3992
        %v4071 = vrcp.pop %v3995
        %v4072 = vrcp.pop %v3998
        %v4073 = vrcp.pop %v4001
        %v4074 = vrcp.pop %v4004
        %v4075 = vrcp.pop %v4007
        %v4076 = vrcp.pop %v4010
        %v4077 = vrcp.pop %v4013
        %v4078 = vrcp.pop %v4016
        %v4079 = vrcp.pop %v4019
        %v4080 = vrcp.pop %v4022
        %v4081 = vrcp.pop %v4025
        %v4082 = vrcp.pop %v4028
        %v4083 = vrcp.pop %v4031
        %v4084 = vrcp.pop %v4034
        %v4085 = vrcp.pop %v4037
        %v4086 = vrcp.pop %v4040
        %v4087 = vrcp.pop %v4043
        %v4088 = vrcp.pop %v4046
        %v4089 = vrcp.pop %v4049
        %v4090 = vrcp.pop %v4052
        %v4091 = vrcp.pop %v4055
        %v4092 = vrcp.pop %v4058
        %v4093 = vrcp.pop %v4061
        %v4094 = vmul.f32 %v3903, %v4062
        %v4095 = vmul.f32 %v3905, %v4063
        %v4096 = vmul.f32 %v3907, %v4064
        %v4097 = vmul.f32 %v3909, %v4065
        %v4098 = vmul.f32 %v3911, %v4066
        %v4099 = vmul.f32 %v3913, %v4067
        %v4100 = vmul.f32 %v3915, %v4068
        %v4101 = vmul.f32 %v3917, %v4069
        %v4102 = vmul.f32 %v3919, %v4070
        %v4103 = vmul.f32 %v3921, %v4071
        %v4104 = vmul.f32 %v3923, %v4072
        %v4105 = vmul.f32 %v3925, %v4073
        %v4106 = vmul.f32 %v3927, %v4074
        %v4107 = vmul.f32 %v3929, %v4075
        %v4108 = vmul.f32 %v3931, %v4076
        %v4109 = vmul.f32 %v3933, %v4077
        %v4110 = vmul.f32 %v3935, %v4078
        %v4111 = vmul.f32 %v3937, %v4079
        %v4112 = vmul.f32 %v3939, %v4080
        %v4113 = vmul.f32 %v3941, %v4081
        %v4114 = vmul.f32 %v3943, %v4082
        %v4115 = vmul.f32 %v3945, %v4083
        %v4116 = vmul.f32 %v3947, %v4084
        %v4117 = vmul.f32 %v3949, %v4085
        %v4118 = vmul.f32 %v3951, %v4086
        %v4119 = vmul.f32 %v3953, %v4087
        %v4120 = vmul.f32 %v3955, %v4088
        %v4121 = vmul.f32 %v3957, %v4089
        %v4122 = vmul.f32 %v3959, %v4090
        %v4123 = vmul.f32 %v3961, %v4091
        %v4124 = vmul.f32 %v3963, %v4092
        %v4125 = vmul.f32 %v3965, %v4093
        %v4126 = vpack.c.bf16 %v4095, %v4094
        %v4127 = vpack.c.bf16 %v4097, %v4096
        %v4128 = vpack.c.bf16 %v4099, %v4098
        %v4129 = vpack.c.bf16 %v4101, %v4100
        %v4130 = vpack.c.bf16 %v4103, %v4102
        %v4131 = vpack.c.bf16 %v4105, %v4104
        %v4132 = vpack.c.bf16 %v4107, %v4106
        %v4133 = vpack.c.bf16 %v4109, %v4108
        %v4134 = vpack.c.bf16 %v4111, %v4110
        %v4135 = vpack.c.bf16 %v4113, %v4112
        %v4136 = vpack.c.bf16 %v4115, %v4114
        %v4137 = vpack.c.bf16 %v4117, %v4116
        %v4138 = vpack.c.bf16 %v4119, %v4118
        %v4139 = vpack.c.bf16 %v4121, %v4120
        %v4140 = vpack.c.bf16 %v4123, %v4122
        %v4141 = vpack.c.bf16 %v4125, %v4124
        %4142 = vrot.lane.b32.xlu0 %v3301, 96
        %v4143 = vpop.permute.xlu0 %4142
        %v4146 = vsel %vm2930, %v4126, 0
        %v4149 = vsel %vm2930, %v4127, 0
        %v4152 = vsel %vm2930, %v4128, 0
        %v4155 = vsel %vm2930, %v4129, 0
        %v4158 = vsel %vm2930, %v4130, 0
        %v4161 = vsel %vm2930, %v4131, 0
        %v4164 = vsel %vm2930, %v4132, 0
        %v4167 = vsel %vm2930, %v4133, 0
        %v4170 = vsel %vm2930, %v4134, 0
        %v4173 = vsel %vm2930, %v4135, 0
        %v4176 = vsel %vm2930, %v4136, 0
        %v4179 = vsel %vm2930, %v4137, 0
        %v4182 = vsel %vm2930, %v4138, 0
        %v4185 = vsel %vm2930, %v4139, 0
        %v4188 = vsel %vm2930, %v4140, 0
        %v4191 = vsel %vm2930, %v4141, 0
        %4193 = vmatprep.subr.bf16.mxu0 0
        %4194 = vmatpush1.bf16.msra.mxu0 0
        %4195 = vmatprep.subr.bf16.mxu0 0
        %4196 = vmatpush1.bf16.msra.mxu0 0
        %4197 = vmatprep.subr.bf16.mxu0 0
        %4198 = vmatpush1.bf16.msra.mxu0 0
        %4199 = vmatprep.subr.bf16.mxu0 0
        %4200 = vmatpush1.bf16.msra.mxu0 0
        %4201 = vmatprep.subr.bf16.mxu0 0
        %4202 = vmatpush1.bf16.msra.mxu0 0
        %4203 = vmatprep.subr.bf16.mxu0 0
        %4204 = vmatpush1.bf16.msra.mxu0 0
        %4205 = vmatprep.subr.bf16.mxu0 0
        %4206 = vmatpush1.bf16.msra.mxu0 0
        %4207 = vmatprep.subr.bf16.mxu0 0
        %4208 = vmatpush1.bf16.msra.mxu0 %v4143
        %4209 = vmatprep.subr.bf16.mxu0 0
        %4210 = vmatpush2.bf16.msra.mxu0 0
        %4211 = vmatprep.subr.bf16.mxu0 0
        %4212 = vmatpush2.bf16.msra.mxu0 0
        %4213 = vmatprep.subr.bf16.mxu0 0
        %4214 = vmatpush2.bf16.msra.mxu0 0
        %4215 = vmatprep.subr.bf16.mxu0 0
        %4216 = vmatpush2.bf16.msra.mxu0 0
        %4217 = vmatprep.subr.bf16.mxu0 0
        %4218 = vmatpush2.bf16.msra.mxu0 0
        %4219 = vmatprep.subr.bf16.mxu0 0
        %4220 = vmatpush2.bf16.msra.mxu0 0
        %4221 = vmatprep.subr.bf16.mxu0 0
        %4222 = vmatpush2.bf16.msra.mxu0 0
        %4223 = vmatprep.subr.bf16.mxu0 0
        %4224 = vmatpush2.bf16.msra.mxu0 0
        %4225 = vmatprep.mubr.bf16.mxu0 0
        %4226 = vmatmul.mubr.bf16.gmra.mxu0 %v4146
        %v4227 = vpop.f32.mrf.mxu0
        %v4228 = vadd.f32 0.0, %v4227
        %v4229 = vpop.f32.mrf.mxu0
        %v4230 = vpop.f32.mrf.mxu0
        %v4231 = vadd.f32 0.0, %v4230
        %v4232 = vpop.f32.mrf.mxu0
        %4233 = vmatprep.mubr.bf16.mxu0 0
        %4234 = vmatmul.mubr.bf16.gmra.mxu0 %v4149
        %v4235 = vpop.f32.mrf.mxu0
        %v4236 = vadd.f32 0.0, %v4235
        %v4237 = vpop.f32.mrf.mxu0
        %v4238 = vpop.f32.mrf.mxu0
        %v4239 = vadd.f32 0.0, %v4238
        %v4240 = vpop.f32.mrf.mxu0
        %4241 = vmatprep.mubr.bf16.mxu0 0
        %4242 = vmatmul.mubr.bf16.gmra.mxu0 %v4152
        %v4243 = vpop.f32.mrf.mxu0
        %v4244 = vadd.f32 0.0, %v4243
        %v4245 = vpop.f32.mrf.mxu0
        %v4246 = vpop.f32.mrf.mxu0
        %v4247 = vadd.f32 0.0, %v4246
        %v4248 = vpop.f32.mrf.mxu0
        %4249 = vmatprep.mubr.bf16.mxu0 0
        %4250 = vmatmul.mubr.bf16.gmra.mxu0 %v4155
        %v4251 = vpop.f32.mrf.mxu0
        %v4252 = vadd.f32 0.0, %v4251
        %v4253 = vpop.f32.mrf.mxu0
        %v4254 = vpop.f32.mrf.mxu0
        %v4255 = vadd.f32 0.0, %v4254
        %v4256 = vpop.f32.mrf.mxu0
        %4257 = vmatprep.mubr.bf16.mxu0 0
        %4258 = vmatmul.mubr.bf16.gmra.mxu0 %v4158
        %v4259 = vpop.f32.mrf.mxu0
        %v4260 = vadd.f32 0.0, %v4259
        %v4261 = vpop.f32.mrf.mxu0
        %v4262 = vpop.f32.mrf.mxu0
        %v4263 = vadd.f32 0.0, %v4262
        %v4264 = vpop.f32.mrf.mxu0
        %4265 = vmatprep.mubr.bf16.mxu0 0
        %4266 = vmatmul.mubr.bf16.gmra.mxu0 %v4161
        %v4267 = vpop.f32.mrf.mxu0
        %v4268 = vadd.f32 0.0, %v4267
        %v4269 = vpop.f32.mrf.mxu0
        %v4270 = vpop.f32.mrf.mxu0
        %v4271 = vadd.f32 0.0, %v4270
        %v4272 = vpop.f32.mrf.mxu0
        %4273 = vmatprep.mubr.bf16.mxu0 0
        %4274 = vmatmul.mubr.bf16.gmra.mxu0 %v4164
        %v4275 = vpop.f32.mrf.mxu0
        %v4276 = vadd.f32 0.0, %v4275
        %v4277 = vpop.f32.mrf.mxu0
        %v4278 = vpop.f32.mrf.mxu0
        %v4279 = vadd.f32 0.0, %v4278
        %v4280 = vpop.f32.mrf.mxu0
        %4281 = vmatprep.mubr.bf16.mxu0 0
        %4282 = vmatmul.mubr.bf16.gmra.mxu0 %v4167
        %v4283 = vpop.f32.mrf.mxu0
        %v4284 = vadd.f32 0.0, %v4283
        %v4285 = vpop.f32.mrf.mxu0
        %v4286 = vpop.f32.mrf.mxu0
        %v4287 = vadd.f32 0.0, %v4286
        %v4288 = vpop.f32.mrf.mxu0
        %4289 = vmatprep.mubr.bf16.mxu0 0
        %4290 = vmatmul.mubr.bf16.gmra.mxu0 %v4170
        %v4291 = vpop.f32.mrf.mxu0
        %v4292 = vadd.f32 0.0, %v4291
        %v4293 = vpop.f32.mrf.mxu0
        %v4294 = vpop.f32.mrf.mxu0
        %v4295 = vadd.f32 0.0, %v4294
        %v4296 = vpop.f32.mrf.mxu0
        %4297 = vmatprep.mubr.bf16.mxu0 0
        %4298 = vmatmul.mubr.bf16.gmra.mxu0 %v4173
        %v4299 = vpop.f32.mrf.mxu0
        %v4300 = vadd.f32 0.0, %v4299
        %v4301 = vpop.f32.mrf.mxu0
        %v4302 = vpop.f32.mrf.mxu0
        %v4303 = vadd.f32 0.0, %v4302
        %v4304 = vpop.f32.mrf.mxu0
        %4305 = vmatprep.mubr.bf16.mxu0 0
        %4306 = vmatmul.mubr.bf16.gmra.mxu0 %v4176
        %v4307 = vpop.f32.mrf.mxu0
        %v4308 = vadd.f32 0.0, %v4307
        %v4309 = vpop.f32.mrf.mxu0
        %v4310 = vpop.f32.mrf.mxu0
        %v4311 = vadd.f32 0.0, %v4310
        %v4312 = vpop.f32.mrf.mxu0
        %4313 = vmatprep.mubr.bf16.mxu0 0
        %4314 = vmatmul.mubr.bf16.gmra.mxu0 %v4179
        %v4315 = vpop.f32.mrf.mxu0
        %v4316 = vadd.f32 0.0, %v4315
        %v4317 = vpop.f32.mrf.mxu0
        %v4318 = vpop.f32.mrf.mxu0
        %v4319 = vadd.f32 0.0, %v4318
        %v4320 = vpop.f32.mrf.mxu0
        %4321 = vmatprep.mubr.bf16.mxu0 0
        %4322 = vmatmul.mubr.bf16.gmra.mxu0 %v4182
        %v4323 = vpop.f32.mrf.mxu0
        %v4324 = vadd.f32 0.0, %v4323
        %v4325 = vpop.f32.mrf.mxu0
        %v4326 = vpop.f32.mrf.mxu0
        %v4327 = vadd.f32 0.0, %v4326
        %v4328 = vpop.f32.mrf.mxu0
        %4329 = vmatprep.mubr.bf16.mxu0 0
        %4330 = vmatmul.mubr.bf16.gmra.mxu0 %v4185
        %v4331 = vpop.f32.mrf.mxu0
        %v4332 = vadd.f32 0.0, %v4331
        %v4333 = vpop.f32.mrf.mxu0
        %v4334 = vpop.f32.mrf.mxu0
        %v4335 = vadd.f32 0.0, %v4334
        %v4336 = vpop.f32.mrf.mxu0
        %4337 = vmatprep.mubr.bf16.mxu0 0
        %4338 = vmatmul.mubr.bf16.gmra.mxu0 %v4188
        %v4339 = vpop.f32.mrf.mxu0
        %v4340 = vadd.f32 0.0, %v4339
        %v4341 = vpop.f32.mrf.mxu0
        %v4342 = vpop.f32.mrf.mxu0
        %v4343 = vadd.f32 0.0, %v4342
        %v4344 = vpop.f32.mrf.mxu0
        %4345 = vmatprep.mubr.bf16.mxu0 0
        %4346 = vmatmul.mubr.bf16.gmra.mxu0 %v4191
        %v4347 = vpop.f32.mrf.mxu0
        %v4348 = vadd.f32 0.0, %v4347
        %v4349 = vpop.f32.mrf.mxu0
        %v4350 = vpop.f32.mrf.mxu0
        %v4351 = vadd.f32 0.0, %v4350
        %v4352 = vpop.f32.mrf.mxu0
        %4353 = vdwg.mxu0
        %4354 = vrot.lane.b32.xlu0 %v2694, 64
        %v4355 = vpop.permute.xlu0 %4354
        %4356 = vrot.lane.b32.xlu0 %v2695, 64
        %v4357 = vpop.permute.xlu0 %4356
        %4358 = vrot.lane.b32.xlu0 %v2696, 64
        %v4359 = vpop.permute.xlu0 %4358
        %4360 = vrot.lane.b32.xlu0 %v2697, 64
        %v4361 = vpop.permute.xlu0 %4360
        %4362 = vrot.lane.b32.xlu0 %v2698, 64
        %v4363 = vpop.permute.xlu0 %4362
        %4364 = vrot.lane.b32.xlu0 %v2699, 64
        %v4365 = vpop.permute.xlu0 %4364
        %4366 = vrot.lane.b32.xlu0 %v2700, 64
        %v4367 = vpop.permute.xlu0 %4366
        %4368 = vrot.lane.b32.xlu0 %v2701, 64
        %v4369 = vpop.permute.xlu0 %4368
        %4370 = vrot.lane.b32.xlu0 %v2702, 64
        %v4371 = vpop.permute.xlu0 %4370
        %4372 = vrot.lane.b32.xlu0 %v2703, 64
        %v4373 = vpop.permute.xlu0 %4372
        %4374 = vrot.lane.b32.xlu0 %v2704, 64
        %v4375 = vpop.permute.xlu0 %4374
        %4376 = vrot.lane.b32.xlu0 %v2705, 64
        %v4377 = vpop.permute.xlu0 %4376
        %4378 = vrot.lane.b32.xlu0 %v2706, 64
        %v4379 = vpop.permute.xlu0 %4378
        %4380 = vrot.lane.b32.xlu0 %v2707, 64
        %v4381 = vpop.permute.xlu0 %4380
        %4382 = vrot.lane.b32.xlu0 %v2708, 64
        %v4383 = vpop.permute.xlu0 %4382
        %4384 = vrot.lane.b32.xlu0 %v2709, 64
        %v4385 = vpop.permute.xlu0 %4384
        %4386 = vrot.lane.b32.xlu0 %v2716, 64
        %v4387 = vpop.permute.xlu0 %4386
        %v4389 = vsel %vm2717, %v4355, 0
        %v4392 = vsel %vm2717, %v4357, 0
        %v4395 = vsel %vm2717, %v4359, 0
        %v4398 = vsel %vm2717, %v4361, 0
        %v4401 = vsel %vm2717, %v4363, 0
        %v4404 = vsel %vm2717, %v4365, 0
        %v4407 = vsel %vm2717, %v4367, 0
        %v4410 = vsel %vm2717, %v4369, 0
        %v4413 = vsel %vm2717, %v4371, 0
        %v4416 = vsel %vm2717, %v4373, 0
        %v4419 = vsel %vm2717, %v4375, 0
        %v4422 = vsel %vm2717, %v4377, 0
        %v4425 = vsel %vm2717, %v4379, 0
        %v4428 = vsel %vm2717, %v4381, 0
        %v4431 = vsel %vm2717, %v4383, 0
        %v4434 = vsel %vm2717, %v4385, 0
        %v4437 = vsel %vm2717, %v4387, 0
        %4439 = vmatprep.subr.bf16.mxu0 0
        %4440 = vmatpush1.bf16.xpose.msra.mxu0 0
        %4441 = vmatprep.subr.bf16.mxu0 0
        %4442 = vmatpush1.bf16.xpose.msra.mxu0 0
        %4443 = vmatprep.subr.bf16.mxu0 0
        %4444 = vmatpush1.bf16.xpose.msra.mxu0 0
        %4445 = vmatprep.subr.bf16.mxu0 0
        %4446 = vmatpush1.bf16.xpose.msra.mxu0 0
        %4447 = vmatprep.subr.bf16.mxu0 0
        %4448 = vmatpush1.bf16.xpose.msra.mxu0 0
        %4449 = vmatprep.subr.bf16.mxu0 0
        %4450 = vmatpush1.bf16.xpose.msra.mxu0 0
        %4451 = vmatprep.subr.bf16.mxu0 0
        %4452 = vmatpush1.bf16.xpose.msra.mxu0 0
        %4453 = vmatprep.subr.bf16.mxu0 0
        %4454 = vmatpush1.bf16.xpose.msra.mxu0 %v4437
        %4455 = vmatprep.subr.bf16.mxu0 0
        %4456 = vmatpush2.bf16.xpose.msra.mxu0 0
        %4457 = vmatprep.subr.bf16.mxu0 0
        %4458 = vmatpush2.bf16.xpose.msra.mxu0 0
        %4459 = vmatprep.subr.bf16.mxu0 0
        %4460 = vmatpush2.bf16.xpose.msra.mxu0 0
        %4461 = vmatprep.subr.bf16.mxu0 0
        %4462 = vmatpush2.bf16.xpose.msra.mxu0 0
        %4463 = vmatprep.subr.bf16.mxu0 0
        %4464 = vmatpush2.bf16.xpose.msra.mxu0 0
        %4465 = vmatprep.subr.bf16.mxu0 0
        %4466 = vmatpush2.bf16.xpose.msra.mxu0 0
        %4467 = vmatprep.subr.bf16.mxu0 0
        %4468 = vmatpush2.bf16.xpose.msra.mxu0 0
        %4469 = vmatprep.subr.bf16.mxu0 0
        %4470 = vmatpush2.bf16.xpose.msra.mxu0 0
        %4471 = vmatprep.mubr.bf16.mxu0 0
        %4472 = vmatmul.mubr.bf16.gmra.mxu0 %v4389
        %v4473 = vpop.f32.mrf.mxu0
        %v4474 = vadd.f32 0.0, %v4473
        %v4475 = vpop.f32.mrf.mxu0
        %v4476 = vpop.f32.mrf.mxu0
        %v4477 = vadd.f32 0.0, %v4476
        %v4478 = vpop.f32.mrf.mxu0
        %4479 = vmatprep.mubr.bf16.mxu0 0
        %4480 = vmatmul.mubr.bf16.gmra.mxu0 %v4392
        %v4481 = vpop.f32.mrf.mxu0
        %v4482 = vadd.f32 0.0, %v4481
        %v4483 = vpop.f32.mrf.mxu0
        %v4484 = vpop.f32.mrf.mxu0
        %v4485 = vadd.f32 0.0, %v4484
        %v4486 = vpop.f32.mrf.mxu0
        %4487 = vmatprep.mubr.bf16.mxu0 0
        %4488 = vmatmul.mubr.bf16.gmra.mxu0 %v4395
        %v4489 = vpop.f32.mrf.mxu0
        %v4490 = vadd.f32 0.0, %v4489
        %v4491 = vpop.f32.mrf.mxu0
        %v4492 = vpop.f32.mrf.mxu0
        %v4493 = vadd.f32 0.0, %v4492
        %v4494 = vpop.f32.mrf.mxu0
        %4495 = vmatprep.mubr.bf16.mxu0 0
        %4496 = vmatmul.mubr.bf16.gmra.mxu0 %v4398
        %v4497 = vpop.f32.mrf.mxu0
        %v4498 = vadd.f32 0.0, %v4497
        %v4499 = vpop.f32.mrf.mxu0
        %v4500 = vpop.f32.mrf.mxu0
        %v4501 = vadd.f32 0.0, %v4500
        %v4502 = vpop.f32.mrf.mxu0
        %4503 = vmatprep.mubr.bf16.mxu0 0
        %4504 = vmatmul.mubr.bf16.gmra.mxu0 %v4401
        %v4505 = vpop.f32.mrf.mxu0
        %v4506 = vadd.f32 0.0, %v4505
        %v4507 = vpop.f32.mrf.mxu0
        %v4508 = vpop.f32.mrf.mxu0
        %v4509 = vadd.f32 0.0, %v4508
        %v4510 = vpop.f32.mrf.mxu0
        %4511 = vmatprep.mubr.bf16.mxu0 0
        %4512 = vmatmul.mubr.bf16.gmra.mxu0 %v4404
        %v4513 = vpop.f32.mrf.mxu0
        %v4514 = vadd.f32 0.0, %v4513
        %v4515 = vpop.f32.mrf.mxu0
        %v4516 = vpop.f32.mrf.mxu0
        %v4517 = vadd.f32 0.0, %v4516
        %v4518 = vpop.f32.mrf.mxu0
        %4519 = vmatprep.mubr.bf16.mxu0 0
        %4520 = vmatmul.mubr.bf16.gmra.mxu0 %v4407
        %v4521 = vpop.f32.mrf.mxu0
        %v4522 = vadd.f32 0.0, %v4521
        %v4523 = vpop.f32.mrf.mxu0
        %v4524 = vpop.f32.mrf.mxu0
        %v4525 = vadd.f32 0.0, %v4524
        %v4526 = vpop.f32.mrf.mxu0
        %4527 = vmatprep.mubr.bf16.mxu0 0
        %4528 = vmatmul.mubr.bf16.gmra.mxu0 %v4410
        %v4529 = vpop.f32.mrf.mxu0
        %v4530 = vadd.f32 0.0, %v4529
        %v4531 = vpop.f32.mrf.mxu0
        %v4532 = vpop.f32.mrf.mxu0
        %v4533 = vadd.f32 0.0, %v4532
        %v4534 = vpop.f32.mrf.mxu0
        %4535 = vmatprep.mubr.bf16.mxu0 0
        %4536 = vmatmul.mubr.bf16.gmra.mxu0 %v4413
        %v4537 = vpop.f32.mrf.mxu0
        %v4538 = vadd.f32 0.0, %v4537
        %v4539 = vpop.f32.mrf.mxu0
        %v4540 = vpop.f32.mrf.mxu0
        %v4541 = vadd.f32 0.0, %v4540
        %v4542 = vpop.f32.mrf.mxu0
        %4543 = vmatprep.mubr.bf16.mxu0 0
        %4544 = vmatmul.mubr.bf16.gmra.mxu0 %v4416
        %v4545 = vpop.f32.mrf.mxu0
        %v4546 = vadd.f32 0.0, %v4545
        %v4547 = vpop.f32.mrf.mxu0
        %v4548 = vpop.f32.mrf.mxu0
        %v4549 = vadd.f32 0.0, %v4548
        %v4550 = vpop.f32.mrf.mxu0
        %4551 = vmatprep.mubr.bf16.mxu0 0
        %4552 = vmatmul.mubr.bf16.gmra.mxu0 %v4419
        %v4553 = vpop.f32.mrf.mxu0
        %v4554 = vadd.f32 0.0, %v4553
        %v4555 = vpop.f32.mrf.mxu0
        %v4556 = vpop.f32.mrf.mxu0
        %v4557 = vadd.f32 0.0, %v4556
        %v4558 = vpop.f32.mrf.mxu0
        %4559 = vmatprep.mubr.bf16.mxu0 0
        %4560 = vmatmul.mubr.bf16.gmra.mxu0 %v4422
        %v4561 = vpop.f32.mrf.mxu0
        %v4562 = vadd.f32 0.0, %v4561
        %v4563 = vpop.f32.mrf.mxu0
        %v4564 = vpop.f32.mrf.mxu0
        %v4565 = vadd.f32 0.0, %v4564
        %v4566 = vpop.f32.mrf.mxu0
        %4567 = vmatprep.mubr.bf16.mxu0 0
        %4568 = vmatmul.mubr.bf16.gmra.mxu0 %v4425
        %v4569 = vpop.f32.mrf.mxu0
        %v4570 = vadd.f32 0.0, %v4569
        %v4571 = vpop.f32.mrf.mxu0
        %v4572 = vpop.f32.mrf.mxu0
        %v4573 = vadd.f32 0.0, %v4572
        %v4574 = vpop.f32.mrf.mxu0
        %4575 = vmatprep.mubr.bf16.mxu0 0
        %4576 = vmatmul.mubr.bf16.gmra.mxu0 %v4428
        %v4577 = vpop.f32.mrf.mxu0
        %v4578 = vadd.f32 0.0, %v4577
        %v4579 = vpop.f32.mrf.mxu0
        %v4580 = vpop.f32.mrf.mxu0
        %v4581 = vadd.f32 0.0, %v4580
        %v4582 = vpop.f32.mrf.mxu0
        %4583 = vmatprep.mubr.bf16.mxu0 0
        %4584 = vmatmul.mubr.bf16.gmra.mxu0 %v4431
        %v4585 = vpop.f32.mrf.mxu0
        %v4586 = vadd.f32 0.0, %v4585
        %v4587 = vpop.f32.mrf.mxu0
        %v4588 = vpop.f32.mrf.mxu0
        %v4589 = vadd.f32 0.0, %v4588
        %v4590 = vpop.f32.mrf.mxu0
        %4591 = vmatprep.mubr.bf16.mxu0 0
        %4592 = vmatmul.mubr.bf16.gmra.mxu0 %v4434
        %v4593 = vpop.f32.mrf.mxu0
        %v4594 = vadd.f32 0.0, %v4593
        %v4595 = vpop.f32.mrf.mxu0
        %v4596 = vpop.f32.mrf.mxu0
        %v4597 = vadd.f32 0.0, %v4596
        %v4598 = vpop.f32.mrf.mxu0
        %4599 = vdwg.mxu0
        %v4600 = vsel %vm2930, %v4474, -inf
        %4601 = vmax.xlane.f32.xlu0 %v4600
        %v4602 = vpop.xlane.xlu0 %4601
        %v4603 = vsel %vm2930, %v4477, -inf
        %4604 = vmax.xlane.f32.xlu0 %v4603
        %v4605 = vpop.xlane.xlu0 %4604
        %v4606 = vsel %vm2930, %v4482, -inf
        %4607 = vmax.xlane.f32.xlu0 %v4606
        %v4608 = vpop.xlane.xlu0 %4607
        %v4609 = vsel %vm2930, %v4485, -inf
        %4610 = vmax.xlane.f32.xlu0 %v4609
        %v4611 = vpop.xlane.xlu0 %4610
        %v4612 = vsel %vm2930, %v4490, -inf
        %4613 = vmax.xlane.f32.xlu0 %v4612
        %v4614 = vpop.xlane.xlu0 %4613
        %v4615 = vsel %vm2930, %v4493, -inf
        %4616 = vmax.xlane.f32.xlu0 %v4615
        %v4617 = vpop.xlane.xlu0 %4616
        %v4618 = vsel %vm2930, %v4498, -inf
        %4619 = vmax.xlane.f32.xlu0 %v4618
        %v4620 = vpop.xlane.xlu0 %4619
        %v4621 = vsel %vm2930, %v4501, -inf
        %4622 = vmax.xlane.f32.xlu0 %v4621
        %v4623 = vpop.xlane.xlu0 %4622
        %v4624 = vsel %vm2930, %v4506, -inf
        %4625 = vmax.xlane.f32.xlu0 %v4624
        %v4626 = vpop.xlane.xlu0 %4625
        %v4627 = vsel %vm2930, %v4509, -inf
        %4628 = vmax.xlane.f32.xlu0 %v4627
        %v4629 = vpop.xlane.xlu0 %4628
        %v4630 = vsel %vm2930, %v4514, -inf
        %4631 = vmax.xlane.f32.xlu0 %v4630
        %v4632 = vpop.xlane.xlu0 %4631
        %v4633 = vsel %vm2930, %v4517, -inf
        %4634 = vmax.xlane.f32.xlu0 %v4633
        %v4635 = vpop.xlane.xlu0 %4634
        %v4636 = vsel %vm2930, %v4522, -inf
        %4637 = vmax.xlane.f32.xlu0 %v4636
        %v4638 = vpop.xlane.xlu0 %4637
        %v4639 = vsel %vm2930, %v4525, -inf
        %4640 = vmax.xlane.f32.xlu0 %v4639
        %v4641 = vpop.xlane.xlu0 %4640
        %v4642 = vsel %vm2930, %v4530, -inf
        %4643 = vmax.xlane.f32.xlu0 %v4642
        %v4644 = vpop.xlane.xlu0 %4643
        %v4645 = vsel %vm2930, %v4533, -inf
        %4646 = vmax.xlane.f32.xlu0 %v4645
        %v4647 = vpop.xlane.xlu0 %4646
        %v4648 = vsel %vm2930, %v4538, -inf
        %4649 = vmax.xlane.f32.xlu0 %v4648
        %v4650 = vpop.xlane.xlu0 %4649
        %v4651 = vsel %vm2930, %v4541, -inf
        %4652 = vmax.xlane.f32.xlu0 %v4651
        %v4653 = vpop.xlane.xlu0 %4652
        %v4654 = vsel %vm2930, %v4546, -inf
        %4655 = vmax.xlane.f32.xlu0 %v4654
        %v4656 = vpop.xlane.xlu0 %4655
        %v4657 = vsel %vm2930, %v4549, -inf
        %4658 = vmax.xlane.f32.xlu0 %v4657
        %v4659 = vpop.xlane.xlu0 %4658
        %v4660 = vsel %vm2930, %v4554, -inf
        %4661 = vmax.xlane.f32.xlu0 %v4660
        %v4662 = vpop.xlane.xlu0 %4661
        %v4663 = vsel %vm2930, %v4557, -inf
        %4664 = vmax.xlane.f32.xlu0 %v4663
        %v4665 = vpop.xlane.xlu0 %4664
        %v4666 = vsel %vm2930, %v4562, -inf
        %4667 = vmax.xlane.f32.xlu0 %v4666
        %v4668 = vpop.xlane.xlu0 %4667
        %v4669 = vsel %vm2930, %v4565, -inf
        %4670 = vmax.xlane.f32.xlu0 %v4669
        %v4671 = vpop.xlane.xlu0 %4670
        %v4672 = vsel %vm2930, %v4570, -inf
        %4673 = vmax.xlane.f32.xlu0 %v4672
        %v4674 = vpop.xlane.xlu0 %4673
        %v4675 = vsel %vm2930, %v4573, -inf
        %4676 = vmax.xlane.f32.xlu0 %v4675
        %v4677 = vpop.xlane.xlu0 %4676
        %v4678 = vsel %vm2930, %v4578, -inf
        %4679 = vmax.xlane.f32.xlu0 %v4678
        %v4680 = vpop.xlane.xlu0 %4679
        %v4681 = vsel %vm2930, %v4581, -inf
        %4682 = vmax.xlane.f32.xlu0 %v4681
        %v4683 = vpop.xlane.xlu0 %4682
        %v4684 = vsel %vm2930, %v4586, -inf
        %4685 = vmax.xlane.f32.xlu0 %v4684
        %v4686 = vpop.xlane.xlu0 %4685
        %v4687 = vsel %vm2930, %v4589, -inf
        %4688 = vmax.xlane.f32.xlu0 %v4687
        %v4689 = vpop.xlane.xlu0 %4688
        %v4690 = vsel %vm2930, %v4594, -inf
        %4691 = vmax.xlane.f32.xlu0 %v4690
        %v4692 = vpop.xlane.xlu0 %4691
        %v4693 = vsel %vm2930, %v4597, -inf
        %4694 = vmax.xlane.f32.xlu0 %v4693
        %v4695 = vpop.xlane.xlu0 %4694
        %v4696 = vsub.f32 %v4474, %v4602
        %v4697 = vsub.f32 %v4477, %v4605
        %v4698 = vsub.f32 %v4482, %v4608
        %v4699 = vsub.f32 %v4485, %v4611
        %v4700 = vsub.f32 %v4490, %v4614
        %v4701 = vsub.f32 %v4493, %v4617
        %v4702 = vsub.f32 %v4498, %v4620
        %v4703 = vsub.f32 %v4501, %v4623
        %v4704 = vsub.f32 %v4506, %v4626
        %v4705 = vsub.f32 %v4509, %v4629
        %v4706 = vsub.f32 %v4514, %v4632
        %v4707 = vsub.f32 %v4517, %v4635
        %v4708 = vsub.f32 %v4522, %v4638
        %v4709 = vsub.f32 %v4525, %v4641
        %v4710 = vsub.f32 %v4530, %v4644
        %v4711 = vsub.f32 %v4533, %v4647
        %v4712 = vsub.f32 %v4538, %v4650
        %v4713 = vsub.f32 %v4541, %v4653
        %v4714 = vsub.f32 %v4546, %v4656
        %v4715 = vsub.f32 %v4549, %v4659
        %v4716 = vsub.f32 %v4554, %v4662
        %v4717 = vsub.f32 %v4557, %v4665
        %v4718 = vsub.f32 %v4562, %v4668
        %v4719 = vsub.f32 %v4565, %v4671
        %v4720 = vsub.f32 %v4570, %v4674
        %v4721 = vsub.f32 %v4573, %v4677
        %v4722 = vsub.f32 %v4578, %v4680
        %v4723 = vsub.f32 %v4581, %v4683
        %v4724 = vsub.f32 %v4586, %v4686
        %v4725 = vsub.f32 %v4589, %v4689
        %v4726 = vsub.f32 %v4594, %v4692
        %v4727 = vsub.f32 %v4597, %v4695
        %v4728 = vmul.f32 %v4696, 1.442695
        %v4729 = vpow.pop %v4728
        %v4730 = vmul.f32 %v4697, 1.442695
        %v4731 = vpow.pop %v4730
        %v4732 = vmul.f32 %v4698, 1.442695
        %v4733 = vpow.pop %v4732
        %v4734 = vmul.f32 %v4699, 1.442695
        %v4735 = vpow.pop %v4734
        %v4736 = vmul.f32 %v4700, 1.442695
        %v4737 = vpow.pop %v4736
        %v4738 = vmul.f32 %v4701, 1.442695
        %v4739 = vpow.pop %v4738
        %v4740 = vmul.f32 %v4702, 1.442695
        %v4741 = vpow.pop %v4740
        %v4742 = vmul.f32 %v4703, 1.442695
        %v4743 = vpow.pop %v4742
        %v4744 = vmul.f32 %v4704, 1.442695
        %v4745 = vpow.pop %v4744
        %v4746 = vmul.f32 %v4705, 1.442695
        %v4747 = vpow.pop %v4746
        %v4748 = vmul.f32 %v4706, 1.442695
        %v4749 = vpow.pop %v4748
        %v4750 = vmul.f32 %v4707, 1.442695
        %v4751 = vpow.pop %v4750
        %v4752 = vmul.f32 %v4708, 1.442695
        %v4753 = vpow.pop %v4752
        %v4754 = vmul.f32 %v4709, 1.442695
        %v4755 = vpow.pop %v4754
        %v4756 = vmul.f32 %v4710, 1.442695
        %v4757 = vpow.pop %v4756
        %v4758 = vmul.f32 %v4711, 1.442695
        %v4759 = vpow.pop %v4758
        %v4760 = vmul.f32 %v4712, 1.442695
        %v4761 = vpow.pop %v4760
        %v4762 = vmul.f32 %v4713, 1.442695
        %v4763 = vpow.pop %v4762
        %v4764 = vmul.f32 %v4714, 1.442695
        %v4765 = vpow.pop %v4764
        %v4766 = vmul.f32 %v4715, 1.442695
        %v4767 = vpow.pop %v4766
        %v4768 = vmul.f32 %v4716, 1.442695
        %v4769 = vpow.pop %v4768
        %v4770 = vmul.f32 %v4717, 1.442695
        %v4771 = vpow.pop %v4770
        %v4772 = vmul.f32 %v4718, 1.442695
        %v4773 = vpow.pop %v4772
        %v4774 = vmul.f32 %v4719, 1.442695
        %v4775 = vpow.pop %v4774
        %v4776 = vmul.f32 %v4720, 1.442695
        %v4777 = vpow.pop %v4776
        %v4778 = vmul.f32 %v4721, 1.442695
        %v4779 = vpow.pop %v4778
        %v4780 = vmul.f32 %v4722, 1.442695
        %v4781 = vpow.pop %v4780
        %v4782 = vmul.f32 %v4723, 1.442695
        %v4783 = vpow.pop %v4782
        %v4784 = vmul.f32 %v4724, 1.442695
        %v4785 = vpow.pop %v4784
        %v4786 = vmul.f32 %v4725, 1.442695
        %v4787 = vpow.pop %v4786
        %v4788 = vmul.f32 %v4726, 1.442695
        %v4789 = vpow.pop %v4788
        %v4790 = vmul.f32 %v4727, 1.442695
        %v4791 = vpow.pop %v4790
        %v4792 = vsel %vm2930, %v4729, 0.0
        %4793 = vadd.xlane.f32.xlu0 %v4792
        %v4794 = vpop.xlane.xlu0 %4793
        %v4795 = vsel %vm2930, %v4731, 0.0
        %4796 = vadd.xlane.f32.xlu0 %v4795
        %v4797 = vpop.xlane.xlu0 %4796
        %v4798 = vsel %vm2930, %v4733, 0.0
        %4799 = vadd.xlane.f32.xlu0 %v4798
        %v4800 = vpop.xlane.xlu0 %4799
        %v4801 = vsel %vm2930, %v4735, 0.0
        %4802 = vadd.xlane.f32.xlu0 %v4801
        %v4803 = vpop.xlane.xlu0 %4802
        %v4804 = vsel %vm2930, %v4737, 0.0
        %4805 = vadd.xlane.f32.xlu0 %v4804
        %v4806 = vpop.xlane.xlu0 %4805
        %v4807 = vsel %vm2930, %v4739, 0.0
        %4808 = vadd.xlane.f32.xlu0 %v4807
        %v4809 = vpop.xlane.xlu0 %4808
        %v4810 = vsel %vm2930, %v4741, 0.0
        %4811 = vadd.xlane.f32.xlu0 %v4810
        %v4812 = vpop.xlane.xlu0 %4811
        %v4813 = vsel %vm2930, %v4743, 0.0
        %4814 = vadd.xlane.f32.xlu0 %v4813
        %v4815 = vpop.xlane.xlu0 %4814
        %v4816 = vsel %vm2930, %v4745, 0.0
        %4817 = vadd.xlane.f32.xlu0 %v4816
        %v4818 = vpop.xlane.xlu0 %4817
        %v4819 = vsel %vm2930, %v4747, 0.0
        %4820 = vadd.xlane.f32.xlu0 %v4819
        %v4821 = vpop.xlane.xlu0 %4820
        %v4822 = vsel %vm2930, %v4749, 0.0
        %4823 = vadd.xlane.f32.xlu0 %v4822
        %v4824 = vpop.xlane.xlu0 %4823
        %v4825 = vsel %vm2930, %v4751, 0.0
        %4826 = vadd.xlane.f32.xlu0 %v4825
        %v4827 = vpop.xlane.xlu0 %4826
        %v4828 = vsel %vm2930, %v4753, 0.0
        %4829 = vadd.xlane.f32.xlu0 %v4828
        %v4830 = vpop.xlane.xlu0 %4829
        %v4831 = vsel %vm2930, %v4755, 0.0
        %4832 = vadd.xlane.f32.xlu0 %v4831
        %v4833 = vpop.xlane.xlu0 %4832
        %v4834 = vsel %vm2930, %v4757, 0.0
        %4835 = vadd.xlane.f32.xlu0 %v4834
        %v4836 = vpop.xlane.xlu0 %4835
        %v4837 = vsel %vm2930, %v4759, 0.0
        %4838 = vadd.xlane.f32.xlu0 %v4837
        %v4839 = vpop.xlane.xlu0 %4838
        %v4840 = vsel %vm2930, %v4761, 0.0
        %4841 = vadd.xlane.f32.xlu0 %v4840
        %v4842 = vpop.xlane.xlu0 %4841
        %v4843 = vsel %vm2930, %v4763, 0.0
        %4844 = vadd.xlane.f32.xlu0 %v4843
        %v4845 = vpop.xlane.xlu0 %4844
        %v4846 = vsel %vm2930, %v4765, 0.0
        %4847 = vadd.xlane.f32.xlu0 %v4846
        %v4848 = vpop.xlane.xlu0 %4847
        %v4849 = vsel %vm2930, %v4767, 0.0
        %4850 = vadd.xlane.f32.xlu0 %v4849
        %v4851 = vpop.xlane.xlu0 %4850
        %v4852 = vsel %vm2930, %v4769, 0.0
        %4853 = vadd.xlane.f32.xlu0 %v4852
        %v4854 = vpop.xlane.xlu0 %4853
        %v4855 = vsel %vm2930, %v4771, 0.0
        %4856 = vadd.xlane.f32.xlu0 %v4855
        %v4857 = vpop.xlane.xlu0 %4856
        %v4858 = vsel %vm2930, %v4773, 0.0
        %4859 = vadd.xlane.f32.xlu0 %v4858
        %v4860 = vpop.xlane.xlu0 %4859
        %v4861 = vsel %vm2930, %v4775, 0.0
        %4862 = vadd.xlane.f32.xlu0 %v4861
        %v4863 = vpop.xlane.xlu0 %4862
        %v4864 = vsel %vm2930, %v4777, 0.0
        %4865 = vadd.xlane.f32.xlu0 %v4864
        %v4866 = vpop.xlane.xlu0 %4865
        %v4867 = vsel %vm2930, %v4779, 0.0
        %4868 = vadd.xlane.f32.xlu0 %v4867
        %v4869 = vpop.xlane.xlu0 %4868
        %v4870 = vsel %vm2930, %v4781, 0.0
        %4871 = vadd.xlane.f32.xlu0 %v4870
        %v4872 = vpop.xlane.xlu0 %4871
        %v4873 = vsel %vm2930, %v4783, 0.0
        %4874 = vadd.xlane.f32.xlu0 %v4873
        %v4875 = vpop.xlane.xlu0 %4874
        %v4876 = vsel %vm2930, %v4785, 0.0
        %4877 = vadd.xlane.f32.xlu0 %v4876
        %v4878 = vpop.xlane.xlu0 %4877
        %v4879 = vsel %vm2930, %v4787, 0.0
        %4880 = vadd.xlane.f32.xlu0 %v4879
        %v4881 = vpop.xlane.xlu0 %4880
        %v4882 = vsel %vm2930, %v4789, 0.0
        %4883 = vadd.xlane.f32.xlu0 %v4882
        %v4884 = vpop.xlane.xlu0 %4883
        %v4885 = vsel %vm2930, %v4791, 0.0
        %4886 = vadd.xlane.f32.xlu0 %v4885
        %v4887 = vpop.xlane.xlu0 %4886
        %v4888 = vrcp.pop %v4794
        %v4889 = vrcp.pop %v4797
        %v4890 = vrcp.pop %v4800
        %v4891 = vrcp.pop %v4803
        %v4892 = vrcp.pop %v4806
        %v4893 = vrcp.pop %v4809
        %v4894 = vrcp.pop %v4812
        %v4895 = vrcp.pop %v4815
        %v4896 = vrcp.pop %v4818
        %v4897 = vrcp.pop %v4821
        %v4898 = vrcp.pop %v4824
        %v4899 = vrcp.pop %v4827
        %v4900 = vrcp.pop %v4830
        %v4901 = vrcp.pop %v4833
        %v4902 = vrcp.pop %v4836
        %v4903 = vrcp.pop %v4839
        %v4904 = vrcp.pop %v4842
        %v4905 = vrcp.pop %v4845
        %v4906 = vrcp.pop %v4848
        %v4907 = vrcp.pop %v4851
        %v4908 = vrcp.pop %v4854
        %v4909 = vrcp.pop %v4857
        %v4910 = vrcp.pop %v4860
        %v4911 = vrcp.pop %v4863
        %v4912 = vrcp.pop %v4866
        %v4913 = vrcp.pop %v4869
        %v4914 = vrcp.pop %v4872
        %v4915 = vrcp.pop %v4875
        %v4916 = vrcp.pop %v4878
        %v4917 = vrcp.pop %v4881
        %v4918 = vrcp.pop %v4884
        %v4919 = vrcp.pop %v4887
        %v4920 = vmul.f32 %v4729, %v4888
        %v4921 = vmul.f32 %v4731, %v4889
        %v4922 = vmul.f32 %v4733, %v4890
        %v4923 = vmul.f32 %v4735, %v4891
        %v4924 = vmul.f32 %v4737, %v4892
        %v4925 = vmul.f32 %v4739, %v4893
        %v4926 = vmul.f32 %v4741, %v4894
        %v4927 = vmul.f32 %v4743, %v4895
        %v4928 = vmul.f32 %v4745, %v4896
        %v4929 = vmul.f32 %v4747, %v4897
        %v4930 = vmul.f32 %v4749, %v4898
        %v4931 = vmul.f32 %v4751, %v4899
        %v4932 = vmul.f32 %v4753, %v4900
        %v4933 = vmul.f32 %v4755, %v4901
        %v4934 = vmul.f32 %v4757, %v4902
        %v4935 = vmul.f32 %v4759, %v4903
        %v4936 = vmul.f32 %v4761, %v4904
        %v4937 = vmul.f32 %v4763, %v4905
        %v4938 = vmul.f32 %v4765, %v4906
        %v4939 = vmul.f32 %v4767, %v4907
        %v4940 = vmul.f32 %v4769, %v4908
        %v4941 = vmul.f32 %v4771, %v4909
        %v4942 = vmul.f32 %v4773, %v4910
        %v4943 = vmul.f32 %v4775, %v4911
        %v4944 = vmul.f32 %v4777, %v4912
        %v4945 = vmul.f32 %v4779, %v4913
        %v4946 = vmul.f32 %v4781, %v4914
        %v4947 = vmul.f32 %v4783, %v4915
        %v4948 = vmul.f32 %v4785, %v4916
        %v4949 = vmul.f32 %v4787, %v4917
        %v4950 = vmul.f32 %v4789, %v4918
        %v4951 = vmul.f32 %v4791, %v4919
        %v4952 = vpack.c.bf16 %v4921, %v4920
        %v4953 = vpack.c.bf16 %v4923, %v4922
        %v4954 = vpack.c.bf16 %v4925, %v4924
        %v4955 = vpack.c.bf16 %v4927, %v4926
        %v4956 = vpack.c.bf16 %v4929, %v4928
        %v4957 = vpack.c.bf16 %v4931, %v4930
        %v4958 = vpack.c.bf16 %v4933, %v4932
        %v4959 = vpack.c.bf16 %v4935, %v4934
        %v4960 = vpack.c.bf16 %v4937, %v4936
        %v4961 = vpack.c.bf16 %v4939, %v4938
        %v4962 = vpack.c.bf16 %v4941, %v4940
        %v4963 = vpack.c.bf16 %v4943, %v4942
        %v4964 = vpack.c.bf16 %v4945, %v4944
        %v4965 = vpack.c.bf16 %v4947, %v4946
        %v4966 = vpack.c.bf16 %v4949, %v4948
        %v4967 = vpack.c.bf16 %v4951, %v4950
        %4968 = vrot.lane.b32.xlu0 %v3301, 64
        %v4969 = vpop.permute.xlu0 %4968
        %v4972 = vsel %vm2930, %v4952, 0
        %v4975 = vsel %vm2930, %v4953, 0
        %v4978 = vsel %vm2930, %v4954, 0
        %v4981 = vsel %vm2930, %v4955, 0
        %v4984 = vsel %vm2930, %v4956, 0
        %v4987 = vsel %vm2930, %v4957, 0
        %v4990 = vsel %vm2930, %v4958, 0
        %v4993 = vsel %vm2930, %v4959, 0
        %v4996 = vsel %vm2930, %v4960, 0
        %v4999 = vsel %vm2930, %v4961, 0
        %v5002 = vsel %vm2930, %v4962, 0
        %v5005 = vsel %vm2930, %v4963, 0
        %v5008 = vsel %vm2930, %v4964, 0
        %v5011 = vsel %vm2930, %v4965, 0
        %v5014 = vsel %vm2930, %v4966, 0
        %v5017 = vsel %vm2930, %v4967, 0
        %5019 = vmatprep.subr.bf16.mxu0 0
        %5020 = vmatpush1.bf16.msra.mxu0 0
        %5021 = vmatprep.subr.bf16.mxu0 0
        %5022 = vmatpush1.bf16.msra.mxu0 0
        %5023 = vmatprep.subr.bf16.mxu0 0
        %5024 = vmatpush1.bf16.msra.mxu0 0
        %5025 = vmatprep.subr.bf16.mxu0 0
        %5026 = vmatpush1.bf16.msra.mxu0 0
        %5027 = vmatprep.subr.bf16.mxu0 0
        %5028 = vmatpush1.bf16.msra.mxu0 0
        %5029 = vmatprep.subr.bf16.mxu0 0
        %5030 = vmatpush1.bf16.msra.mxu0 0
        %5031 = vmatprep.subr.bf16.mxu0 0
        %5032 = vmatpush1.bf16.msra.mxu0 0
        %5033 = vmatprep.subr.bf16.mxu0 0
        %5034 = vmatpush1.bf16.msra.mxu0 %v4969
        %5035 = vmatprep.subr.bf16.mxu0 0
        %5036 = vmatpush2.bf16.msra.mxu0 0
        %5037 = vmatprep.subr.bf16.mxu0 0
        %5038 = vmatpush2.bf16.msra.mxu0 0
        %5039 = vmatprep.subr.bf16.mxu0 0
        %5040 = vmatpush2.bf16.msra.mxu0 0
        %5041 = vmatprep.subr.bf16.mxu0 0
        %5042 = vmatpush2.bf16.msra.mxu0 0
        %5043 = vmatprep.subr.bf16.mxu0 0
        %5044 = vmatpush2.bf16.msra.mxu0 0
        %5045 = vmatprep.subr.bf16.mxu0 0
        %5046 = vmatpush2.bf16.msra.mxu0 0
        %5047 = vmatprep.subr.bf16.mxu0 0
        %5048 = vmatpush2.bf16.msra.mxu0 0
        %5049 = vmatprep.subr.bf16.mxu0 0
        %5050 = vmatpush2.bf16.msra.mxu0 0
        %5051 = vmatprep.mubr.bf16.mxu0 0
        %5052 = vmatmul.mubr.bf16.gmra.mxu0 %v4972
        %v5053 = vpop.f32.mrf.mxu0
        %v5054 = vadd.f32 0.0, %v5053
        %v5055 = vpop.f32.mrf.mxu0
        %v5056 = vpop.f32.mrf.mxu0
        %v5057 = vadd.f32 0.0, %v5056
        %v5058 = vpop.f32.mrf.mxu0
        %5059 = vmatprep.mubr.bf16.mxu0 0
        %5060 = vmatmul.mubr.bf16.gmra.mxu0 %v4975
        %v5061 = vpop.f32.mrf.mxu0
        %v5062 = vadd.f32 0.0, %v5061
        %v5063 = vpop.f32.mrf.mxu0
        %v5064 = vpop.f32.mrf.mxu0
        %v5065 = vadd.f32 0.0, %v5064
        %v5066 = vpop.f32.mrf.mxu0
        %5067 = vmatprep.mubr.bf16.mxu0 0
        %5068 = vmatmul.mubr.bf16.gmra.mxu0 %v4978
        %v5069 = vpop.f32.mrf.mxu0
        %v5070 = vadd.f32 0.0, %v5069
        %v5071 = vpop.f32.mrf.mxu0
        %v5072 = vpop.f32.mrf.mxu0
        %v5073 = vadd.f32 0.0, %v5072
        %v5074 = vpop.f32.mrf.mxu0
        %5075 = vmatprep.mubr.bf16.mxu0 0
        %5076 = vmatmul.mubr.bf16.gmra.mxu0 %v4981
        %v5077 = vpop.f32.mrf.mxu0
        %v5078 = vadd.f32 0.0, %v5077
        %v5079 = vpop.f32.mrf.mxu0
        %v5080 = vpop.f32.mrf.mxu0
        %v5081 = vadd.f32 0.0, %v5080
        %v5082 = vpop.f32.mrf.mxu0
        %5083 = vmatprep.mubr.bf16.mxu0 0
        %5084 = vmatmul.mubr.bf16.gmra.mxu0 %v4984
        %v5085 = vpop.f32.mrf.mxu0
        %v5086 = vadd.f32 0.0, %v5085
        %v5087 = vpop.f32.mrf.mxu0
        %v5088 = vpop.f32.mrf.mxu0
        %v5089 = vadd.f32 0.0, %v5088
        %v5090 = vpop.f32.mrf.mxu0
        %5091 = vmatprep.mubr.bf16.mxu0 0
        %5092 = vmatmul.mubr.bf16.gmra.mxu0 %v4987
        %v5093 = vpop.f32.mrf.mxu0
        %v5094 = vadd.f32 0.0, %v5093
        %v5095 = vpop.f32.mrf.mxu0
        %v5096 = vpop.f32.mrf.mxu0
        %v5097 = vadd.f32 0.0, %v5096
        %v5098 = vpop.f32.mrf.mxu0
        %5099 = vmatprep.mubr.bf16.mxu0 0
        %5100 = vmatmul.mubr.bf16.gmra.mxu0 %v4990
        %v5101 = vpop.f32.mrf.mxu0
        %v5102 = vadd.f32 0.0, %v5101
        %v5103 = vpop.f32.mrf.mxu0
        %v5104 = vpop.f32.mrf.mxu0
        %v5105 = vadd.f32 0.0, %v5104
        %v5106 = vpop.f32.mrf.mxu0
        %5107 = vmatprep.mubr.bf16.mxu0 0
        %5108 = vmatmul.mubr.bf16.gmra.mxu0 %v4993
        %v5109 = vpop.f32.mrf.mxu0
        %v5110 = vadd.f32 0.0, %v5109
        %v5111 = vpop.f32.mrf.mxu0
        %v5112 = vpop.f32.mrf.mxu0
        %v5113 = vadd.f32 0.0, %v5112
        %v5114 = vpop.f32.mrf.mxu0
        %5115 = vmatprep.mubr.bf16.mxu0 0
        %5116 = vmatmul.mubr.bf16.gmra.mxu0 %v4996
        %v5117 = vpop.f32.mrf.mxu0
        %v5118 = vadd.f32 0.0, %v5117
        %v5119 = vpop.f32.mrf.mxu0
        %v5120 = vpop.f32.mrf.mxu0
        %v5121 = vadd.f32 0.0, %v5120
        %v5122 = vpop.f32.mrf.mxu0
        %5123 = vmatprep.mubr.bf16.mxu0 0
        %5124 = vmatmul.mubr.bf16.gmra.mxu0 %v4999
        %v5125 = vpop.f32.mrf.mxu0
        %v5126 = vadd.f32 0.0, %v5125
        %v5127 = vpop.f32.mrf.mxu0
        %v5128 = vpop.f32.mrf.mxu0
        %v5129 = vadd.f32 0.0, %v5128
        %v5130 = vpop.f32.mrf.mxu0
        %5131 = vmatprep.mubr.bf16.mxu0 0
        %5132 = vmatmul.mubr.bf16.gmra.mxu0 %v5002
        %v5133 = vpop.f32.mrf.mxu0
        %v5134 = vadd.f32 0.0, %v5133
        %v5135 = vpop.f32.mrf.mxu0
        %v5136 = vpop.f32.mrf.mxu0
        %v5137 = vadd.f32 0.0, %v5136
        %v5138 = vpop.f32.mrf.mxu0
        %5139 = vmatprep.mubr.bf16.mxu0 0
        %5140 = vmatmul.mubr.bf16.gmra.mxu0 %v5005
        %v5141 = vpop.f32.mrf.mxu0
        %v5142 = vadd.f32 0.0, %v5141
        %v5143 = vpop.f32.mrf.mxu0
        %v5144 = vpop.f32.mrf.mxu0
        %v5145 = vadd.f32 0.0, %v5144
        %v5146 = vpop.f32.mrf.mxu0
        %5147 = vmatprep.mubr.bf16.mxu0 0
        %5148 = vmatmul.mubr.bf16.gmra.mxu0 %v5008
        %v5149 = vpop.f32.mrf.mxu0
        %v5150 = vadd.f32 0.0, %v5149
        %v5151 = vpop.f32.mrf.mxu0
        %v5152 = vpop.f32.mrf.mxu0
        %v5153 = vadd.f32 0.0, %v5152
        %v5154 = vpop.f32.mrf.mxu0
        %5155 = vmatprep.mubr.bf16.mxu0 0
        %5156 = vmatmul.mubr.bf16.gmra.mxu0 %v5011
        %v5157 = vpop.f32.mrf.mxu0
        %v5158 = vadd.f32 0.0, %v5157
        %v5159 = vpop.f32.mrf.mxu0
        %v5160 = vpop.f32.mrf.mxu0
        %v5161 = vadd.f32 0.0, %v5160
        %v5162 = vpop.f32.mrf.mxu0
        %5163 = vmatprep.mubr.bf16.mxu0 0
        %5164 = vmatmul.mubr.bf16.gmra.mxu0 %v5014
        %v5165 = vpop.f32.mrf.mxu0
        %v5166 = vadd.f32 0.0, %v5165
        %v5167 = vpop.f32.mrf.mxu0
        %v5168 = vpop.f32.mrf.mxu0
        %v5169 = vadd.f32 0.0, %v5168
        %v5170 = vpop.f32.mrf.mxu0
        %5171 = vmatprep.mubr.bf16.mxu0 0
        %5172 = vmatmul.mubr.bf16.gmra.mxu0 %v5017
        %v5173 = vpop.f32.mrf.mxu0
        %v5174 = vadd.f32 0.0, %v5173
        %v5175 = vpop.f32.mrf.mxu0
        %v5176 = vpop.f32.mrf.mxu0
        %v5177 = vadd.f32 0.0, %v5176
        %v5178 = vpop.f32.mrf.mxu0
        %5179 = vdwg.mxu0
        %5180 = vrot.lane.b32.xlu0 %v2694, 32
        %v5181 = vpop.permute.xlu0 %5180
        %5182 = vrot.lane.b32.xlu0 %v2695, 32
        %v5183 = vpop.permute.xlu0 %5182
        %5184 = vrot.lane.b32.xlu0 %v2696, 32
        %v5185 = vpop.permute.xlu0 %5184
        %5186 = vrot.lane.b32.xlu0 %v2697, 32
        %v5187 = vpop.permute.xlu0 %5186
        %5188 = vrot.lane.b32.xlu0 %v2698, 32
        %v5189 = vpop.permute.xlu0 %5188
        %5190 = vrot.lane.b32.xlu0 %v2699, 32
        %v5191 = vpop.permute.xlu0 %5190
        %5192 = vrot.lane.b32.xlu0 %v2700, 32
        %v5193 = vpop.permute.xlu0 %5192
        %5194 = vrot.lane.b32.xlu0 %v2701, 32
        %v5195 = vpop.permute.xlu0 %5194
        %5196 = vrot.lane.b32.xlu0 %v2702, 32
        %v5197 = vpop.permute.xlu0 %5196
        %5198 = vrot.lane.b32.xlu0 %v2703, 32
        %v5199 = vpop.permute.xlu0 %5198
        %5200 = vrot.lane.b32.xlu0 %v2704, 32
        %v5201 = vpop.permute.xlu0 %5200
        %5202 = vrot.lane.b32.xlu0 %v2705, 32
        %v5203 = vpop.permute.xlu0 %5202
        %5204 = vrot.lane.b32.xlu0 %v2706, 32
        %v5205 = vpop.permute.xlu0 %5204
        %5206 = vrot.lane.b32.xlu0 %v2707, 32
        %v5207 = vpop.permute.xlu0 %5206
        %5208 = vrot.lane.b32.xlu0 %v2708, 32
        %v5209 = vpop.permute.xlu0 %5208
        %5210 = vrot.lane.b32.xlu0 %v2709, 32
        %v5211 = vpop.permute.xlu0 %5210
        %5212 = vrot.lane.b32.xlu0 %v2716, 32
        %v5213 = vpop.permute.xlu0 %5212
        %v5215 = vsel %vm2717, %v5181, 0
        %v5218 = vsel %vm2717, %v5183, 0
        %v5221 = vsel %vm2717, %v5185, 0
        %v5224 = vsel %vm2717, %v5187, 0
        %v5227 = vsel %vm2717, %v5189, 0
        %v5230 = vsel %vm2717, %v5191, 0
        %v5233 = vsel %vm2717, %v5193, 0
        %v5236 = vsel %vm2717, %v5195, 0
        %v5239 = vsel %vm2717, %v5197, 0
        %v5242 = vsel %vm2717, %v5199, 0
        %v5245 = vsel %vm2717, %v5201, 0
        %v5248 = vsel %vm2717, %v5203, 0
        %v5251 = vsel %vm2717, %v5205, 0
        %v5254 = vsel %vm2717, %v5207, 0
        %v5257 = vsel %vm2717, %v5209, 0
        %v5260 = vsel %vm2717, %v5211, 0
        %v5263 = vsel %vm2717, %v5213, 0
        %5265 = vmatprep.subr.bf16.mxu0 0
        %5266 = vmatpush1.bf16.xpose.msra.mxu0 0
        %5267 = vmatprep.subr.bf16.mxu0 0
        %5268 = vmatpush1.bf16.xpose.msra.mxu0 0
        %5269 = vmatprep.subr.bf16.mxu0 0
        %5270 = vmatpush1.bf16.xpose.msra.mxu0 0
        %5271 = vmatprep.subr.bf16.mxu0 0
        %5272 = vmatpush1.bf16.xpose.msra.mxu0 0
        %5273 = vmatprep.subr.bf16.mxu0 0
        %5274 = vmatpush1.bf16.xpose.msra.mxu0 0
        %5275 = vmatprep.subr.bf16.mxu0 0
        %5276 = vmatpush1.bf16.xpose.msra.mxu0 0
        %5277 = vmatprep.subr.bf16.mxu0 0
        %5278 = vmatpush1.bf16.xpose.msra.mxu0 0
        %5279 = vmatprep.subr.bf16.mxu0 0
        %5280 = vmatpush1.bf16.xpose.msra.mxu0 %v5263
        %5281 = vmatprep.subr.bf16.mxu0 0
        %5282 = vmatpush2.bf16.xpose.msra.mxu0 0
        %5283 = vmatprep.subr.bf16.mxu0 0
        %5284 = vmatpush2.bf16.xpose.msra.mxu0 0
        %5285 = vmatprep.subr.bf16.mxu0 0
        %5286 = vmatpush2.bf16.xpose.msra.mxu0 0
        %5287 = vmatprep.subr.bf16.mxu0 0
        %5288 = vmatpush2.bf16.xpose.msra.mxu0 0
        %5289 = vmatprep.subr.bf16.mxu0 0
        %5290 = vmatpush2.bf16.xpose.msra.mxu0 0
        %5291 = vmatprep.subr.bf16.mxu0 0
        %5292 = vmatpush2.bf16.xpose.msra.mxu0 0
        %5293 = vmatprep.subr.bf16.mxu0 0
        %5294 = vmatpush2.bf16.xpose.msra.mxu0 0
        %5295 = vmatprep.subr.bf16.mxu0 0
        %5296 = vmatpush2.bf16.xpose.msra.mxu0 0
        %5297 = vmatprep.mubr.bf16.mxu0 0
        %5298 = vmatmul.mubr.bf16.gmra.mxu0 %v5215
        %v5299 = vpop.f32.mrf.mxu0
        %v5300 = vadd.f32 0.0, %v5299
        %v5301 = vpop.f32.mrf.mxu0
        %v5302 = vpop.f32.mrf.mxu0
        %v5303 = vadd.f32 0.0, %v5302
        %v5304 = vpop.f32.mrf.mxu0
        %5305 = vmatprep.mubr.bf16.mxu0 0
        %5306 = vmatmul.mubr.bf16.gmra.mxu0 %v5218
        %v5307 = vpop.f32.mrf.mxu0
        %v5308 = vadd.f32 0.0, %v5307
        %v5309 = vpop.f32.mrf.mxu0
        %v5310 = vpop.f32.mrf.mxu0
        %v5311 = vadd.f32 0.0, %v5310
        %v5312 = vpop.f32.mrf.mxu0
        %5313 = vmatprep.mubr.bf16.mxu0 0
        %5314 = vmatmul.mubr.bf16.gmra.mxu0 %v5221
        %v5315 = vpop.f32.mrf.mxu0
        %v5316 = vadd.f32 0.0, %v5315
        %v5317 = vpop.f32.mrf.mxu0
        %v5318 = vpop.f32.mrf.mxu0
        %v5319 = vadd.f32 0.0, %v5318
        %v5320 = vpop.f32.mrf.mxu0
        %5321 = vmatprep.mubr.bf16.mxu0 0
        %5322 = vmatmul.mubr.bf16.gmra.mxu0 %v5224
        %v5323 = vpop.f32.mrf.mxu0
        %v5324 = vadd.f32 0.0, %v5323
        %v5325 = vpop.f32.mrf.mxu0
        %v5326 = vpop.f32.mrf.mxu0
        %v5327 = vadd.f32 0.0, %v5326
        %v5328 = vpop.f32.mrf.mxu0
        %5329 = vmatprep.mubr.bf16.mxu0 0
        %5330 = vmatmul.mubr.bf16.gmra.mxu0 %v5227
        %v5331 = vpop.f32.mrf.mxu0
        %v5332 = vadd.f32 0.0, %v5331
        %v5333 = vpop.f32.mrf.mxu0
        %v5334 = vpop.f32.mrf.mxu0
        %v5335 = vadd.f32 0.0, %v5334
        %v5336 = vpop.f32.mrf.mxu0
        %5337 = vmatprep.mubr.bf16.mxu0 0
        %5338 = vmatmul.mubr.bf16.gmra.mxu0 %v5230
        %v5339 = vpop.f32.mrf.mxu0
        %v5340 = vadd.f32 0.0, %v5339
        %v5341 = vpop.f32.mrf.mxu0
        %v5342 = vpop.f32.mrf.mxu0
        %v5343 = vadd.f32 0.0, %v5342
        %v5344 = vpop.f32.mrf.mxu0
        %5345 = vmatprep.mubr.bf16.mxu0 0
        %5346 = vmatmul.mubr.bf16.gmra.mxu0 %v5233
        %v5347 = vpop.f32.mrf.mxu0
        %v5348 = vadd.f32 0.0, %v5347
        %v5349 = vpop.f32.mrf.mxu0
        %v5350 = vpop.f32.mrf.mxu0
        %v5351 = vadd.f32 0.0, %v5350
        %v5352 = vpop.f32.mrf.mxu0
        %5353 = vmatprep.mubr.bf16.mxu0 0
        %5354 = vmatmul.mubr.bf16.gmra.mxu0 %v5236
        %v5355 = vpop.f32.mrf.mxu0
        %v5356 = vadd.f32 0.0, %v5355
        %v5357 = vpop.f32.mrf.mxu0
        %v5358 = vpop.f32.mrf.mxu0
        %v5359 = vadd.f32 0.0, %v5358
        %v5360 = vpop.f32.mrf.mxu0
        %5361 = vmatprep.mubr.bf16.mxu0 0
        %5362 = vmatmul.mubr.bf16.gmra.mxu0 %v5239
        %v5363 = vpop.f32.mrf.mxu0
        %v5364 = vadd.f32 0.0, %v5363
        %v5365 = vpop.f32.mrf.mxu0
        %v5366 = vpop.f32.mrf.mxu0
        %v5367 = vadd.f32 0.0, %v5366
        %v5368 = vpop.f32.mrf.mxu0
        %5369 = vmatprep.mubr.bf16.mxu0 0
        %5370 = vmatmul.mubr.bf16.gmra.mxu0 %v5242
        %v5371 = vpop.f32.mrf.mxu0
        %v5372 = vadd.f32 0.0, %v5371
        %v5373 = vpop.f32.mrf.mxu0
        %v5374 = vpop.f32.mrf.mxu0
        %v5375 = vadd.f32 0.0, %v5374
        %v5376 = vpop.f32.mrf.mxu0
        %5377 = vmatprep.mubr.bf16.mxu0 0
        %5378 = vmatmul.mubr.bf16.gmra.mxu0 %v5245
        %v5379 = vpop.f32.mrf.mxu0
        %v5380 = vadd.f32 0.0, %v5379
        %v5381 = vpop.f32.mrf.mxu0
        %v5382 = vpop.f32.mrf.mxu0
        %v5383 = vadd.f32 0.0, %v5382
        %v5384 = vpop.f32.mrf.mxu0
        %5385 = vmatprep.mubr.bf16.mxu0 0
        %5386 = vmatmul.mubr.bf16.gmra.mxu0 %v5248
        %v5387 = vpop.f32.mrf.mxu0
        %v5388 = vadd.f32 0.0, %v5387
        %v5389 = vpop.f32.mrf.mxu0
        %v5390 = vpop.f32.mrf.mxu0
        %v5391 = vadd.f32 0.0, %v5390
        %v5392 = vpop.f32.mrf.mxu0
        %5393 = vmatprep.mubr.bf16.mxu0 0
        %5394 = vmatmul.mubr.bf16.gmra.mxu0 %v5251
        %v5395 = vpop.f32.mrf.mxu0
        %v5396 = vadd.f32 0.0, %v5395
        %v5397 = vpop.f32.mrf.mxu0
        %v5398 = vpop.f32.mrf.mxu0
        %v5399 = vadd.f32 0.0, %v5398
        %v5400 = vpop.f32.mrf.mxu0
        %5401 = vmatprep.mubr.bf16.mxu0 0
        %5402 = vmatmul.mubr.bf16.gmra.mxu0 %v5254
        %v5403 = vpop.f32.mrf.mxu0
        %v5404 = vadd.f32 0.0, %v5403
        %v5405 = vpop.f32.mrf.mxu0
        %v5406 = vpop.f32.mrf.mxu0
        %v5407 = vadd.f32 0.0, %v5406
        %v5408 = vpop.f32.mrf.mxu0
        %5409 = vmatprep.mubr.bf16.mxu0 0
        %5410 = vmatmul.mubr.bf16.gmra.mxu0 %v5257
        %v5411 = vpop.f32.mrf.mxu0
        %v5412 = vadd.f32 0.0, %v5411
        %v5413 = vpop.f32.mrf.mxu0
        %v5414 = vpop.f32.mrf.mxu0
        %v5415 = vadd.f32 0.0, %v5414
        %v5416 = vpop.f32.mrf.mxu0
        %5417 = vmatprep.mubr.bf16.mxu0 0
        %5418 = vmatmul.mubr.bf16.gmra.mxu0 %v5260
        %v5419 = vpop.f32.mrf.mxu0
        %v5420 = vadd.f32 0.0, %v5419
        %v5421 = vpop.f32.mrf.mxu0
        %v5422 = vpop.f32.mrf.mxu0
        %v5423 = vadd.f32 0.0, %v5422
        %v5424 = vpop.f32.mrf.mxu0
        %5425 = vdwg.mxu0
        %v5426 = vsel %vm2930, %v5300, -inf
        %5427 = vmax.xlane.f32.xlu0 %v5426
        %v5428 = vpop.xlane.xlu0 %5427
        %v5429 = vsel %vm2930, %v5303, -inf
        %5430 = vmax.xlane.f32.xlu0 %v5429
        %v5431 = vpop.xlane.xlu0 %5430
        %v5432 = vsel %vm2930, %v5308, -inf
        %5433 = vmax.xlane.f32.xlu0 %v5432
        %v5434 = vpop.xlane.xlu0 %5433
        %v5435 = vsel %vm2930, %v5311, -inf
        %5436 = vmax.xlane.f32.xlu0 %v5435
        %v5437 = vpop.xlane.xlu0 %5436
        %v5438 = vsel %vm2930, %v5316, -inf
        %5439 = vmax.xlane.f32.xlu0 %v5438
        %v5440 = vpop.xlane.xlu0 %5439
        %v5441 = vsel %vm2930, %v5319, -inf
        %5442 = vmax.xlane.f32.xlu0 %v5441
        %v5443 = vpop.xlane.xlu0 %5442
        %v5444 = vsel %vm2930, %v5324, -inf
        %5445 = vmax.xlane.f32.xlu0 %v5444
        %v5446 = vpop.xlane.xlu0 %5445
        %v5447 = vsel %vm2930, %v5327, -inf
        %5448 = vmax.xlane.f32.xlu0 %v5447
        %v5449 = vpop.xlane.xlu0 %5448
        %v5450 = vsel %vm2930, %v5332, -inf
        %5451 = vmax.xlane.f32.xlu0 %v5450
        %v5452 = vpop.xlane.xlu0 %5451
        %v5453 = vsel %vm2930, %v5335, -inf
        %5454 = vmax.xlane.f32.xlu0 %v5453
        %v5455 = vpop.xlane.xlu0 %5454
        %v5456 = vsel %vm2930, %v5340, -inf
        %5457 = vmax.xlane.f32.xlu0 %v5456
        %v5458 = vpop.xlane.xlu0 %5457
        %v5459 = vsel %vm2930, %v5343, -inf
        %5460 = vmax.xlane.f32.xlu0 %v5459
        %v5461 = vpop.xlane.xlu0 %5460
        %v5462 = vsel %vm2930, %v5348, -inf
        %5463 = vmax.xlane.f32.xlu0 %v5462
        %v5464 = vpop.xlane.xlu0 %5463
        %v5465 = vsel %vm2930, %v5351, -inf
        %5466 = vmax.xlane.f32.xlu0 %v5465
        %v5467 = vpop.xlane.xlu0 %5466
        %v5468 = vsel %vm2930, %v5356, -inf
        %5469 = vmax.xlane.f32.xlu0 %v5468
        %v5470 = vpop.xlane.xlu0 %5469
        %v5471 = vsel %vm2930, %v5359, -inf
        %5472 = vmax.xlane.f32.xlu0 %v5471
        %v5473 = vpop.xlane.xlu0 %5472
        %v5474 = vsel %vm2930, %v5364, -inf
        %5475 = vmax.xlane.f32.xlu0 %v5474
        %v5476 = vpop.xlane.xlu0 %5475
        %v5477 = vsel %vm2930, %v5367, -inf
        %5478 = vmax.xlane.f32.xlu0 %v5477
        %v5479 = vpop.xlane.xlu0 %5478
        %v5480 = vsel %vm2930, %v5372, -inf
        %5481 = vmax.xlane.f32.xlu0 %v5480
        %v5482 = vpop.xlane.xlu0 %5481
        %v5483 = vsel %vm2930, %v5375, -inf
        %5484 = vmax.xlane.f32.xlu0 %v5483
        %v5485 = vpop.xlane.xlu0 %5484
        %v5486 = vsel %vm2930, %v5380, -inf
        %5487 = vmax.xlane.f32.xlu0 %v5486
        %v5488 = vpop.xlane.xlu0 %5487
        %v5489 = vsel %vm2930, %v5383, -inf
        %5490 = vmax.xlane.f32.xlu0 %v5489
        %v5491 = vpop.xlane.xlu0 %5490
        %v5492 = vsel %vm2930, %v5388, -inf
        %5493 = vmax.xlane.f32.xlu0 %v5492
        %v5494 = vpop.xlane.xlu0 %5493
        %v5495 = vsel %vm2930, %v5391, -inf
        %5496 = vmax.xlane.f32.xlu0 %v5495
        %v5497 = vpop.xlane.xlu0 %5496
        %v5498 = vsel %vm2930, %v5396, -inf
        %5499 = vmax.xlane.f32.xlu0 %v5498
        %v5500 = vpop.xlane.xlu0 %5499
        %v5501 = vsel %vm2930, %v5399, -inf
        %5502 = vmax.xlane.f32.xlu0 %v5501
        %v5503 = vpop.xlane.xlu0 %5502
        %v5504 = vsel %vm2930, %v5404, -inf
        %5505 = vmax.xlane.f32.xlu0 %v5504
        %v5506 = vpop.xlane.xlu0 %5505
        %v5507 = vsel %vm2930, %v5407, -inf
        %5508 = vmax.xlane.f32.xlu0 %v5507
        %v5509 = vpop.xlane.xlu0 %5508
        %v5510 = vsel %vm2930, %v5412, -inf
        %5511 = vmax.xlane.f32.xlu0 %v5510
        %v5512 = vpop.xlane.xlu0 %5511
        %v5513 = vsel %vm2930, %v5415, -inf
        %5514 = vmax.xlane.f32.xlu0 %v5513
        %v5515 = vpop.xlane.xlu0 %5514
        %v5516 = vsel %vm2930, %v5420, -inf
        %5517 = vmax.xlane.f32.xlu0 %v5516
        %v5518 = vpop.xlane.xlu0 %5517
        %v5519 = vsel %vm2930, %v5423, -inf
        %5520 = vmax.xlane.f32.xlu0 %v5519
        %v5521 = vpop.xlane.xlu0 %5520
        %v5522 = vsub.f32 %v5300, %v5428
        %v5523 = vsub.f32 %v5303, %v5431
        %v5524 = vsub.f32 %v5308, %v5434
        %v5525 = vsub.f32 %v5311, %v5437
        %v5526 = vsub.f32 %v5316, %v5440
        %v5527 = vsub.f32 %v5319, %v5443
        %v5528 = vsub.f32 %v5324, %v5446
        %v5529 = vsub.f32 %v5327, %v5449
        %v5530 = vsub.f32 %v5332, %v5452
        %v5531 = vsub.f32 %v5335, %v5455
        %v5532 = vsub.f32 %v5340, %v5458
        %v5533 = vsub.f32 %v5343, %v5461
        %v5534 = vsub.f32 %v5348, %v5464
        %v5535 = vsub.f32 %v5351, %v5467
        %v5536 = vsub.f32 %v5356, %v5470
        %v5537 = vsub.f32 %v5359, %v5473
        %v5538 = vsub.f32 %v5364, %v5476
        %v5539 = vsub.f32 %v5367, %v5479
        %v5540 = vsub.f32 %v5372, %v5482
        %v5541 = vsub.f32 %v5375, %v5485
        %v5542 = vsub.f32 %v5380, %v5488
        %v5543 = vsub.f32 %v5383, %v5491
        %v5544 = vsub.f32 %v5388, %v5494
        %v5545 = vsub.f32 %v5391, %v5497
        %v5546 = vsub.f32 %v5396, %v5500
        %v5547 = vsub.f32 %v5399, %v5503
        %v5548 = vsub.f32 %v5404, %v5506
        %v5549 = vsub.f32 %v5407, %v5509
        %v5550 = vsub.f32 %v5412, %v5512
        %v5551 = vsub.f32 %v5415, %v5515
        %v5552 = vsub.f32 %v5420, %v5518
        %v5553 = vsub.f32 %v5423, %v5521
        %v5554 = vmul.f32 %v5522, 1.442695
        %v5555 = vpow.pop %v5554
        %v5556 = vmul.f32 %v5523, 1.442695
        %v5557 = vpow.pop %v5556
        %v5558 = vmul.f32 %v5524, 1.442695
        %v5559 = vpow.pop %v5558
        %v5560 = vmul.f32 %v5525, 1.442695
        %v5561 = vpow.pop %v5560
        %v5562 = vmul.f32 %v5526, 1.442695
        %v5563 = vpow.pop %v5562
        %v5564 = vmul.f32 %v5527, 1.442695
        %v5565 = vpow.pop %v5564
        %v5566 = vmul.f32 %v5528, 1.442695
        %v5567 = vpow.pop %v5566
        %v5568 = vmul.f32 %v5529, 1.442695
        %v5569 = vpow.pop %v5568
        %v5570 = vmul.f32 %v5530, 1.442695
        %v5571 = vpow.pop %v5570
        %v5572 = vmul.f32 %v5531, 1.442695
        %v5573 = vpow.pop %v5572
        %v5574 = vmul.f32 %v5532, 1.442695
        %v5575 = vpow.pop %v5574
        %v5576 = vmul.f32 %v5533, 1.442695
        %v5577 = vpow.pop %v5576
        %v5578 = vmul.f32 %v5534, 1.442695
        %v5579 = vpow.pop %v5578
        %v5580 = vmul.f32 %v5535, 1.442695
        %v5581 = vpow.pop %v5580
        %v5582 = vmul.f32 %v5536, 1.442695
        %v5583 = vpow.pop %v5582
        %v5584 = vmul.f32 %v5537, 1.442695
        %v5585 = vpow.pop %v5584
        %v5586 = vmul.f32 %v5538, 1.442695
        %v5587 = vpow.pop %v5586
        %v5588 = vmul.f32 %v5539, 1.442695
        %v5589 = vpow.pop %v5588
        %v5590 = vmul.f32 %v5540, 1.442695
        %v5591 = vpow.pop %v5590
        %v5592 = vmul.f32 %v5541, 1.442695
        %v5593 = vpow.pop %v5592
        %v5594 = vmul.f32 %v5542, 1.442695
        %v5595 = vpow.pop %v5594
        %v5596 = vmul.f32 %v5543, 1.442695
        %v5597 = vpow.pop %v5596
        %v5598 = vmul.f32 %v5544, 1.442695
        %v5599 = vpow.pop %v5598
        %v5600 = vmul.f32 %v5545, 1.442695
        %v5601 = vpow.pop %v5600
        %v5602 = vmul.f32 %v5546, 1.442695
        %v5603 = vpow.pop %v5602
        %v5604 = vmul.f32 %v5547, 1.442695
        %v5605 = vpow.pop %v5604
        %v5606 = vmul.f32 %v5548, 1.442695
        %v5607 = vpow.pop %v5606
        %v5608 = vmul.f32 %v5549, 1.442695
        %v5609 = vpow.pop %v5608
        %v5610 = vmul.f32 %v5550, 1.442695
        %v5611 = vpow.pop %v5610
        %v5612 = vmul.f32 %v5551, 1.442695
        %v5613 = vpow.pop %v5612
        %v5614 = vmul.f32 %v5552, 1.442695
        %v5615 = vpow.pop %v5614
        %v5616 = vmul.f32 %v5553, 1.442695
        %v5617 = vpow.pop %v5616
        %v5618 = vsel %vm2930, %v5555, 0.0
        %5619 = vadd.xlane.f32.xlu0 %v5618
        %v5620 = vpop.xlane.xlu0 %5619
        %v5621 = vsel %vm2930, %v5557, 0.0
        %5622 = vadd.xlane.f32.xlu0 %v5621
        %v5623 = vpop.xlane.xlu0 %5622
        %v5624 = vsel %vm2930, %v5559, 0.0
        %5625 = vadd.xlane.f32.xlu0 %v5624
        %v5626 = vpop.xlane.xlu0 %5625
        %v5627 = vsel %vm2930, %v5561, 0.0
        %5628 = vadd.xlane.f32.xlu0 %v5627
        %v5629 = vpop.xlane.xlu0 %5628
        %v5630 = vsel %vm2930, %v5563, 0.0
        %5631 = vadd.xlane.f32.xlu0 %v5630
        %v5632 = vpop.xlane.xlu0 %5631
        %v5633 = vsel %vm2930, %v5565, 0.0
        %5634 = vadd.xlane.f32.xlu0 %v5633
        %v5635 = vpop.xlane.xlu0 %5634
        %v5636 = vsel %vm2930, %v5567, 0.0
        %5637 = vadd.xlane.f32.xlu0 %v5636
        %v5638 = vpop.xlane.xlu0 %5637
        %v5639 = vsel %vm2930, %v5569, 0.0
        %5640 = vadd.xlane.f32.xlu0 %v5639
        %v5641 = vpop.xlane.xlu0 %5640
        %v5642 = vsel %vm2930, %v5571, 0.0
        %5643 = vadd.xlane.f32.xlu0 %v5642
        %v5644 = vpop.xlane.xlu0 %5643
        %v5645 = vsel %vm2930, %v5573, 0.0
        %5646 = vadd.xlane.f32.xlu0 %v5645
        %v5647 = vpop.xlane.xlu0 %5646
        %v5648 = vsel %vm2930, %v5575, 0.0
        %5649 = vadd.xlane.f32.xlu0 %v5648
        %v5650 = vpop.xlane.xlu0 %5649
        %v5651 = vsel %vm2930, %v5577, 0.0
        %5652 = vadd.xlane.f32.xlu0 %v5651
        %v5653 = vpop.xlane.xlu0 %5652
        %v5654 = vsel %vm2930, %v5579, 0.0
        %5655 = vadd.xlane.f32.xlu0 %v5654
        %v5656 = vpop.xlane.xlu0 %5655
        %v5657 = vsel %vm2930, %v5581, 0.0
        %5658 = vadd.xlane.f32.xlu0 %v5657
        %v5659 = vpop.xlane.xlu0 %5658
        %v5660 = vsel %vm2930, %v5583, 0.0
        %5661 = vadd.xlane.f32.xlu0 %v5660
        %v5662 = vpop.xlane.xlu0 %5661
        %v5663 = vsel %vm2930, %v5585, 0.0
        %5664 = vadd.xlane.f32.xlu0 %v5663
        %v5665 = vpop.xlane.xlu0 %5664
        %v5666 = vsel %vm2930, %v5587, 0.0
        %5667 = vadd.xlane.f32.xlu0 %v5666
        %v5668 = vpop.xlane.xlu0 %5667
        %v5669 = vsel %vm2930, %v5589, 0.0
        %5670 = vadd.xlane.f32.xlu0 %v5669
        %v5671 = vpop.xlane.xlu0 %5670
        %v5672 = vsel %vm2930, %v5591, 0.0
        %5673 = vadd.xlane.f32.xlu0 %v5672
        %v5674 = vpop.xlane.xlu0 %5673
        %v5675 = vsel %vm2930, %v5593, 0.0
        %5676 = vadd.xlane.f32.xlu0 %v5675
        %v5677 = vpop.xlane.xlu0 %5676
        %v5678 = vsel %vm2930, %v5595, 0.0
        %5679 = vadd.xlane.f32.xlu0 %v5678
        %v5680 = vpop.xlane.xlu0 %5679
        %v5681 = vsel %vm2930, %v5597, 0.0
        %5682 = vadd.xlane.f32.xlu0 %v5681
        %v5683 = vpop.xlane.xlu0 %5682
        %v5684 = vsel %vm2930, %v5599, 0.0
        %5685 = vadd.xlane.f32.xlu0 %v5684
        %v5686 = vpop.xlane.xlu0 %5685
        %v5687 = vsel %vm2930, %v5601, 0.0
        %5688 = vadd.xlane.f32.xlu0 %v5687
        %v5689 = vpop.xlane.xlu0 %5688
        %v5690 = vsel %vm2930, %v5603, 0.0
        %5691 = vadd.xlane.f32.xlu0 %v5690
        %v5692 = vpop.xlane.xlu0 %5691
        %v5693 = vsel %vm2930, %v5605, 0.0
        %5694 = vadd.xlane.f32.xlu0 %v5693
        %v5695 = vpop.xlane.xlu0 %5694
        %v5696 = vsel %vm2930, %v5607, 0.0
        %5697 = vadd.xlane.f32.xlu0 %v5696
        %v5698 = vpop.xlane.xlu0 %5697
        %v5699 = vsel %vm2930, %v5609, 0.0
        %5700 = vadd.xlane.f32.xlu0 %v5699
        %v5701 = vpop.xlane.xlu0 %5700
        %v5702 = vsel %vm2930, %v5611, 0.0
        %5703 = vadd.xlane.f32.xlu0 %v5702
        %v5704 = vpop.xlane.xlu0 %5703
        %v5705 = vsel %vm2930, %v5613, 0.0
        %5706 = vadd.xlane.f32.xlu0 %v5705
        %v5707 = vpop.xlane.xlu0 %5706
        %v5708 = vsel %vm2930, %v5615, 0.0
        %5709 = vadd.xlane.f32.xlu0 %v5708
        %v5710 = vpop.xlane.xlu0 %5709
        %v5711 = vsel %vm2930, %v5617, 0.0
        %5712 = vadd.xlane.f32.xlu0 %v5711
        %v5713 = vpop.xlane.xlu0 %5712
        %v5714 = vrcp.pop %v5620
        %v5715 = vrcp.pop %v5623
        %v5716 = vrcp.pop %v5626
        %v5717 = vrcp.pop %v5629
        %v5718 = vrcp.pop %v5632
        %v5719 = vrcp.pop %v5635
        %v5720 = vrcp.pop %v5638
        %v5721 = vrcp.pop %v5641
        %v5722 = vrcp.pop %v5644
        %v5723 = vrcp.pop %v5647
        %v5724 = vrcp.pop %v5650
        %v5725 = vrcp.pop %v5653
        %v5726 = vrcp.pop %v5656
        %v5727 = vrcp.pop %v5659
        %v5728 = vrcp.pop %v5662
        %v5729 = vrcp.pop %v5665
        %v5730 = vrcp.pop %v5668
        %v5731 = vrcp.pop %v5671
        %v5732 = vrcp.pop %v5674
        %v5733 = vrcp.pop %v5677
        %v5734 = vrcp.pop %v5680
        %v5735 = vrcp.pop %v5683
        %v5736 = vrcp.pop %v5686
        %v5737 = vrcp.pop %v5689
        %v5738 = vrcp.pop %v5692
        %v5739 = vrcp.pop %v5695
        %v5740 = vrcp.pop %v5698
        %v5741 = vrcp.pop %v5701
        %v5742 = vrcp.pop %v5704
        %v5743 = vrcp.pop %v5707
        %v5744 = vrcp.pop %v5710
        %v5745 = vrcp.pop %v5713
        %v5746 = vmul.f32 %v5555, %v5714
        %v5747 = vmul.f32 %v5557, %v5715
        %v5748 = vmul.f32 %v5559, %v5716
        %v5749 = vmul.f32 %v5561, %v5717
        %v5750 = vmul.f32 %v5563, %v5718
        %v5751 = vmul.f32 %v5565, %v5719
        %v5752 = vmul.f32 %v5567, %v5720
        %v5753 = vmul.f32 %v5569, %v5721
        %v5754 = vmul.f32 %v5571, %v5722
        %v5755 = vmul.f32 %v5573, %v5723
        %v5756 = vmul.f32 %v5575, %v5724
        %v5757 = vmul.f32 %v5577, %v5725
        %v5758 = vmul.f32 %v5579, %v5726
        %v5759 = vmul.f32 %v5581, %v5727
        %v5760 = vmul.f32 %v5583, %v5728
        %v5761 = vmul.f32 %v5585, %v5729
        %v5762 = vmul.f32 %v5587, %v5730
        %v5763 = vmul.f32 %v5589, %v5731
        %v5764 = vmul.f32 %v5591, %v5732
        %v5765 = vmul.f32 %v5593, %v5733
        %v5766 = vmul.f32 %v5595, %v5734
        %v5767 = vmul.f32 %v5597, %v5735
        %v5768 = vmul.f32 %v5599, %v5736
        %v5769 = vmul.f32 %v5601, %v5737
        %v5770 = vmul.f32 %v5603, %v5738
        %v5771 = vmul.f32 %v5605, %v5739
        %v5772 = vmul.f32 %v5607, %v5740
        %v5773 = vmul.f32 %v5609, %v5741
        %v5774 = vmul.f32 %v5611, %v5742
        %v5775 = vmul.f32 %v5613, %v5743
        %v5776 = vmul.f32 %v5615, %v5744
        %v5777 = vmul.f32 %v5617, %v5745
        %v5778 = vpack.c.bf16 %v5747, %v5746
        %v5779 = vpack.c.bf16 %v5749, %v5748
        %v5780 = vpack.c.bf16 %v5751, %v5750
        %v5781 = vpack.c.bf16 %v5753, %v5752
        %v5782 = vpack.c.bf16 %v5755, %v5754
        %v5783 = vpack.c.bf16 %v5757, %v5756
        %v5784 = vpack.c.bf16 %v5759, %v5758
        %v5785 = vpack.c.bf16 %v5761, %v5760
        %v5786 = vpack.c.bf16 %v5763, %v5762
        %v5787 = vpack.c.bf16 %v5765, %v5764
        %v5788 = vpack.c.bf16 %v5767, %v5766
        %v5789 = vpack.c.bf16 %v5769, %v5768
        %v5790 = vpack.c.bf16 %v5771, %v5770
        %v5791 = vpack.c.bf16 %v5773, %v5772
        %v5792 = vpack.c.bf16 %v5775, %v5774
        %v5793 = vpack.c.bf16 %v5777, %v5776
        %5794 = vrot.lane.b32.xlu0 %v3301, 32
        %v5795 = vpop.permute.xlu0 %5794
        %v5798 = vsel %vm2930, %v5778, 0
        %v5801 = vsel %vm2930, %v5779, 0
        %v5804 = vsel %vm2930, %v5780, 0
        %v5807 = vsel %vm2930, %v5781, 0
        %v5810 = vsel %vm2930, %v5782, 0
        %v5813 = vsel %vm2930, %v5783, 0
        %v5816 = vsel %vm2930, %v5784, 0
        %v5819 = vsel %vm2930, %v5785, 0
        %v5822 = vsel %vm2930, %v5786, 0
        %v5825 = vsel %vm2930, %v5787, 0
        %v5828 = vsel %vm2930, %v5788, 0
        %v5831 = vsel %vm2930, %v5789, 0
        %v5834 = vsel %vm2930, %v5790, 0
        %v5837 = vsel %vm2930, %v5791, 0
        %v5840 = vsel %vm2930, %v5792, 0
        %v5843 = vsel %vm2930, %v5793, 0
        %5845 = vmatprep.subr.bf16.mxu0 0
        %5846 = vmatpush1.bf16.msra.mxu0 0
        %5847 = vmatprep.subr.bf16.mxu0 0
        %5848 = vmatpush1.bf16.msra.mxu0 0
        %5849 = vmatprep.subr.bf16.mxu0 0
        %5850 = vmatpush1.bf16.msra.mxu0 0
        %5851 = vmatprep.subr.bf16.mxu0 0
        %5852 = vmatpush1.bf16.msra.mxu0 0
        %5853 = vmatprep.subr.bf16.mxu0 0
        %5854 = vmatpush1.bf16.msra.mxu0 0
        %5855 = vmatprep.subr.bf16.mxu0 0
        %5856 = vmatpush1.bf16.msra.mxu0 0
        %5857 = vmatprep.subr.bf16.mxu0 0
        %5858 = vmatpush1.bf16.msra.mxu0 0
        %5859 = vmatprep.subr.bf16.mxu0 0
        %5860 = vmatpush1.bf16.msra.mxu0 %v5795
        %5861 = vmatprep.subr.bf16.mxu0 0
        %5862 = vmatpush2.bf16.msra.mxu0 0
        %5863 = vmatprep.subr.bf16.mxu0 0
        %5864 = vmatpush2.bf16.msra.mxu0 0
        %5865 = vmatprep.subr.bf16.mxu0 0
        %5866 = vmatpush2.bf16.msra.mxu0 0
        %5867 = vmatprep.subr.bf16.mxu0 0
        %5868 = vmatpush2.bf16.msra.mxu0 0
        %5869 = vmatprep.subr.bf16.mxu0 0
        %5870 = vmatpush2.bf16.msra.mxu0 0
        %5871 = vmatprep.subr.bf16.mxu0 0
        %5872 = vmatpush2.bf16.msra.mxu0 0
        %5873 = vmatprep.subr.bf16.mxu0 0
        %5874 = vmatpush2.bf16.msra.mxu0 0
        %5875 = vmatprep.subr.bf16.mxu0 0
        %5876 = vmatpush2.bf16.msra.mxu0 0
        %5877 = vmatprep.mubr.bf16.mxu0 0
        %5878 = vmatmul.mubr.bf16.gmra.mxu0 %v5798
        %v5879 = vpop.f32.mrf.mxu0
        %v5880 = vadd.f32 0.0, %v5879
        %v5881 = vpop.f32.mrf.mxu0
        %v5882 = vpop.f32.mrf.mxu0
        %v5883 = vadd.f32 0.0, %v5882
        %v5884 = vpop.f32.mrf.mxu0
        %5885 = vmatprep.mubr.bf16.mxu0 0
        %5886 = vmatmul.mubr.bf16.gmra.mxu0 %v5801
        %v5887 = vpop.f32.mrf.mxu0
        %v5888 = vadd.f32 0.0, %v5887
        %v5889 = vpop.f32.mrf.mxu0
        %v5890 = vpop.f32.mrf.mxu0
        %v5891 = vadd.f32 0.0, %v5890
        %v5892 = vpop.f32.mrf.mxu0
        %5893 = vmatprep.mubr.bf16.mxu0 0
        %5894 = vmatmul.mubr.bf16.gmra.mxu0 %v5804
        %v5895 = vpop.f32.mrf.mxu0
        %v5896 = vadd.f32 0.0, %v5895
        %v5897 = vpop.f32.mrf.mxu0
        %v5898 = vpop.f32.mrf.mxu0
        %v5899 = vadd.f32 0.0, %v5898
        %v5900 = vpop.f32.mrf.mxu0
        %5901 = vmatprep.mubr.bf16.mxu0 0
        %5902 = vmatmul.mubr.bf16.gmra.mxu0 %v5807
        %v5903 = vpop.f32.mrf.mxu0
        %v5904 = vadd.f32 0.0, %v5903
        %v5905 = vpop.f32.mrf.mxu0
        %v5906 = vpop.f32.mrf.mxu0
        %v5907 = vadd.f32 0.0, %v5906
        %v5908 = vpop.f32.mrf.mxu0
        %5909 = vmatprep.mubr.bf16.mxu0 0
        %5910 = vmatmul.mubr.bf16.gmra.mxu0 %v5810
        %v5911 = vpop.f32.mrf.mxu0
        %v5912 = vadd.f32 0.0, %v5911
        %v5913 = vpop.f32.mrf.mxu0
        %v5914 = vpop.f32.mrf.mxu0
        %v5915 = vadd.f32 0.0, %v5914
        %v5916 = vpop.f32.mrf.mxu0
        %5917 = vmatprep.mubr.bf16.mxu0 0
        %5918 = vmatmul.mubr.bf16.gmra.mxu0 %v5813
        %v5919 = vpop.f32.mrf.mxu0
        %v5920 = vadd.f32 0.0, %v5919
        %v5921 = vpop.f32.mrf.mxu0
        %v5922 = vpop.f32.mrf.mxu0
        %v5923 = vadd.f32 0.0, %v5922
        %v5924 = vpop.f32.mrf.mxu0
        %5925 = vmatprep.mubr.bf16.mxu0 0
        %5926 = vmatmul.mubr.bf16.gmra.mxu0 %v5816
        %v5927 = vpop.f32.mrf.mxu0
        %v5928 = vadd.f32 0.0, %v5927
        %v5929 = vpop.f32.mrf.mxu0
        %v5930 = vpop.f32.mrf.mxu0
        %v5931 = vadd.f32 0.0, %v5930
        %v5932 = vpop.f32.mrf.mxu0
        %5933 = vmatprep.mubr.bf16.mxu0 0
        %5934 = vmatmul.mubr.bf16.gmra.mxu0 %v5819
        %v5935 = vpop.f32.mrf.mxu0
        %v5936 = vadd.f32 0.0, %v5935
        %v5937 = vpop.f32.mrf.mxu0
        %v5938 = vpop.f32.mrf.mxu0
        %v5939 = vadd.f32 0.0, %v5938
        %v5940 = vpop.f32.mrf.mxu0
        %5941 = vmatprep.mubr.bf16.mxu0 0
        %5942 = vmatmul.mubr.bf16.gmra.mxu0 %v5822
        %v5943 = vpop.f32.mrf.mxu0
        %v5944 = vadd.f32 0.0, %v5943
        %v5945 = vpop.f32.mrf.mxu0
        %v5946 = vpop.f32.mrf.mxu0
        %v5947 = vadd.f32 0.0, %v5946
        %v5948 = vpop.f32.mrf.mxu0
        %5949 = vmatprep.mubr.bf16.mxu0 0
        %5950 = vmatmul.mubr.bf16.gmra.mxu0 %v5825
        %v5951 = vpop.f32.mrf.mxu0
        %v5952 = vadd.f32 0.0, %v5951
        %v5953 = vpop.f32.mrf.mxu0
        %v5954 = vpop.f32.mrf.mxu0
        %v5955 = vadd.f32 0.0, %v5954
        %v5956 = vpop.f32.mrf.mxu0
        %5957 = vmatprep.mubr.bf16.mxu0 0
        %5958 = vmatmul.mubr.bf16.gmra.mxu0 %v5828
        %v5959 = vpop.f32.mrf.mxu0
        %v5960 = vadd.f32 0.0, %v5959
        %v5961 = vpop.f32.mrf.mxu0
        %v5962 = vpop.f32.mrf.mxu0
        %v5963 = vadd.f32 0.0, %v5962
        %v5964 = vpop.f32.mrf.mxu0
        %5965 = vmatprep.mubr.bf16.mxu0 0
        %5966 = vmatmul.mubr.bf16.gmra.mxu0 %v5831
        %v5967 = vpop.f32.mrf.mxu0
        %v5968 = vadd.f32 0.0, %v5967
        %v5969 = vpop.f32.mrf.mxu0
        %v5970 = vpop.f32.mrf.mxu0
        %v5971 = vadd.f32 0.0, %v5970
        %v5972 = vpop.f32.mrf.mxu0
        %5973 = vmatprep.mubr.bf16.mxu0 0
        %5974 = vmatmul.mubr.bf16.gmra.mxu0 %v5834
        %v5975 = vpop.f32.mrf.mxu0
        %v5976 = vadd.f32 0.0, %v5975
        %v5977 = vpop.f32.mrf.mxu0
        %v5978 = vpop.f32.mrf.mxu0
        %v5979 = vadd.f32 0.0, %v5978
        %v5980 = vpop.f32.mrf.mxu0
        %5981 = vmatprep.mubr.bf16.mxu0 0
        %5982 = vmatmul.mubr.bf16.gmra.mxu0 %v5837
        %v5983 = vpop.f32.mrf.mxu0
        %v5984 = vadd.f32 0.0, %v5983
        %v5985 = vpop.f32.mrf.mxu0
        %v5986 = vpop.f32.mrf.mxu0
        %v5987 = vadd.f32 0.0, %v5986
        %v5988 = vpop.f32.mrf.mxu0
        %5989 = vmatprep.mubr.bf16.mxu0 0
        %5990 = vmatmul.mubr.bf16.gmra.mxu0 %v5840
        %v5991 = vpop.f32.mrf.mxu0
        %v5992 = vadd.f32 0.0, %v5991
        %v5993 = vpop.f32.mrf.mxu0
        %v5994 = vpop.f32.mrf.mxu0
        %v5995 = vadd.f32 0.0, %v5994
        %v5996 = vpop.f32.mrf.mxu0
        %5997 = vmatprep.mubr.bf16.mxu0 0
        %5998 = vmatmul.mubr.bf16.gmra.mxu0 %v5843
        %v5999 = vpop.f32.mrf.mxu0
        %v6000 = vadd.f32 0.0, %v5999
        %v6001 = vpop.f32.mrf.mxu0
        %v6002 = vpop.f32.mrf.mxu0
        %v6003 = vadd.f32 0.0, %v6002
        %v6004 = vpop.f32.mrf.mxu0
        %6005 = vdwg.mxu0
        %6038 = vrot.lane.b32.xlu0 %v4228, 32
        %v6039 = vpop.permute.xlu0 %6038
        %6040 = vrot.lane.b32.xlu0 %v4231, 32
        %v6041 = vpop.permute.xlu0 %6040
        %6042 = vrot.lane.b32.xlu0 %v4236, 32
        %v6043 = vpop.permute.xlu0 %6042
        %6044 = vrot.lane.b32.xlu0 %v4239, 32
        %v6045 = vpop.permute.xlu0 %6044
        %6046 = vrot.lane.b32.xlu0 %v4244, 32
        %v6047 = vpop.permute.xlu0 %6046
        %6048 = vrot.lane.b32.xlu0 %v4247, 32
        %v6049 = vpop.permute.xlu0 %6048
        %6050 = vrot.lane.b32.xlu0 %v4252, 32
        %v6051 = vpop.permute.xlu0 %6050
        %6052 = vrot.lane.b32.xlu0 %v4255, 32
        %v6053 = vpop.permute.xlu0 %6052
        %6054 = vrot.lane.b32.xlu0 %v4260, 32
        %v6055 = vpop.permute.xlu0 %6054
        %6056 = vrot.lane.b32.xlu0 %v4263, 32
        %v6057 = vpop.permute.xlu0 %6056
        %6058 = vrot.lane.b32.xlu0 %v4268, 32
        %v6059 = vpop.permute.xlu0 %6058
        %6060 = vrot.lane.b32.xlu0 %v4271, 32
        %v6061 = vpop.permute.xlu0 %6060
        %6062 = vrot.lane.b32.xlu0 %v4276, 32
        %v6063 = vpop.permute.xlu0 %6062
        %6064 = vrot.lane.b32.xlu0 %v4279, 32
        %v6065 = vpop.permute.xlu0 %6064
        %6066 = vrot.lane.b32.xlu0 %v4284, 32
        %v6067 = vpop.permute.xlu0 %6066
        %6068 = vrot.lane.b32.xlu0 %v4287, 32
        %v6069 = vpop.permute.xlu0 %6068
        %6070 = vrot.lane.b32.xlu0 %v4292, 32
        %v6071 = vpop.permute.xlu0 %6070
        %6072 = vrot.lane.b32.xlu0 %v4295, 32
        %v6073 = vpop.permute.xlu0 %6072
        %6074 = vrot.lane.b32.xlu0 %v4300, 32
        %v6075 = vpop.permute.xlu0 %6074
        %6076 = vrot.lane.b32.xlu0 %v4303, 32
        %v6077 = vpop.permute.xlu0 %6076
        %6078 = vrot.lane.b32.xlu0 %v4308, 32
        %v6079 = vpop.permute.xlu0 %6078
        %6080 = vrot.lane.b32.xlu0 %v4311, 32
        %v6081 = vpop.permute.xlu0 %6080
        %6082 = vrot.lane.b32.xlu0 %v4316, 32
        %v6083 = vpop.permute.xlu0 %6082
        %6084 = vrot.lane.b32.xlu0 %v4319, 32
        %v6085 = vpop.permute.xlu0 %6084
        %6086 = vrot.lane.b32.xlu0 %v4324, 32
        %v6087 = vpop.permute.xlu0 %6086
        %6088 = vrot.lane.b32.xlu0 %v4327, 32
        %v6089 = vpop.permute.xlu0 %6088
        %6090 = vrot.lane.b32.xlu0 %v4332, 32
        %v6091 = vpop.permute.xlu0 %6090
        %6092 = vrot.lane.b32.xlu0 %v4335, 32
        %v6093 = vpop.permute.xlu0 %6092
        %6094 = vrot.lane.b32.xlu0 %v4340, 32
        %v6095 = vpop.permute.xlu0 %6094
        %6096 = vrot.lane.b32.xlu0 %v4343, 32
        %v6097 = vpop.permute.xlu0 %6096
        %6098 = vrot.lane.b32.xlu0 %v4348, 32
        %v6099 = vpop.permute.xlu0 %6098
        %6100 = vrot.lane.b32.xlu0 %v4351, 32
        %v6101 = vpop.permute.xlu0 %6100
        %6166 = vrot.lane.b32.xlu0 %v5054, 64
        %v6167 = vpop.permute.xlu0 %6166
        %6168 = vrot.lane.b32.xlu0 %v5057, 64
        %v6169 = vpop.permute.xlu0 %6168
        %6170 = vrot.lane.b32.xlu0 %v5062, 64
        %v6171 = vpop.permute.xlu0 %6170
        %6172 = vrot.lane.b32.xlu0 %v5065, 64
        %v6173 = vpop.permute.xlu0 %6172
        %6174 = vrot.lane.b32.xlu0 %v5070, 64
        %v6175 = vpop.permute.xlu0 %6174
        %6176 = vrot.lane.b32.xlu0 %v5073, 64
        %v6177 = vpop.permute.xlu0 %6176
        %6178 = vrot.lane.b32.xlu0 %v5078, 64
        %v6179 = vpop.permute.xlu0 %6178
        %6180 = vrot.lane.b32.xlu0 %v5081, 64
        %v6181 = vpop.permute.xlu0 %6180
        %6182 = vrot.lane.b32.xlu0 %v5086, 64
        %v6183 = vpop.permute.xlu0 %6182
        %6184 = vrot.lane.b32.xlu0 %v5089, 64
        %v6185 = vpop.permute.xlu0 %6184
        %6186 = vrot.lane.b32.xlu0 %v5094, 64
        %v6187 = vpop.permute.xlu0 %6186
        %6188 = vrot.lane.b32.xlu0 %v5097, 64
        %v6189 = vpop.permute.xlu0 %6188
        %6190 = vrot.lane.b32.xlu0 %v5102, 64
        %v6191 = vpop.permute.xlu0 %6190
        %6192 = vrot.lane.b32.xlu0 %v5105, 64
        %v6193 = vpop.permute.xlu0 %6192
        %6194 = vrot.lane.b32.xlu0 %v5110, 64
        %v6195 = vpop.permute.xlu0 %6194
        %6196 = vrot.lane.b32.xlu0 %v5113, 64
        %v6197 = vpop.permute.xlu0 %6196
        %6198 = vrot.lane.b32.xlu0 %v5118, 64
        %v6199 = vpop.permute.xlu0 %6198
        %6200 = vrot.lane.b32.xlu0 %v5121, 64
        %v6201 = vpop.permute.xlu0 %6200
        %6202 = vrot.lane.b32.xlu0 %v5126, 64
        %v6203 = vpop.permute.xlu0 %6202
        %6204 = vrot.lane.b32.xlu0 %v5129, 64
        %v6205 = vpop.permute.xlu0 %6204
        %6206 = vrot.lane.b32.xlu0 %v5134, 64
        %v6207 = vpop.permute.xlu0 %6206
        %6208 = vrot.lane.b32.xlu0 %v5137, 64
        %v6209 = vpop.permute.xlu0 %6208
        %6210 = vrot.lane.b32.xlu0 %v5142, 64
        %v6211 = vpop.permute.xlu0 %6210
        %6212 = vrot.lane.b32.xlu0 %v5145, 64
        %v6213 = vpop.permute.xlu0 %6212
        %6214 = vrot.lane.b32.xlu0 %v5150, 64
        %v6215 = vpop.permute.xlu0 %6214
        %6216 = vrot.lane.b32.xlu0 %v5153, 64
        %v6217 = vpop.permute.xlu0 %6216
        %6218 = vrot.lane.b32.xlu0 %v5158, 64
        %v6219 = vpop.permute.xlu0 %6218
        %6220 = vrot.lane.b32.xlu0 %v5161, 64
        %v6221 = vpop.permute.xlu0 %6220
        %6222 = vrot.lane.b32.xlu0 %v5166, 64
        %v6223 = vpop.permute.xlu0 %6222
        %6224 = vrot.lane.b32.xlu0 %v5169, 64
        %v6225 = vpop.permute.xlu0 %6224
        %6226 = vrot.lane.b32.xlu0 %v5174, 64
        %v6227 = vpop.permute.xlu0 %6226
        %6228 = vrot.lane.b32.xlu0 %v5177, 64
        %v6229 = vpop.permute.xlu0 %6228
        %6294 = vrot.lane.b32.xlu0 %v5880, 96
        %v6295 = vpop.permute.xlu0 %6294
        %6296 = vrot.lane.b32.xlu0 %v5883, 96
        %v6297 = vpop.permute.xlu0 %6296
        %6298 = vrot.lane.b32.xlu0 %v5888, 96
        %v6299 = vpop.permute.xlu0 %6298
        %6300 = vrot.lane.b32.xlu0 %v5891, 96
        %v6301 = vpop.permute.xlu0 %6300
        %6302 = vrot.lane.b32.xlu0 %v5896, 96
        %v6303 = vpop.permute.xlu0 %6302
        %6304 = vrot.lane.b32.xlu0 %v5899, 96
        %v6305 = vpop.permute.xlu0 %6304
        %6306 = vrot.lane.b32.xlu0 %v5904, 96
        %v6307 = vpop.permute.xlu0 %6306
        %6308 = vrot.lane.b32.xlu0 %v5907, 96
        %v6309 = vpop.permute.xlu0 %6308
        %6310 = vrot.lane.b32.xlu0 %v5912, 96
        %v6311 = vpop.permute.xlu0 %6310
        %6312 = vrot.lane.b32.xlu0 %v5915, 96
        %v6313 = vpop.permute.xlu0 %6312
        %6314 = vrot.lane.b32.xlu0 %v5920, 96
        %v6315 = vpop.permute.xlu0 %6314
        %6316 = vrot.lane.b32.xlu0 %v5923, 96
        %v6317 = vpop.permute.xlu0 %6316
        %6318 = vrot.lane.b32.xlu0 %v5928, 96
        %v6319 = vpop.permute.xlu0 %6318
        %6320 = vrot.lane.b32.xlu0 %v5931, 96
        %v6321 = vpop.permute.xlu0 %6320
        %6322 = vrot.lane.b32.xlu0 %v5936, 96
        %v6323 = vpop.permute.xlu0 %6322
        %6324 = vrot.lane.b32.xlu0 %v5939, 96
        %v6325 = vpop.permute.xlu0 %6324
        %6326 = vrot.lane.b32.xlu0 %v5944, 96
        %v6327 = vpop.permute.xlu0 %6326
        %6328 = vrot.lane.b32.xlu0 %v5947, 96
        %v6329 = vpop.permute.xlu0 %6328
        %6330 = vrot.lane.b32.xlu0 %v5952, 96
        %v6331 = vpop.permute.xlu0 %6330
        %6332 = vrot.lane.b32.xlu0 %v5955, 96
        %v6333 = vpop.permute.xlu0 %6332
        %6334 = vrot.lane.b32.xlu0 %v5960, 96
        %v6335 = vpop.permute.xlu0 %6334
        %6336 = vrot.lane.b32.xlu0 %v5963, 96
        %v6337 = vpop.permute.xlu0 %6336
        %6338 = vrot.lane.b32.xlu0 %v5968, 96
        %v6339 = vpop.permute.xlu0 %6338
        %6340 = vrot.lane.b32.xlu0 %v5971, 96
        %v6341 = vpop.permute.xlu0 %6340
        %6342 = vrot.lane.b32.xlu0 %v5976, 96
        %v6343 = vpop.permute.xlu0 %6342
        %6344 = vrot.lane.b32.xlu0 %v5979, 96
        %v6345 = vpop.permute.xlu0 %6344
        %6346 = vrot.lane.b32.xlu0 %v5984, 96
        %v6347 = vpop.permute.xlu0 %6346
        %6348 = vrot.lane.b32.xlu0 %v5987, 96
        %v6349 = vpop.permute.xlu0 %6348
        %6350 = vrot.lane.b32.xlu0 %v5992, 96
        %v6351 = vpop.permute.xlu0 %6350
        %6352 = vrot.lane.b32.xlu0 %v5995, 96
        %v6353 = vpop.permute.xlu0 %6352
        %6354 = vrot.lane.b32.xlu0 %v6000, 96
        %v6355 = vpop.permute.xlu0 %6354
        %6356 = vrot.lane.b32.xlu0 %v6003, 96
        %v6357 = vpop.permute.xlu0 %6356
        %v6390 = vsel %vm2717, %v3386, %v6039
        %v6391 = vsel %vm2717, %v3389, %v6041
        %v6392 = vsel %vm2717, %v3394, %v6043
        %v6393 = vsel %vm2717, %v3397, %v6045
        %v6394 = vsel %vm2717, %v3402, %v6047
        %v6395 = vsel %vm2717, %v3405, %v6049
        %v6396 = vsel %vm2717, %v3410, %v6051
        %v6397 = vsel %vm2717, %v3413, %v6053
        %v6398 = vsel %vm2717, %v3418, %v6055
        %v6399 = vsel %vm2717, %v3421, %v6057
        %v6400 = vsel %vm2717, %v3426, %v6059
        %v6401 = vsel %vm2717, %v3429, %v6061
        %v6402 = vsel %vm2717, %v3434, %v6063
        %v6403 = vsel %vm2717, %v3437, %v6065
        %v6404 = vsel %vm2717, %v3442, %v6067
        %v6405 = vsel %vm2717, %v3445, %v6069
        %v6406 = vsel %vm2717, %v3450, %v6071
        %v6407 = vsel %vm2717, %v3453, %v6073
        %v6408 = vsel %vm2717, %v3458, %v6075
        %v6409 = vsel %vm2717, %v3461, %v6077
        %v6410 = vsel %vm2717, %v3466, %v6079
        %v6411 = vsel %vm2717, %v3469, %v6081
        %v6412 = vsel %vm2717, %v3474, %v6083
        %v6413 = vsel %vm2717, %v3477, %v6085
        %v6414 = vsel %vm2717, %v3482, %v6087
        %v6415 = vsel %vm2717, %v3485, %v6089
        %v6416 = vsel %vm2717, %v3490, %v6091
        %v6417 = vsel %vm2717, %v3493, %v6093
        %v6418 = vsel %vm2717, %v3498, %v6095
        %v6419 = vsel %vm2717, %v3501, %v6097
        %v6420 = vsel %vm2717, %v3506, %v6099
        %v6421 = vsel %vm2717, %v3509, %v6101
        %vm6422 = vcmask 523264
        %v6423 = vsel %vm6422, %v6390, %v6167
        %v6424 = vsel %vm6422, %v6391, %v6169
        %v6425 = vsel %vm6422, %v6392, %v6171
        %v6426 = vsel %vm6422, %v6393, %v6173
        %v6427 = vsel %vm6422, %v6394, %v6175
        %v6428 = vsel %vm6422, %v6395, %v6177
        %v6429 = vsel %vm6422, %v6396, %v6179
        %v6430 = vsel %vm6422, %v6397, %v6181
        %v6431 = vsel %vm6422, %v6398, %v6183
        %v6432 = vsel %vm6422, %v6399, %v6185
        %v6433 = vsel %vm6422, %v6400, %v6187
        %v6434 = vsel %vm6422, %v6401, %v6189
        %v6435 = vsel %vm6422, %v6402, %v6191
        %v6436 = vsel %vm6422, %v6403, %v6193
        %v6437 = vsel %vm6422, %v6404, %v6195
        %v6438 = vsel %vm6422, %v6405, %v6197
        %v6439 = vsel %vm6422, %v6406, %v6199
        %v6440 = vsel %vm6422, %v6407, %v6201
        %v6441 = vsel %vm6422, %v6408, %v6203
        %v6442 = vsel %vm6422, %v6409, %v6205
        %v6443 = vsel %vm6422, %v6410, %v6207
        %v6444 = vsel %vm6422, %v6411, %v6209
        %v6445 = vsel %vm6422, %v6412, %v6211
        %v6446 = vsel %vm6422, %v6413, %v6213
        %v6447 = vsel %vm6422, %v6414, %v6215
        %v6448 = vsel %vm6422, %v6415, %v6217
        %v6449 = vsel %vm6422, %v6416, %v6219
        %v6450 = vsel %vm6422, %v6417, %v6221
        %v6451 = vsel %vm6422, %v6418, %v6223
        %v6452 = vsel %vm6422, %v6419, %v6225
        %v6453 = vsel %vm6422, %v6420, %v6227
        %v6454 = vsel %vm6422, %v6421, %v6229
        %vm6455 = vcmask 785408
        %v6456 = vsel %vm6455, %v6423, %v6295
        %v6457 = vsel %vm6455, %v6424, %v6297
        %v6458 = vsel %vm6455, %v6425, %v6299
        %v6459 = vsel %vm6455, %v6426, %v6301
        %v6460 = vsel %vm6455, %v6427, %v6303
        %v6461 = vsel %vm6455, %v6428, %v6305
        %v6462 = vsel %vm6455, %v6429, %v6307
        %v6463 = vsel %vm6455, %v6430, %v6309
        %v6464 = vsel %vm6455, %v6431, %v6311
        %v6465 = vsel %vm6455, %v6432, %v6313
        %v6466 = vsel %vm6455, %v6433, %v6315
        %v6467 = vsel %vm6455, %v6434, %v6317
        %v6468 = vsel %vm6455, %v6435, %v6319
        %v6469 = vsel %vm6455, %v6436, %v6321
        %v6470 = vsel %vm6455, %v6437, %v6323
        %v6471 = vsel %vm6455, %v6438, %v6325
        %v6472 = vsel %vm6455, %v6439, %v6327
        %v6473 = vsel %vm6455, %v6440, %v6329
        %v6474 = vsel %vm6455, %v6441, %v6331
        %v6475 = vsel %vm6455, %v6442, %v6333
        %v6476 = vsel %vm6455, %v6443, %v6335
        %v6477 = vsel %vm6455, %v6444, %v6337
        %v6478 = vsel %vm6455, %v6445, %v6339
        %v6479 = vsel %vm6455, %v6446, %v6341
        %v6480 = vsel %vm6455, %v6447, %v6343
        %v6481 = vsel %vm6455, %v6448, %v6345
        %v6482 = vsel %vm6455, %v6449, %v6347
        %v6483 = vsel %vm6455, %v6450, %v6349
        %v6484 = vsel %vm6455, %v6451, %v6351
        %v6485 = vsel %vm6455, %v6452, %v6353
        %v6486 = vsel %vm6455, %v6453, %v6355
        %v6487 = vsel %vm6455, %v6454, %v6357
        %v6488 = vpack.c.bf16 %v6457, %v6456
        %v6489 = vpack.c.bf16 %v6459, %v6458
        %v6490 = vpack.c.bf16 %v6461, %v6460
        %v6491 = vpack.c.bf16 %v6463, %v6462
        %v6492 = vpack.c.bf16 %v6465, %v6464
        %v6493 = vpack.c.bf16 %v6467, %v6466
        %v6494 = vpack.c.bf16 %v6469, %v6468
        %v6495 = vpack.c.bf16 %v6471, %v6470
        %v6496 = vpack.c.bf16 %v6473, %v6472
        %v6497 = vpack.c.bf16 %v6475, %v6474
        %v6498 = vpack.c.bf16 %v6477, %v6476
        %v6499 = vpack.c.bf16 %v6479, %v6478
        %v6500 = vpack.c.bf16 %v6481, %v6480
        %v6501 = vpack.c.bf16 %v6483, %v6482
        %v6502 = vpack.c.bf16 %v6485, %v6484
        %v6503 = vpack.c.bf16 %v6487, %v6486
        %v6504 = vld [vmem:[#allocation11] sm:$0xf]
        %v6505 = vld [vmem:[#allocation11 + $0x4] sm:$0xf]
        %v6506 = vld [vmem:[#allocation11 + $0x8] sm:$0xf]
        %v6507 = vld [vmem:[#allocation11 + $0xc] sm:$0xf]
        %v6508 = vld [vmem:[#allocation11 + $0x10] sm:$0xf]
        %v6509 = vld [vmem:[#allocation11 + $0x14] sm:$0xf]
        %v6510 = vld [vmem:[#allocation11 + $0x18] sm:$0xf]
        %v6511 = vld [vmem:[#allocation11 + $0x1c] sm:$0xf]
        %v6512 = vld [vmem:[#allocation11 + $0x20] sm:$0xf]
        %v6513 = vld [vmem:[#allocation11 + $0x24] sm:$0xf]
        %v6514 = vld [vmem:[#allocation11 + $0x28] sm:$0xf]
        %v6515 = vld [vmem:[#allocation11 + $0x2c] sm:$0xf]
        %v6516 = vld [vmem:[#allocation11 + $0x30] sm:$0xf]
        %v6517 = vld [vmem:[#allocation11 + $0x34] sm:$0xf]
        %v6518 = vld [vmem:[#allocation11 + $0x38] sm:$0xf]
        %v6519 = vld [vmem:[#allocation11 + $0x3c] sm:$0xf]
        %v6536 = vunpack.c.l.b16 %v6504
        %v6537 = vunpack.c.l.b16 %v6505
        %v6538 = vunpack.c.l.b16 %v6506
        %v6539 = vunpack.c.l.b16 %v6507
        %v6540 = vunpack.c.l.b16 %v6508
        %v6541 = vunpack.c.l.b16 %v6509
        %v6542 = vunpack.c.l.b16 %v6510
        %v6543 = vunpack.c.l.b16 %v6511
        %v6544 = vunpack.c.l.b16 %v6512
        %v6545 = vunpack.c.l.b16 %v6513
        %v6546 = vunpack.c.l.b16 %v6514
        %v6547 = vunpack.c.l.b16 %v6515
        %v6548 = vunpack.c.l.b16 %v6516
        %v6549 = vunpack.c.l.b16 %v6517
        %v6550 = vunpack.c.l.b16 %v6518
        %v6551 = vunpack.c.l.b16 %v6519
        %v6552 = vpack.c.b16 %v6537, %v6536
        %v6553 = vpack.c.b16 %v6539, %v6538
        %v6554 = vpack.c.b16 %v6541, %v6540
        %v6555 = vpack.c.b16 %v6543, %v6542
        %v6556 = vpack.c.b16 %v6545, %v6544
        %v6557 = vpack.c.b16 %v6547, %v6546
        %v6558 = vpack.c.b16 %v6549, %v6548
        %v6559 = vpack.c.b16 %v6551, %v6550
        %6568 = vmatprep.subr.bf16.mxu0 0
        %6569 = vmatpush1.bf16.msra.mxu0 %v6559
        %6570 = vmatprep.subr.bf16.mxu0 0
        %6571 = vmatpush1.bf16.msra.mxu0 %v6558
        %6572 = vmatprep.subr.bf16.mxu0 0
        %6573 = vmatpush1.bf16.msra.mxu0 %v6557
        %6574 = vmatprep.subr.bf16.mxu0 0
        %6575 = vmatpush1.bf16.msra.mxu0 %v6556
        %6576 = vmatprep.subr.bf16.mxu0 0
        %6577 = vmatpush1.bf16.msra.mxu0 %v6555
        %6578 = vmatprep.subr.bf16.mxu0 0
        %6579 = vmatpush1.bf16.msra.mxu0 %v6554
        %6580 = vmatprep.subr.bf16.mxu0 0
        %6581 = vmatpush1.bf16.msra.mxu0 %v6553
        %6582 = vmatprep.subr.bf16.mxu0 0
        %6583 = vmatpush1.bf16.msra.mxu0 %v6552
        %6584 = vmatprep.subr.bf16.mxu0 0
        %6585 = vmatpush2.bf16.msra.mxu0 0
        %6586 = vmatprep.subr.bf16.mxu0 0
        %6587 = vmatpush2.bf16.msra.mxu0 0
        %6588 = vmatprep.subr.bf16.mxu0 0
        %6589 = vmatpush2.bf16.msra.mxu0 0
        %6590 = vmatprep.subr.bf16.mxu0 0
        %6591 = vmatpush2.bf16.msra.mxu0 0
        %6592 = vmatprep.subr.bf16.mxu0 0
        %6593 = vmatpush2.bf16.msra.mxu0 0
        %6594 = vmatprep.subr.bf16.mxu0 0
        %6595 = vmatpush2.bf16.msra.mxu0 0
        %6596 = vmatprep.subr.bf16.mxu0 0
        %6597 = vmatpush2.bf16.msra.mxu0 0
        %6598 = vmatprep.subr.bf16.mxu0 0
        %6599 = vmatpush2.bf16.msra.mxu0 0
        %6600 = vmatprep.mubr.bf16.mxu0 0
        %6601 = vmatmul.mubr.bf16.gmra.mxu0 %v6488
        %v6602 = vpop.f32.mrf.mxu0
        %v6603 = vadd.f32 0.0, %v6602
        %v6604 = vpop.f32.mrf.mxu0
        %v6605 = vpop.f32.mrf.mxu0
        %v6606 = vadd.f32 0.0, %v6605
        %v6607 = vpop.f32.mrf.mxu0
        %6608 = vmatprep.mubr.bf16.mxu0 0
        %6609 = vmatmul.mubr.bf16.gmra.mxu0 %v6489
        %v6610 = vpop.f32.mrf.mxu0
        %v6611 = vadd.f32 0.0, %v6610
        %v6612 = vpop.f32.mrf.mxu0
        %v6613 = vpop.f32.mrf.mxu0
        %v6614 = vadd.f32 0.0, %v6613
        %v6615 = vpop.f32.mrf.mxu0
        %6616 = vmatprep.mubr.bf16.mxu0 0
        %6617 = vmatmul.mubr.bf16.gmra.mxu0 %v6490
        %v6618 = vpop.f32.mrf.mxu0
        %v6619 = vadd.f32 0.0, %v6618
        %v6620 = vpop.f32.mrf.mxu0
        %v6621 = vpop.f32.mrf.mxu0
        %v6622 = vadd.f32 0.0, %v6621
        %v6623 = vpop.f32.mrf.mxu0
        %6624 = vmatprep.mubr.bf16.mxu0 0
        %6625 = vmatmul.mubr.bf16.gmra.mxu0 %v6491
        %v6626 = vpop.f32.mrf.mxu0
        %v6627 = vadd.f32 0.0, %v6626
        %v6628 = vpop.f32.mrf.mxu0
        %v6629 = vpop.f32.mrf.mxu0
        %v6630 = vadd.f32 0.0, %v6629
        %v6631 = vpop.f32.mrf.mxu0
        %6632 = vmatprep.mubr.bf16.mxu0 0
        %6633 = vmatmul.mubr.bf16.gmra.mxu0 %v6492
        %v6634 = vpop.f32.mrf.mxu0
        %v6635 = vadd.f32 0.0, %v6634
        %v6636 = vpop.f32.mrf.mxu0
        %v6637 = vpop.f32.mrf.mxu0
        %v6638 = vadd.f32 0.0, %v6637
        %v6639 = vpop.f32.mrf.mxu0
        %6640 = vmatprep.mubr.bf16.mxu0 0
        %6641 = vmatmul.mubr.bf16.gmra.mxu0 %v6493
        %v6642 = vpop.f32.mrf.mxu0
        %v6643 = vadd.f32 0.0, %v6642
        %v6644 = vpop.f32.mrf.mxu0
        %v6645 = vpop.f32.mrf.mxu0
        %v6646 = vadd.f32 0.0, %v6645
        %v6647 = vpop.f32.mrf.mxu0
        %6648 = vmatprep.mubr.bf16.mxu0 0
        %6649 = vmatmul.mubr.bf16.gmra.mxu0 %v6494
        %v6650 = vpop.f32.mrf.mxu0
        %v6651 = vadd.f32 0.0, %v6650
        %v6652 = vpop.f32.mrf.mxu0
        %v6653 = vpop.f32.mrf.mxu0
        %v6654 = vadd.f32 0.0, %v6653
        %v6655 = vpop.f32.mrf.mxu0
        %6656 = vmatprep.mubr.bf16.mxu0 0
        %6657 = vmatmul.mubr.bf16.gmra.mxu0 %v6495
        %v6658 = vpop.f32.mrf.mxu0
        %v6659 = vadd.f32 0.0, %v6658
        %v6660 = vpop.f32.mrf.mxu0
        %v6661 = vpop.f32.mrf.mxu0
        %v6662 = vadd.f32 0.0, %v6661
        %v6663 = vpop.f32.mrf.mxu0
        %6664 = vmatprep.mubr.bf16.mxu0 0
        %6665 = vmatmul.mubr.bf16.gmra.mxu0 %v6496
        %v6666 = vpop.f32.mrf.mxu0
        %v6667 = vadd.f32 0.0, %v6666
        %v6668 = vpop.f32.mrf.mxu0
        %v6669 = vpop.f32.mrf.mxu0
        %v6670 = vadd.f32 0.0, %v6669
        %v6671 = vpop.f32.mrf.mxu0
        %6672 = vmatprep.mubr.bf16.mxu0 0
        %6673 = vmatmul.mubr.bf16.gmra.mxu0 %v6497
        %v6674 = vpop.f32.mrf.mxu0
        %v6675 = vadd.f32 0.0, %v6674
        %v6676 = vpop.f32.mrf.mxu0
        %v6677 = vpop.f32.mrf.mxu0
        %v6678 = vadd.f32 0.0, %v6677
        %v6679 = vpop.f32.mrf.mxu0
        %6680 = vmatprep.mubr.bf16.mxu0 0
        %6681 = vmatmul.mubr.bf16.gmra.mxu0 %v6498
        %v6682 = vpop.f32.mrf.mxu0
        %v6683 = vadd.f32 0.0, %v6682
        %v6684 = vpop.f32.mrf.mxu0
        %v6685 = vpop.f32.mrf.mxu0
        %v6686 = vadd.f32 0.0, %v6685
        %v6687 = vpop.f32.mrf.mxu0
        %6688 = vmatprep.mubr.bf16.mxu0 0
        %6689 = vmatmul.mubr.bf16.gmra.mxu0 %v6499
        %v6690 = vpop.f32.mrf.mxu0
        %v6691 = vadd.f32 0.0, %v6690
        %v6692 = vpop.f32.mrf.mxu0
        %v6693 = vpop.f32.mrf.mxu0
        %v6694 = vadd.f32 0.0, %v6693
        %v6695 = vpop.f32.mrf.mxu0
        %6696 = vmatprep.mubr.bf16.mxu0 0
        %6697 = vmatmul.mubr.bf16.gmra.mxu0 %v6500
        %v6698 = vpop.f32.mrf.mxu0
        %v6699 = vadd.f32 0.0, %v6698
        %v6700 = vpop.f32.mrf.mxu0
        %v6701 = vpop.f32.mrf.mxu0
        %v6702 = vadd.f32 0.0, %v6701
        %v6703 = vpop.f32.mrf.mxu0
        %6704 = vmatprep.mubr.bf16.mxu0 0
        %6705 = vmatmul.mubr.bf16.gmra.mxu0 %v6501
        %v6706 = vpop.f32.mrf.mxu0
        %v6707 = vadd.f32 0.0, %v6706
        %v6708 = vpop.f32.mrf.mxu0
        %v6709 = vpop.f32.mrf.mxu0
        %v6710 = vadd.f32 0.0, %v6709
        %v6711 = vpop.f32.mrf.mxu0
        %6712 = vmatprep.mubr.bf16.mxu0 0
        %6713 = vmatmul.mubr.bf16.gmra.mxu0 %v6502
        %v6714 = vpop.f32.mrf.mxu0
        %v6715 = vadd.f32 0.0, %v6714
        %v6716 = vpop.f32.mrf.mxu0
        %v6717 = vpop.f32.mrf.mxu0
        %v6718 = vadd.f32 0.0, %v6717
        %v6719 = vpop.f32.mrf.mxu0
        %6720 = vmatprep.mubr.bf16.mxu0 0
        %6721 = vmatmul.mubr.bf16.gmra.mxu0 %v6503
        %v6722 = vpop.f32.mrf.mxu0
        %v6723 = vadd.f32 0.0, %v6722
        %v6724 = vpop.f32.mrf.mxu0
        %v6725 = vpop.f32.mrf.mxu0
        %v6726 = vadd.f32 0.0, %v6725
        %v6727 = vpop.f32.mrf.mxu0
        %6728 = vdwg.mxu0
        %v6729 = vpack.c.bf16 %v6606, %v6603
        %v6730 = vpack.c.bf16 %v6614, %v6611
        %v6731 = vpack.c.bf16 %v6622, %v6619
        %v6732 = vpack.c.bf16 %v6630, %v6627
        %v6733 = vpack.c.bf16 %v6638, %v6635
        %v6734 = vpack.c.bf16 %v6646, %v6643
        %v6735 = vpack.c.bf16 %v6654, %v6651
        %v6736 = vpack.c.bf16 %v6662, %v6659
        %v6737 = vpack.c.bf16 %v6670, %v6667
        %v6738 = vpack.c.bf16 %v6678, %v6675
        %v6739 = vpack.c.bf16 %v6686, %v6683
        %v6740 = vpack.c.bf16 %v6694, %v6691
        %v6741 = vpack.c.bf16 %v6702, %v6699
        %v6742 = vpack.c.bf16 %v6710, %v6707
        %v6743 = vpack.c.bf16 %v6718, %v6715
        %v6744 = vpack.c.bf16 %v6726, %v6723
        %v6761 = vunpack.c.l.b16 %v6729
        %v6762 = vunpack.c.h.b16 %v6729
        %v6763 = vunpack.c.l.b16 %v6730
        %v6764 = vunpack.c.h.b16 %v6730
        %v6765 = vunpack.c.l.b16 %v6731
        %v6766 = vunpack.c.h.b16 %v6731
        %v6767 = vunpack.c.l.b16 %v6732
        %v6768 = vunpack.c.h.b16 %v6732
        %v6769 = vunpack.c.l.b16 %v6733
        %v6770 = vunpack.c.h.b16 %v6733
        %v6771 = vunpack.c.l.b16 %v6734
        %v6772 = vunpack.c.h.b16 %v6734
        %v6773 = vunpack.c.l.b16 %v6735
        %v6774 = vunpack.c.h.b16 %v6735
        %v6775 = vunpack.c.l.b16 %v6736
        %v6776 = vunpack.c.h.b16 %v6736
        %v6777 = vunpack.c.l.b16 %v6737
        %v6778 = vunpack.c.h.b16 %v6737
        %v6779 = vunpack.c.l.b16 %v6738
        %v6780 = vunpack.c.h.b16 %v6738
        %v6781 = vunpack.c.l.b16 %v6739
        %v6782 = vunpack.c.h.b16 %v6739
        %v6783 = vunpack.c.l.b16 %v6740
        %v6784 = vunpack.c.h.b16 %v6740
        %v6785 = vunpack.c.l.b16 %v6741
        %v6786 = vunpack.c.h.b16 %v6741
        %v6787 = vunpack.c.l.b16 %v6742
        %v6788 = vunpack.c.h.b16 %v6742
        %v6789 = vunpack.c.l.b16 %v6743
        %v6790 = vunpack.c.h.b16 %v6743
        %v6791 = vunpack.c.l.b16 %v6744
        %v6792 = vunpack.c.h.b16 %v6744
        %v6793 = vpack.c.b16 %v6761, %v6761
        %v6794 = vpack.c.b16 %v6762, %v6762
        %v6795 = vpack.c.b16 %v6763, %v6763
        %v6796 = vpack.c.b16 %v6764, %v6764
        %v6797 = vpack.c.b16 %v6765, %v6765
        %v6798 = vpack.c.b16 %v6766, %v6766
        %v6799 = vpack.c.b16 %v6767, %v6767
        %v6800 = vpack.c.b16 %v6768, %v6768
        %v6801 = vpack.c.b16 %v6769, %v6769
        %v6802 = vpack.c.b16 %v6770, %v6770
        %v6803 = vpack.c.b16 %v6771, %v6771
        %v6804 = vpack.c.b16 %v6772, %v6772
        %v6805 = vpack.c.b16 %v6773, %v6773
        %v6806 = vpack.c.b16 %v6774, %v6774
        %v6807 = vpack.c.b16 %v6775, %v6775
        %v6808 = vpack.c.b16 %v6776, %v6776
        %v6809 = vpack.c.b16 %v6777, %v6777
        %v6810 = vpack.c.b16 %v6778, %v6778
        %v6811 = vpack.c.b16 %v6779, %v6779
        %v6812 = vpack.c.b16 %v6780, %v6780
        %v6813 = vpack.c.b16 %v6781, %v6781
        %v6814 = vpack.c.b16 %v6782, %v6782
        %v6815 = vpack.c.b16 %v6783, %v6783
        %v6816 = vpack.c.b16 %v6784, %v6784
        %v6817 = vpack.c.b16 %v6785, %v6785
        %v6818 = vpack.c.b16 %v6786, %v6786
        %v6819 = vpack.c.b16 %v6787, %v6787
        %v6820 = vpack.c.b16 %v6788, %v6788
        %v6821 = vpack.c.b16 %v6789, %v6789
        %v6822 = vpack.c.b16 %v6790, %v6790
        %v6823 = vpack.c.b16 %v6791, %v6791
        %v6824 = vpack.c.b16 %v6792, %v6792
        %6857 = vst [vmem:[%s343] sm:$0xf] %v6793
        %6858 = vst [vmem:[%s343 + $0x4] sm:$0xf] %v6794
        %6859 = vst [vmem:[%s343 + $0x8] sm:$0xf] %v6795
        %6860 = vst [vmem:[%s343 + $0xc] sm:$0xf] %v6796
        %6861 = vst [vmem:[%s343 + $0x10] sm:$0xf] %v6797
        %6862 = vst [vmem:[%s343 + $0x14] sm:$0xf] %v6798
        %6863 = vst [vmem:[%s343 + $0x18] sm:$0xf] %v6799
        %6864 = vst [vmem:[%s343 + $0x1c] sm:$0xf] %v6800
        %6865 = vst [vmem:[%s343 + $0x20] sm:$0xf] %v6801
        %6866 = vst [vmem:[%s343 + $0x24] sm:$0xf] %v6802
        %6867 = vst [vmem:[%s343 + $0x28] sm:$0xf] %v6803
        %6868 = vst [vmem:[%s343 + $0x2c] sm:$0xf] %v6804
        %6869 = vst [vmem:[%s343 + $0x30] sm:$0xf] %v6805
        %6870 = vst [vmem:[%s343 + $0x34] sm:$0xf] %v6806
        %6871 = vst [vmem:[%s343 + $0x38] sm:$0xf] %v6807
        %6872 = vst [vmem:[%s343 + $0x3c] sm:$0xf] %v6808
        %6873 = vst [vmem:[%s343 + $0x40] sm:$0xf] %v6809
        %6874 = vst [vmem:[%s343 + $0x44] sm:$0xf] %v6810
        %6875 = vst [vmem:[%s343 + $0x48] sm:$0xf] %v6811
        %6876 = vst [vmem:[%s343 + $0x4c] sm:$0xf] %v6812
        %6877 = vst [vmem:[%s343 + $0x50] sm:$0xf] %v6813
        %6878 = vst [vmem:[%s343 + $0x54] sm:$0xf] %v6814
        %6879 = vst [vmem:[%s343 + $0x58] sm:$0xf] %v6815
        %6880 = vst [vmem:[%s343 + $0x5c] sm:$0xf] %v6816
        %6881 = vst [vmem:[%s343 + $0x60] sm:$0xf] %v6817
        %6882 = vst [vmem:[%s343 + $0x64] sm:$0xf] %v6818
        %6883 = vst [vmem:[%s343 + $0x68] sm:$0xf] %v6819
        %6884 = vst [vmem:[%s343 + $0x6c] sm:$0xf] %v6820
        %6885 = vst [vmem:[%s343 + $0x70] sm:$0xf] %v6821
        %6886 = vst [vmem:[%s343 + $0x74] sm:$0xf] %v6822
        %6887 = vst [vmem:[%s343 + $0x78] sm:$0xf] %v6823
        %6888 = vst [vmem:[%s343 + $0x7c] sm:$0xf] %v6824
        %s6889 = sand.u32 %s165, 1
        %s6890 = scalar_lea.sflag [#allocation5], %s6889
        %s6891 = sand.u32 %s165, 1
        %s6892 = smul.addr %s6891, 128
        %s6893 = scalar_lea.vmem [#allocation12], %s6892
        // Predicated region
        $region65: #{tpu_custom_call.1} parent=39 // pred_check
          %p6894 = pneg %p175
        $region66: #{tpu_custom_call.1} parent=39 // pred_check_branch
          %6896 = sbr.rel (%p6894) target = $region68
        $region67: #{tpu_custom_call.1} parent=39 // pred_region
          %s6897 = smul.u32 32, %s31
          %s6899 = ssub.s32 2048, 2048
          %6900 = vsyncadd %s6890, %s6899
          %s6901 = smul.addr %s30, 32
          %s6902 = sadd.s32 %s6897, %s6901
          %s6903 = smul.addr %s6902, 64
          %s6904 = scalar_lea.hbm %s5, %s6903
          %s6905 = sshll.u32 %s6893, 4
          %s6906 = int_to_ptr.vmem [resolvable:$true] %s6905
          %6911 = dma.vmem_to_hbm [thread:$0]  %s6906, 2048, %s6904, %s6890, 64, 64, 4
        $region68: #{tpu_custom_call.1} parent=39 // pred_fallthru
          _
      $region40: #{tpu_custom_call.1} parent=5 // pred_fallthru
        _
      %p6912 = scmp.le.s32.totalorder 2, %s21
      // Predicated region
      $region69: #{tpu_custom_call.1} parent=5 // pred_check
        %p6913 = pneg %p6912
      $region70: #{tpu_custom_call.1} parent=5 // pred_check_branch
        %6915 = sbr.rel (%p6913) target = $region72
      $region71: #{tpu_custom_call.1} parent=5 // pred_region
        %s6916 = ssub.s32 %s21, 2
        // Predicated region
        $region73: #{tpu_custom_call.1} parent=71 // pred_check
          %p6917 = pneg %p181
        $region74: #{tpu_custom_call.1} parent=71 // pred_check_branch
          %6919 = sbr.rel (%p6917) target = $region76
        $region75: #{tpu_custom_call.1} parent=71 // pred_region
          %s6920 = sand.u32 %s166, 1
          %s6921 = scalar_lea.sflag [#allocation5], %s6920
          %s6922 = sand.u32 %s166, 1
          %s6923 = smul.addr %s6922, 128
          %s6924 = scalar_lea.vmem [#allocation12], %s6923
          %6925 = dma.done %s6921, 2048
        $region76: #{tpu_custom_call.1} parent=71 // pred_fallthru
          _
      $region72: #{tpu_custom_call.1} parent=5 // pred_fallthru
        _
    $region6: #{tpu_custom_call.1} parent=1 // loop_footer
      %s25 = sadd.s32 1, %s21
    $region7: #{tpu_custom_call.1} parent=1 // loop_footer_branch
      %20 = sbr.rel target = $region3
    $region8: #{tpu_custom_call.1} parent=1 // loop_exit
      _
    %6926 = vsyncpa [#allocation4], 1
    %s6927 = scalar_lea.sflag [#allocation4], 1
    %6928 = vsyncpa %s6927, 1
    %6929 = vsyncpa [#allocation7], 1
    %s6930 = scalar_lea.sflag [#allocation7], 1
    %6931 = vsyncpa %s6930, 1
    %6932 = vsyncpa [#allocation10], 1
    %6933 = vsyncpa [#allocation5], 1
    %s6934 = scalar_lea.sflag [#allocation5], 1
    %6935 = vsyncpa %s6934, 1

</llo_original>
